<compile_context>
chip_gen: v7x
topology: tpu7x:2x2x1
jax: 0.10.0
libtpu: 0.0.40
codegen_flags: <defaults>
</compile_context>

<pallas_src>
import functools

import jax
import jax.numpy as jnp
from jax.experimental import pallas as pl
from jax.experimental.pallas import tpu as pltpu

BN_EPS = 1e-5
# 40 MiB scoped VMEM: above the 16/32 MiB defaults, below every generation's physical
# capacity (v5e/v6e 128 MiB, v7x 64 MiB per TensorCore).
VMEM_LIMIT = 40 * 1024 * 1024


# ------------------------------ small helpers ------------------------------ #

def _round_up(x, m):
    return ((x + m - 1) // m) * m


def _choose_tile(dim, cap, align):
    """Pick (tile, padded_dim): tile divides padded_dim and is either a multiple of
    `align` or the full unpadded dim, so blocks satisfy the (8,128) rule with no
    padding in the common case."""
    if dim <= cap:
        return dim, dim                               # full-dim block, no pad, no slice
    for d in range(min(cap, dim), align - 1, -1):     # trace-time only
        if dim % d == 0 and d % align == 0:
            return d, dim
    tile = max(align, cap - cap % align)              # rare fallback: pad + slice
    return tile, _round_up(dim, tile)


def _choose_band(H, W, C, budget_bytes=2 * 1024 * 1024):
    """Row-band height for the attention epilogue: divides H, sublane-legal."""
    cap = max(1, budget_bytes // max(1, W * C * 4))
    for d in range(min(H, cap), 0, -1):
        if H % d == 0 and (d % 8 == 0 or d == H):
            return d
    return H


def _apply_act(y, act):
    if act == "none":
        return y
    if act == "relu":
        return jnp.maximum(y, 0.0)
    if act == "hswish":  # x * ReLU6(x + 3) / 6
        return y * (jnp.clip(y + 3.0, 0.0, 6.0) * (1.0 / 6.0))
    if act == "sigmoid":
        return jax.nn.sigmoid(y)
    raise ValueError(f"unknown act {act}")


# ----------------------------- Pallas kernels ------------------------------ #

def _mm_kernel(x_ref, w_ref, s_ref, b_ref, o_ref, *, act):
    """(tm,K)@(K,tn) * scale + bias + activation.  K is carried whole (no K grid),
    x is cast to bf16 per-tile inside the kernel, f32 accumulation on the MXU."""
    x = x_ref[...].astype(jnp.bfloat16)
    y = jnp.dot(x, w_ref[...], preferred_element_type=jnp.float32)
    y = y * s_ref[...] + b_ref[...]
    o_ref[...] = _apply_act(y, act).astype(o_ref.dtype)


def _conv3x3_bn_relu_kernel(x_ref, w_ref, s_ref, b_ref, o_ref, *, th):
    """3x3 conv (pad=1, stride=1) for one batch element.
    x_ref: (1, H+2, W+2, Cin) bf16 (spatially pre-padded)
    w_ref: (3, 3*Cin, Cout) bf16 -- the 3 dx taps packed into the contraction dim.
    Per H row-band: 3 matmuls (one per dy) into a small f32 accumulator."""
    H, W, Cout = o_ref.shape[1], o_ref.shape[2], o_ref.shape[3]
    Cin = x_ref.shape[3]
    s = s_ref[...]
    b = b_ref[...]
    for h0 in range(0, H, th):                         # static unroll over row bands
        hb = min(th, H - h0)
        acc = jnp.zeros((hb * W, Cout), jnp.float32)
        for dy in range(3):                            # static unroll over dy taps
            rows = x_ref[0, h0 + dy: h0 + dy + hb]     # (hb, W+2, Cin)
            xk = jnp.concatenate(                      # pack dx into K: (hb, W, 3*Cin)
                [rows[:, 0:W, :], rows[:, 1:W + 1, :], rows[:, 2:W + 2, :]],
                axis=-1).reshape(hb * W, 3 * Cin)
            acc = acc + jnp.dot(xk, w_ref[dy], preferred_element_type=jnp.float32)
        y = jnp.maximum(acc * s + b, 0.0)
        o_ref[0, h0:h0 + hb] = y.reshape(hb, W, Cout).astype(o_ref.dtype)


def _coordatt_kernel(x_ref, wc1_ref, sc1_ref, bc1_ref, wh_ref, bh_ref,
                     ww_ref, bw_ref, ah_ref, aw_ref):
    """Fused CoordAtt squeeze path for one batch element:
    coordinate pooling -> 1x1 conv + BN + h-swish -> (conv_h, conv_w) + sigmoid.
    The tiny matmuls run in f32 (negligible FLOPs, better sigmoid accuracy)."""
    H, W = x_ref.shape[1], x_ref.shape[2]
    x = x_ref[0].astype(jnp.float32)                        # (H, W, C)
    pool_h = jnp.mean(x, axis=1)                            # (H, C)  mean over W
    pool_w = jnp.mean(x, axis=0)                            # (W, C)  mean over H
    pooled = jnp.concatenate([pool_h, pool_w], axis=0)      # (H+W, C)

    y = jnp.dot(pooled, wc1_ref[...], preferred_element_type=jnp.float32)
    y = y * sc1_ref[...] + bc1_ref[...]
    y = y * (jnp.clip(y + 3.0, 0.0, 6.0) * (1.0 / 6.0))     # h-swish

    ah = jnp.dot(y[:H], wh_ref[...], preferred_element_type=jnp.float32) + bh_ref[...]
    aw = jnp.dot(y[H:], ww_ref[...], preferred_element_type=jnp.float32) + bw_ref[...]
    ah_ref[0] = jax.nn.sigmoid(ah)                          # (H, C)
    aw_ref[0] = jax.nn.sigmoid(aw)                          # (W, C)


def _attn_residual_kernel(x_ref, ah_ref, aw_ref, r_ref, o_ref):
    """out = relu(x * a_w * a_h + residual), per (batch, row-band) tile. bf16 in/out."""
    x = x_ref[...].astype(jnp.float32)                      # (1, th, W, C)
    r = r_ref[...].astype(jnp.float32)
    a = ah_ref[...][:, :, None, :] * aw_ref[...][:, None, :, :]
    o_ref[...] = jnp.maximum(x * a + r, 0.0).astype(o_ref.dtype)


# ------------------------------ kernel wrappers ----------------------------- #

def matmul_affine_act(x2d, w, scale, bias, act="none", out_dtype=jnp.float32,
                      tm_max=1024, tn_max=512):
    """(M,K)@(K,Cout) * scale + bias, then activation.  Full-dim blocks (no padding)
    whenever a dim fits; bf16 MXU operands (x cast per-tile in the kernel)."""
    M, K = x2d.shape
    Cout = w.shape[1]

    tm, Mp = _choose_tile(M, tm_max, 8)
    tn, Np = _choose_tile(Cout, tn_max, 128)

    xb = x2d if Mp == M else jnp.pad(x2d, ((0, Mp - M), (0, 0)))
    wb = w.astype(jnp.bfloat16)
    sb = scale.astype(jnp.float32).reshape(1, Cout)
    bb = bias.astype(jnp.float32).reshape(1, Cout)
    if Np != Cout:
        wb = jnp.pad(wb, ((0, 0), (0, Np - Cout)))
        sb = jnp.pad(sb, ((0, 0), (0, Np - Cout)))
        bb = jnp.pad(bb, ((0, 0), (0, Np - Cout)))

    out = pl.pallas_call(
        functools.partial(_mm_kernel, act=act),
        out_shape=jax.ShapeDtypeStruct((Mp, Np), out_dtype),
        grid_spec=pltpu.PrefetchScalarGridSpec(
            num_scalar_prefetch=0,
            grid=(Mp // tm, Np // tn),
            in_specs=[
                pl.BlockSpec((tm, K), lambda i, j: (i, 0)),
                pl.BlockSpec((K, tn), lambda i, j: (0, j)),
                pl.BlockSpec((1, tn), lambda i, j: (0, j)),
                pl.BlockSpec((1, tn), lambda i, j: (0, j)),
            ],
            out_specs=pl.BlockSpec((tm, tn), lambda i, j: (i, j)),
        ),
        compiler_params=pltpu.CompilerParams(
            dimension_semantics=("parallel", "parallel"),
            vmem_limit_bytes=VMEM_LIMIT,
        ),
    )(xb, wb, sb, bb)
    if Mp != M or Np != Cout:
        out = out[:M, :Cout]
    return out


def conv3x3_bn_relu(x_nhwc, w_packed, scale, bias, out_dtype=jnp.bfloat16, th_max=32):
    """3x3 conv, pad=1, stride=1, fused BN + ReLU.  Grid over batch; dx taps packed
    into the contraction dim and H row-band accumulation inside the kernel."""
    N, H, W, Cin = x_nhwc.shape
    Cout = w_packed.shape[-1]
    xp = jnp.pad(x_nhwc, ((0, 0), (1, 1), (1, 1), (0, 0)))
    s = scale.astype(jnp.float32).reshape(1, Cout)
    b = bias.astype(jnp.float32).reshape(1, Cout)
    th = min(th_max, H)
    # TODO(synk): for very large spatial dims, grid over (N, H-bands) with a 1-row halo
    # instead of one whole padded image per grid step (also feeds v7x's 2nd TensorCore).
    return pl.pallas_call(
        functools.partial(_conv3x3_bn_relu_kernel, th=th),
        out_shape=jax.ShapeDtypeStruct((N, H, W, Cout), out_dtype),
        grid_spec=pltpu.PrefetchScalarGridSpec(
            num_scalar_prefetch=0,
            grid=(N,),
            in_specs=[
                pl.BlockSpec((1, H + 2, W + 2, Cin), lambda n: (n, 0, 0, 0)),
                pl.BlockSpec((3, 3 * Cin, Cout), lambda n: (0, 0, 0)),
                pl.BlockSpec((1, Cout), lambda n: (0, 0)),
                pl.BlockSpec((1, Cout), lambda n: (0, 0)),
            ],
            out_specs=pl.BlockSpec((1, H, W, Cout), lambda n: (n, 0, 0, 0)),
        ),
        compiler_params=pltpu.CompilerParams(
            dimension_semantics=("parallel",),
            vmem_limit_bytes=VMEM_LIMIT,
        ),
    )(xp, w_packed.astype(jnp.bfloat16), s, b)


def coordatt_gates(x_nhwc, wc1, sc1, bc1, wh, bh, ww, bw):
    """Fused CoordAtt squeeze path.  Returns (a_h: (N,H,C) f32, a_w: (N,W,C) f32)."""
    N, H, W, C = x_nhwc.shape
    mip = wc1.shape[1]
    f32 = lambda a: a.astype(jnp.float32)
    return pl.pallas_call(
        _coordatt_kernel,
        out_shape=(jax.ShapeDtypeStruct((N, H, C), jnp.float32),
                   jax.ShapeDtypeStruct((N, W, C), jnp.float32)),
        grid_spec=pltpu.PrefetchScalarGridSpec(
            num_scalar_prefetch=0,
            grid=(N,),
            in_specs=[
                pl.BlockSpec((1, H, W, C), lambda n: (n, 0, 0, 0)),
                pl.BlockSpec((C, mip), lambda n: (0, 0)),
                pl.BlockSpec((1, mip), lambda n: (0, 0)),
                pl.BlockSpec((1, mip), lambda n: (0, 0)),
                pl.BlockSpec((mip, C), lambda n: (0, 0)),
                pl.BlockSpec((1, C), lambda n: (0, 0)),
                pl.BlockSpec((mip, C), lambda n: (0, 0)),
                pl.BlockSpec((1, C), lambda n: (0, 0)),
            ],
            out_specs=[pl.BlockSpec((1, H, C), lambda n: (n, 0, 0)),
                       pl.BlockSpec((1, W, C), lambda n: (n, 0, 0))],
        ),
        compiler_params=pltpu.CompilerParams(
            dimension_semantics=("parallel",),
            vmem_limit_bytes=VMEM_LIMIT,
        ),
    )(x_nhwc, f32(wc1), f32(sc1).reshape(1, mip), f32(bc1).reshape(1, mip),
      f32(wh), f32(bh).reshape(1, C), f32(ww), f32(bw).reshape(1, C))


def attn_residual_relu(x, a_h, a_w, residual, out_dtype=jnp.bfloat16):
    """out = relu(x * a_w * a_h + residual), tiled over (batch, H row-bands)."""
    N, H, W, C = x.shape
    th = _choose_band(H, W, C)
    return pl.pallas_call(
        _attn_residual_kernel,
        out_shape=jax.ShapeDtypeStruct((N, H, W, C), out_dtype),
        grid_spec=pltpu.PrefetchScalarGridSpec(
            num_scalar_prefetch=0,
            grid=(N, H // th),
            in_specs=[
                pl.BlockSpec((1, th, W, C), lambda n, i: (n, i, 0, 0)),
                pl.BlockSpec((1, th, C), lambda n, i: (n, i, 0)),
                pl.BlockSpec((1, W, C), lambda n, i: (n, 0, 0)),
                pl.BlockSpec((1, th, W, C), lambda n, i: (n, i, 0, 0)),
            ],
            out_specs=pl.BlockSpec((1, th, W, C), lambda n, i: (n, i, 0, 0)),
        ),
        compiler_params=pltpu.CompilerParams(
            dimension_semantics=("parallel", "parallel"),
            vmem_limit_bytes=VMEM_LIMIT,
        ),
    )(x, a_h, a_w, residual)


# --------------------------- parameters / folding --------------------------- #

def _bn_fold(bn, eps=BN_EPS):
    gamma, beta, mean, var = bn
    scale = gamma / jnp.sqrt(var + eps)
    bias = beta - mean * scale
    return scale, bias


def init_params(key, inplanes, planes):
    expansion = 4
    cexp = planes * expansion
    mip = max(8, cexp // 32)          # CoordAtt reduction = 32
    ks = jax.random.split(key, 13)

    def conv_w(k, cout, cin, kh, kw):
        return 0.1 * jax.random.normal(k, (cout, cin, kh, kw), jnp.float32)

    def bn_p(k, c):
        k1, k2, k3, k4 = jax.random.split(k, 4)
        gamma = 1.0 + 0.1 * jax.random.normal(k1, (c,), jnp.float32)
        beta = 0.1 * jax.random.normal(k2, (c,), jnp.float32)
        mean = 0.1 * jax.random.normal(k3, (c,), jnp.float32)
        var = 1.0 + 0.1 * jnp.abs(jax.random.normal(k4, (c,), jnp.float32))
        return gamma, beta, mean, var

    return dict(
        conv1_w=conv_w(ks[0], planes, inplanes, 1, 1),
        bn1=bn_p(ks[1], planes),
        conv2_w=conv_w(ks[2], planes, planes, 3, 3),
        bn2=bn_p(ks[3], planes),
        conv3_w=conv_w(ks[4], cexp, planes, 1, 1),
        bn3=bn_p(ks[5], cexp),
        ca_conv1_w=conv_w(ks[6], mip, cexp, 1, 1),
        ca_conv1_b=0.1 * jax.random.normal(ks[7], (mip,), jnp.float32),
        ca_bn1=bn_p(ks[8], mip),
        ca_convh_w=conv_w(ks[9], cexp, mip, 1, 1),
        ca_convh_b=0.1 * jax.random.normal(ks[10], (cexp,), jnp.float32),
        ca_convw_w=conv_w(ks[11], cexp, mip, 1, 1),
        ca_convw_b=0.1 * jax.random.normal(ks[12], (cexp,), jnp.float32),
    )


# ------------------------------- forward pass ------------------------------- #

def bottleneck_coordatt_forward(x_nchw, params, stride=1):
    # downsample is None in this module instance -> residual add requires stride==1
    # and inplanes == planes * expansion.
    if stride != 1:
        raise ValueError("stride != 1 requires a downsample branch (not present)")
    # TODO(synk): strided conv2 / downsample path not implemented (module uses downsample=None).
    # TODO(synk): keep the surrounding model in NHWC to drop the NCHW<->NHWC transposes.

    # single bf16 NHWC tensor serves both conv1 input and the residual.
    x = jnp.transpose(x_nchw, (0, 2, 3, 1)).astype(jnp.bfloat16)
    N, H, W, Cin = x.shape
    planes = params["conv1_w"].shape[0]
    cexp = params["conv3_w"].shape[0]
    if Cin != cexp:
        raise ValueError("residual add needs inplanes == planes * expansion")

    # conv1 (1x1) + bn1 + relu
    w1 = params["conv1_w"][:, :, 0, 0].T                          # (Cin, planes)
    s1, b1 = _bn_fold(params["bn1"])
    out = matmul_affine_act(x.reshape(N * H * W, Cin), w1, s1, b1,
                            act="relu", out_dtype=jnp.bfloat16)
    out = out.reshape(N, H, W, planes)

    # conv2 (3x3, pad=1) + bn2 + relu  — dx-packed, row-band accumulating kernel
    w2 = jnp.transpose(params["conv2_w"], (2, 3, 1, 0)).reshape(3, 3 * planes, planes)
    s2, b2 = _bn_fold(params["bn2"])
    out = conv3x3_bn_relu(out, w2, s2, b2, out_dtype=jnp.bfloat16)

    # conv3 (1x1) + bn3
    w3 = params["conv3_w"][:, :, 0, 0].T                          # (planes, cexp)
    s3, b3 = _bn_fold(params["bn3"])
    out = matmul_affine_act(out.reshape(N * H * W, planes), w3, s3, b3,
                            act="none", out_dtype=jnp.bfloat16)
    out = out.reshape(N, H, W, cexp)

    # ---------------- CoordAtt (fused pooling + squeeze path) ----------------
    # TODO(synk): fusing the coordinate pooling into the conv3 matmul epilogue would
    # remove one extra HBM read of the conv3 output.
    sc1, bc1 = _bn_fold(params["ca_bn1"])
    bc1 = sc1 * params["ca_conv1_b"] + bc1                        # conv bias through BN
    a_h, a_w = coordatt_gates(
        out,
        params["ca_conv1_w"][:, :, 0, 0].T, sc1, bc1,
        params["ca_convh_w"][:, :, 0, 0].T, params["ca_convh_b"],
        params["ca_convw_w"][:, :, 0, 0].T, params["ca_convw_b"])

    # out = relu(out * a_w * a_h + residual)   (bf16 residual / output)
    out = attn_residual_relu(out, a_h, a_w, x, out_dtype=jnp.bfloat16)

    return jnp.transpose(out, (0, 3, 1, 2)).astype(jnp.float32)   # back to NCHW f32


# --------------------------- pure-JAX reference ----------------------------- #

def reference_forward(x_nchw, params, stride=1, eps=BN_EPS):
    def conv2d(x, w, b=None, stride=1, padding=0):
        y = jax.lax.conv_general_dilated(
            x, w, (stride, stride), [(padding, padding)] * 2,
            dimension_numbers=("NCHW", "OIHW", "NCHW"))
        if b is not None:
            y = y + b[None, :, None, None]
        return y

    def bn(x, p):
        g, be, m, v = p
        g, be, m, v = (t[None, :, None, None] for t in (g, be, m, v))
        return g * (x - m) / jnp.sqrt(v + eps) + be

    relu = lambda v: jnp.maximum(v, 0.0)
    out = relu(bn(conv2d(x_nchw, params["conv1_w"]), params["bn1"]))
    out = relu(bn(conv2d(out, params["conv2_w"], stride=stride, padding=1),
                  params["bn2"]))
    out = bn(conv2d(out, params["conv3_w"]), params["bn3"])
    n, c, h, w = out.shape
    x_h = jnp.mean(out, axis=3, keepdims=True)                                # (n,c,h,1)
    x_w = jnp.transpose(jnp.mean(out, axis=2, keepdims=True), (0, 1, 3, 2))   # (n,c,w,1)
    y = jnp.concatenate([x_h, x_w], axis=2)
    y = bn(conv2d(y, params["ca_conv1_w"], params["ca_conv1_b"]), params["ca_bn1"])
    y = y * jnp.clip(y + 3.0, 0.0, 6.0) / 6.0
    yh, yw = y[:, :, :h, :], jnp.transpose(y[:, :, h:, :], (0, 1, 3, 2))
    a_h = jax.nn.sigmoid(conv2d(yh, params["ca_convh_w"], params["ca_convh_b"]))
    a_w = jax.nn.sigmoid(conv2d(yw, params["ca_convw_w"], params["ca_convw_b"]))
    out = out * a_w * a_h + x_nchw
    return relu(out)


# ----------------------------------- main ----------------------------------- #

if __name__ == "__main__":
    key = jax.random.PRNGKey(0)
    kx, kp = jax.random.split(key)

    # inplanes must equal planes * expansion (downsample=None, stride=1)
    N, inplanes, H, W = 2, 16, 8, 8
    planes = 4

    x = jax.random.normal(kx, (N, inplanes, H, W), jnp.float32)
    params = init_params(kp, inplanes, planes)

    fwd = jax.jit(lambda xx: bottleneck_coordatt_forward(xx, params))
    out = jax.block_until_ready(fwd(x))

    ref = reference_forward(x, params)
    if out.shape != ref.shape:
        raise AssertionError(f"shape mismatch {out.shape} vs {ref.shape}")
    # bf16 MXU operands / bf16 intermediates & residual -> bf16-appropriate tolerance.
    if not bool(jnp.allclose(out, ref, rtol=2e-2, atol=2e-2)):
        raise AssertionError("Pallas output does not match reference")

    print("KERNEL_OK")
</pallas_src>

<mosaic_0001>
module attributes {stable_mosaic.version = 11 : i64} {
  func.func @_mm_kernel(%arg0: i32, %arg1: i32, %arg2: memref<128x16xbf16, #tpu.memory_space<vmem>>, %arg3: memref<16x4xbf16, #tpu.memory_space<vmem>>, %arg4: memref<1x4xf32, #tpu.memory_space<vmem>>, %arg5: memref<1x4xf32, #tpu.memory_space<vmem>>, %arg6: memref<128x4xbf16, #tpu.memory_space<vmem>>) attributes {dimension_semantics = [#tpu.dimension_semantics<parallel>, #tpu.dimension_semantics<parallel>], iteration_bounds = array<i64: 1, 1>, scalar_prefetch = 0 : i64, scratch_operands = 0 : i64, tpu.core_type = #tpu.core_type<tc>, window_params = [{transform_indices = @transform_0, window_bounds = array<i64: 128, 16>}, {transform_indices = @transform_1, window_bounds = array<i64: 16, 4>}, {transform_indices = @transform_2, window_bounds = array<i64: 1, 4>}, {transform_indices = @transform_3, window_bounds = array<i64: 1, 4>}, {transform_indices = @transform_4, window_bounds = array<i64: 128, 4>}]} {
    %c0 = arith.constant 0 : index
    %c0_0 = arith.constant 0 : index
    %0 = vector.load %arg2[%c0, %c0_0] : memref<128x16xbf16, #tpu.memory_space<vmem>>, vector<128x16xbf16>
    %c0_1 = arith.constant 0 : index
    %c0_2 = arith.constant 0 : index
    %1 = vector.load %arg3[%c0_1, %c0_2] : memref<16x4xbf16, #tpu.memory_space<vmem>>, vector<16x4xbf16>
    %cst = arith.constant dense<0.000000e+00> : vector<128x4xf32>
    %2 = tpu.matmul %0, %1, %cst {dimension_numbers = #tpu.dot_dimension_numbers<[1], [0], [0], [1], [0, 0, 1, 1], [], []>} : vector<128x16xbf16>, vector<16x4xbf16>, vector<128x4xf32> -> vector<128x4xf32>
    %c0_3 = arith.constant 0 : index
    %c0_4 = arith.constant 0 : index
    %3 = vector.load %arg4[%c0_3, %c0_4] : memref<1x4xf32, #tpu.memory_space<vmem>>, vector<1x4xf32>
    %4 = vector.broadcast %3 : vector<1x4xf32> to vector<128x4xf32>
    %5 = arith.mulf %2, %4 : vector<128x4xf32>
    %c0_5 = arith.constant 0 : index
    %c0_6 = arith.constant 0 : index
    %6 = vector.load %arg5[%c0_5, %c0_6] : memref<1x4xf32, #tpu.memory_space<vmem>>, vector<1x4xf32>
    %7 = vector.broadcast %6 : vector<1x4xf32> to vector<128x4xf32>
    %8 = arith.addf %5, %7 : vector<128x4xf32>
    %cst_7 = arith.constant 0.000000e+00 : f32
    %9 = vector.broadcast %cst_7 : f32 to vector<128x4xf32>
    %10 = arith.maximumf %8, %9 : vector<128x4xf32>
    %11 = arith.truncf %10 : vector<128x4xf32> to vector<128x4xbf16>
    %c0_8 = arith.constant 0 : index
    %c0_9 = arith.constant 0 : index
    %12 = vector.load %arg6[%c0_8, %c0_9] : memref<128x4xbf16, #tpu.memory_space<vmem>>, vector<128x4xbf16>
    tpu.vector_store %arg6[%c0_8, %c0_9], %11 {strides = array<i32>} : memref<128x4xbf16, #tpu.memory_space<vmem>>, vector<128x4xbf16>,
    return
  }
  func.func @transform_0(%arg0: i32, %arg1: i32) -> (i32, i32) {
    %c0_i32 = arith.constant 0 : i32
    %c0_i32_0 = arith.constant 0 : i32
    return %arg0, %c0_i32 : i32, i32
  }
  func.func @transform_1(%arg0: i32, %arg1: i32) -> (i32, i32) {
    %c0_i32 = arith.constant 0 : i32
    %c0_i32_0 = arith.constant 0 : i32
    return %c0_i32, %arg1 : i32, i32
  }
  func.func @transform_2(%arg0: i32, %arg1: i32) -> (i32, i32) {
    %c0_i32 = arith.constant 0 : i32
    %c0_i32_0 = arith.constant 0 : i32
    return %c0_i32, %arg1 : i32, i32
  }
  func.func @transform_3(%arg0: i32, %arg1: i32) -> (i32, i32) {
    %c0_i32 = arith.constant 0 : i32
    %c0_i32_0 = arith.constant 0 : i32
    return %c0_i32, %arg1 : i32, i32
  }
  func.func @transform_4(%arg0: i32, %arg1: i32) -> (i32, i32) {
    %c0_i32 = arith.constant 0 : i32
    return %arg0, %arg1 : i32, i32
  }
}

module attributes {stable_mosaic.version = 11 : i64} {
  func.func @_conv3x3_bn_relu_kernel(%arg0: i32, %arg1: memref<1x10x10x4xbf16, #tpu.memory_space<vmem>>, %arg2: memref<3x12x4xbf16, #tpu.memory_space<vmem>>, %arg3: memref<1x4xf32, #tpu.memory_space<vmem>>, %arg4: memref<1x4xf32, #tpu.memory_space<vmem>>, %arg5: memref<1x8x8x4xbf16, #tpu.memory_space<vmem>>) attributes {dimension_semantics = [#tpu.dimension_semantics<parallel>], iteration_bounds = array<i64: 2>, scalar_prefetch = 0 : i64, scratch_operands = 0 : i64, tpu.core_type = #tpu.core_type<tc>, window_params = [{transform_indices = @transform_0, window_bounds = array<i64: 1, 10, 10, 4>}, {pipeline_mode = #tpu.pipeline_mode<synchronous>, transform_indices = @transform_1, window_bounds = array<i64: 3, 12, 4>}, {pipeline_mode = #tpu.pipeline_mode<synchronous>, transform_indices = @transform_2, window_bounds = array<i64: 1, 4>}, {pipeline_mode = #tpu.pipeline_mode<synchronous>, transform_indices = @transform_3, window_bounds = array<i64: 1, 4>}, {transform_indices = @transform_4, window_bounds = array<i64: 1, 8, 8, 4>}]} {
    %c0 = arith.constant 0 : index
    %c0_0 = arith.constant 0 : index
    %0 = vector.load %arg3[%c0, %c0_0] : memref<1x4xf32, #tpu.memory_space<vmem>>, vector<1x4xf32>
    %c0_1 = arith.constant 0 : index
    %c0_2 = arith.constant 0 : index
    %1 = vector.load %arg4[%c0_1, %c0_2] : memref<1x4xf32, #tpu.memory_space<vmem>>, vector<1x4xf32>
    %cst = arith.constant 0.000000e+00 : f32
    %2 = vector.broadcast %cst : f32 to vector<64x4xf32>
    %c0_3 = arith.constant 0 : index
    %c0_4 = arith.constant 0 : index
    %c0_5 = arith.constant 0 : index
    %c0_6 = arith.constant 0 : index
    %3 = vector.load %arg1[%c0_3, %c0_4, %c0_5, %c0_6] : memref<1x10x10x4xbf16, #tpu.memory_space<vmem>>, vector<1x8x10x4xbf16>
    %4 = vector.shape_cast %3 : vector<1x8x10x4xbf16> to vector<8x10x4xbf16>
    %5 = vector.extract_strided_slice %4 {offsets = [0, 0, 0], sizes = [8, 8, 4], strides = [1, 1, 1]} : vector<8x10x4xbf16> to vector<8x8x4xbf16>
    %6 = vector.extract_strided_slice %4 {offsets = [0, 1, 0], sizes = [8, 8, 4], strides = [1, 1, 1]} : vector<8x10x4xbf16> to vector<8x8x4xbf16>
    %7 = vector.extract_strided_slice %4 {offsets = [0, 2, 0], sizes = [8, 8, 4], strides = [1, 1, 1]} : vector<8x10x4xbf16> to vector<8x8x4xbf16>
    %8 = tpu.concatenate %5, %6, %7 in 2 : vector<8x8x4xbf16>, vector<8x8x4xbf16>, vector<8x8x4xbf16> -> vector<8x8x12xbf16>
    %9 = vector.shape_cast %8 : vector<8x8x12xbf16> to vector<64x12xbf16>
    %c0_7 = arith.constant 0 : index
    %c0_8 = arith.constant 0 : index
    %c0_9 = arith.constant 0 : index
    %10 = vector.load %arg2[%c0_7, %c0_8, %c0_9] : memref<3x12x4xbf16, #tpu.memory_space<vmem>>, vector<1x12x4xbf16>
    %11 = vector.shape_cast %10 : vector<1x12x4xbf16> to vector<12x4xbf16>
    %cst_10 = arith.constant dense<0.000000e+00> : vector<64x4xf32>
    %12 = tpu.matmul %9, %11, %cst_10 {dimension_numbers = #tpu.dot_dimension_numbers<[1], [0], [0], [1], [0, 0, 1, 1], [], []>} : vector<64x12xbf16>, vector<12x4xbf16>, vector<64x4xf32> -> vector<64x4xf32>
    %13 = arith.addf %2, %12 : vector<64x4xf32>
    %c0_11 = arith.constant 0 : index
    %c1 = arith.constant 1 : index
    %c0_12 = arith.constant 0 : index
    %c0_13 = arith.constant 0 : index
    %14 = vector.load %arg1[%c0_11, %c1, %c0_12, %c0_13] : memref<1x10x10x4xbf16, #tpu.memory_space<vmem>>, vector<1x8x10x4xbf16>
    %15 = vector.shape_cast %14 : vector<1x8x10x4xbf16> to vector<8x10x4xbf16>
    %16 = vector.extract_strided_slice %15 {offsets = [0, 0, 0], sizes = [8, 8, 4], strides = [1, 1, 1]} : vector<8x10x4xbf16> to vector<8x8x4xbf16>
    %17 = vector.extract_strided_slice %15 {offsets = [0, 1, 0], sizes = [8, 8, 4], strides = [1, 1, 1]} : vector<8x10x4xbf16> to vector<8x8x4xbf16>
    %18 = vector.extract_strided_slice %15 {offsets = [0, 2, 0], sizes = [8, 8, 4], strides = [1, 1, 1]} : vector<8x10x4xbf16> to vector<8x8x4xbf16>
    %19 = tpu.concatenate %16, %17, %18 in 2 : vector<8x8x4xbf16>, vector<8x8x4xbf16>, vector<8x8x4xbf16> -> vector<8x8x12xbf16>
    %20 = vector.shape_cast %19 : vector<8x8x12xbf16> to vector<64x12xbf16>
    %c1_14 = arith.constant 1 : index
    %c0_15 = arith.constant 0 : index
    %c0_16 = arith.constant 0 : index
    %21 = vector.load %arg2[%c1_14, %c0_15, %c0_16] : memref<3x12x4xbf16, #tpu.memory_space<vmem>>, vector<1x12x4xbf16>
    %22 = vector.shape_cast %21 : vector<1x12x4xbf16> to vector<12x4xbf16>
    %cst_17 = arith.constant dense<0.000000e+00> : vector<64x4xf32>
    %23 = tpu.matmul %20, %22, %cst_17 {dimension_numbers = #tpu.dot_dimension_numbers<[1], [0], [0], [1], [0, 0, 1, 1], [], []>} : vector<64x12xbf16>, vector<12x4xbf16>, vector<64x4xf32> -> vector<64x4xf32>
    %24 = arith.addf %13, %23 : vector<64x4xf32>
    %c0_18 = arith.constant 0 : index
    %c2 = arith.constant 2 : index
    %c0_19 = arith.constant 0 : index
    %c0_20 = arith.constant 0 : index
    %25 = vector.load %arg1[%c0_18, %c2, %c0_19, %c0_20] : memref<1x10x10x4xbf16, #tpu.memory_space<vmem>>, vector<1x8x10x4xbf16>
    %26 = vector.shape_cast %25 : vector<1x8x10x4xbf16> to vector<8x10x4xbf16>
    %27 = vector.extract_strided_slice %26 {offsets = [0, 0, 0], sizes = [8, 8, 4], strides = [1, 1, 1]} : vector<8x10x4xbf16> to vector<8x8x4xbf16>
    %28 = vector.extract_strided_slice %26 {offsets = [0, 1, 0], sizes = [8, 8, 4], strides = [1, 1, 1]} : vector<8x10x4xbf16> to vector<8x8x4xbf16>
    %29 = vector.extract_strided_slice %26 {offsets = [0, 2, 0], sizes = [8, 8, 4], strides = [1, 1, 1]} : vector<8x10x4xbf16> to vector<8x8x4xbf16>
    %30 = tpu.concatenate %27, %28, %29 in 2 : vector<8x8x4xbf16>, vector<8x8x4xbf16>, vector<8x8x4xbf16> -> vector<8x8x12xbf16>
    %31 = vector.shape_cast %30 : vector<8x8x12xbf16> to vector<64x12xbf16>
    %c2_21 = arith.constant 2 : index
    %c0_22 = arith.constant 0 : index
    %c0_23 = arith.constant 0 : index
    %32 = vector.load %arg2[%c2_21, %c0_22, %c0_23] : memref<3x12x4xbf16, #tpu.memory_space<vmem>>, vector<1x12x4xbf16>
    %33 = vector.shape_cast %32 : vector<1x12x4xbf16> to vector<12x4xbf16>
    %cst_24 = arith.constant dense<0.000000e+00> : vector<64x4xf32>
    %34 = tpu.matmul %31, %33, %cst_24 {dimension_numbers = #tpu.dot_dimension_numbers<[1], [0], [0], [1], [0, 0, 1, 1], [], []>} : vector<64x12xbf16>, vector<12x4xbf16>, vector<64x4xf32> -> vector<64x4xf32>
    %35 = arith.addf %24, %34 : vector<64x4xf32>
    %36 = vector.broadcast %0 : vector<1x4xf32> to vector<64x4xf32>
    %37 = arith.mulf %35, %36 : vector<64x4xf32>
    %38 = vector.broadcast %1 : vector<1x4xf32> to vector<64x4xf32>
    %39 = arith.addf %37, %38 : vector<64x4xf32>
    %cst_25 = arith.constant 0.000000e+00 : f32
    %40 = vector.broadcast %cst_25 : f32 to vector<64x4xf32>
    %41 = arith.maximumf %39, %40 : vector<64x4xf32>
    %42 = vector.shape_cast %41 : vector<64x4xf32> to vector<8x8x4xf32>
    %43 = arith.truncf %42 : vector<8x8x4xf32> to vector<8x8x4xbf16>
    %c0_26 = arith.constant 0 : index
    %c0_27 = arith.constant 0 : index
    %c0_28 = arith.constant 0 : index
    %c0_29 = arith.constant 0 : index
    %44 = vector.load %arg5[%c0_26, %c0_27, %c0_28, %c0_29] : memref<1x8x8x4xbf16, #tpu.memory_space<vmem>>, vector<1x8x8x4xbf16>
    %45 = vector.shape_cast %44 : vector<1x8x8x4xbf16> to vector<8x8x4xbf16>
    %46 = vector.shape_cast %43 : vector<8x8x4xbf16> to vector<1x8x8x4xbf16>
    tpu.vector_store %arg5[%c0_26, %c0_27, %c0_28, %c0_29], %46 {strides = array<i32>} : memref<1x8x8x4xbf16, #tpu.memory_space<vmem>>, vector<1x8x8x4xbf16>,
    return
  }
  func.func @transform_0(%arg0: i32) -> (i32, i32, i32, i32) {
    %c0_i32 = arith.constant 0 : i32
    %c0_i32_0 = arith.constant 0 : i32
    %c0_i32_1 = arith.constant 0 : i32
    %c0_i32_2 = arith.constant 0 : i32
    return %arg0, %c0_i32, %c0_i32_0, %c0_i32_1 : i32, i32, i32, i32
  }
  func.func @transform_1(%arg0: i32) -> (i32, i32, i32) {
    %c0_i32 = arith.constant 0 : i32
    %c0_i32_0 = arith.constant 0 : i32
    %c0_i32_1 = arith.constant 0 : i32
    %c0_i32_2 = arith.constant 0 : i32
    return %c0_i32, %c0_i32_0, %c0_i32_1 : i32, i32, i32
  }
  func.func @transform_2(%arg0: i32) -> (i32, i32) {
    %c0_i32 = arith.constant 0 : i32
    %c0_i32_0 = arith.constant 0 : i32
    %c0_i32_1 = arith.constant 0 : i32
    return %c0_i32, %c0_i32_0 : i32, i32
  }
  func.func @transform_3(%arg0: i32) -> (i32, i32) {
    %c0_i32 = arith.constant 0 : i32
    %c0_i32_0 = arith.constant 0 : i32
    %c0_i32_1 = arith.constant 0 : i32
    return %c0_i32, %c0_i32_0 : i32, i32
  }
  func.func @transform_4(%arg0: i32) -> (i32, i32, i32, i32) {
    %c0_i32 = arith.constant 0 : i32
    %c0_i32_0 = arith.constant 0 : i32
    %c0_i32_1 = arith.constant 0 : i32
    %c0_i32_2 = arith.constant 0 : i32
    return %arg0, %c0_i32, %c0_i32_0, %c0_i32_1 : i32, i32, i32, i32
  }
}

module attributes {stable_mosaic.version = 11 : i64} {
  func.func @_mm_kernel(%arg0: i32, %arg1: i32, %arg2: memref<128x4xbf16, #tpu.memory_space<vmem>>, %arg3: memref<4x16xbf16, #tpu.memory_space<vmem>>, %arg4: memref<1x16xf32, #tpu.memory_space<vmem>>, %arg5: memref<1x16xf32, #tpu.memory_space<vmem>>, %arg6: memref<128x16xbf16, #tpu.memory_space<vmem>>) attributes {dimension_semantics = [#tpu.dimension_semantics<parallel>, #tpu.dimension_semantics<parallel>], iteration_bounds = array<i64: 1, 1>, scalar_prefetch = 0 : i64, scratch_operands = 0 : i64, tpu.core_type = #tpu.core_type<tc>, window_params = [{transform_indices = @transform_0, window_bounds = array<i64: 128, 4>}, {transform_indices = @transform_1, window_bounds = array<i64: 4, 16>}, {transform_indices = @transform_2, window_bounds = array<i64: 1, 16>}, {transform_indices = @transform_3, window_bounds = array<i64: 1, 16>}, {transform_indices = @transform_4, window_bounds = array<i64: 128, 16>}]} {
    %c0 = arith.constant 0 : index
    %c0_0 = arith.constant 0 : index
    %0 = vector.load %arg2[%c0, %c0_0] : memref<128x4xbf16, #tpu.memory_space<vmem>>, vector<128x4xbf16>
    %c0_1 = arith.constant 0 : index
    %c0_2 = arith.constant 0 : index
    %1 = vector.load %arg3[%c0_1, %c0_2] : memref<4x16xbf16, #tpu.memory_space<vmem>>, vector<4x16xbf16>
    %cst = arith.constant dense<0.000000e+00> : vector<128x16xf32>
    %2 = tpu.matmul %0, %1, %cst {dimension_numbers = #tpu.dot_dimension_numbers<[1], [0], [0], [1], [0, 0, 1, 1], [], []>} : vector<128x4xbf16>, vector<4x16xbf16>, vector<128x16xf32> -> vector<128x16xf32>
    %c0_3 = arith.constant 0 : index
    %c0_4 = arith.constant 0 : index
    %3 = vector.load %arg4[%c0_3, %c0_4] : memref<1x16xf32, #tpu.memory_space<vmem>>, vector<1x16xf32>
    %4 = vector.broadcast %3 : vector<1x16xf32> to vector<128x16xf32>
    %5 = arith.mulf %2, %4 : vector<128x16xf32>
    %c0_5 = arith.constant 0 : index
    %c0_6 = arith.constant 0 : index
    %6 = vector.load %arg5[%c0_5, %c0_6] : memref<1x16xf32, #tpu.memory_space<vmem>>, vector<1x16xf32>
    %7 = vector.broadcast %6 : vector<1x16xf32> to vector<128x16xf32>
    %8 = arith.addf %5, %7 : vector<128x16xf32>
    %9 = arith.truncf %8 : vector<128x16xf32> to vector<128x16xbf16>
    %c0_7 = arith.constant 0 : index
    %c0_8 = arith.constant 0 : index
    %10 = vector.load %arg6[%c0_7, %c0_8] : memref<128x16xbf16, #tpu.memory_space<vmem>>, vector<128x16xbf16>
    tpu.vector_store %arg6[%c0_7, %c0_8], %9 {strides = array<i32>} : memref<128x16xbf16, #tpu.memory_space<vmem>>, vector<128x16xbf16>,
    return
  }
  func.func @transform_0(%arg0: i32, %arg1: i32) -> (i32, i32) {
    %c0_i32 = arith.constant 0 : i32
    %c0_i32_0 = arith.constant 0 : i32
    return %arg0, %c0_i32 : i32, i32
  }
  func.func @transform_1(%arg0: i32, %arg1: i32) -> (i32, i32) {
    %c0_i32 = arith.constant 0 : i32
    %c0_i32_0 = arith.constant 0 : i32
    return %c0_i32, %arg1 : i32, i32
  }
  func.func @transform_2(%arg0: i32, %arg1: i32) -> (i32, i32) {
    %c0_i32 = arith.constant 0 : i32
    %c0_i32_0 = arith.constant 0 : i32
    return %c0_i32, %arg1 : i32, i32
  }
  func.func @transform_3(%arg0: i32, %arg1: i32) -> (i32, i32) {
    %c0_i32 = arith.constant 0 : i32
    %c0_i32_0 = arith.constant 0 : i32
    return %c0_i32, %arg1 : i32, i32
  }
  func.func @transform_4(%arg0: i32, %arg1: i32) -> (i32, i32) {
    %c0_i32 = arith.constant 0 : i32
    return %arg0, %arg1 : i32, i32
  }
}

module attributes {stable_mosaic.version = 11 : i64} {
  func.func @_coordatt_kernel(%arg0: i32, %arg1: memref<1x8x8x16xbf16, #tpu.memory_space<vmem>>, %arg2: memref<16x8xf32, #tpu.memory_space<vmem>>, %arg3: memref<1x8xf32, #tpu.memory_space<vmem>>, %arg4: memref<1x8xf32, #tpu.memory_space<vmem>>, %arg5: memref<8x16xf32, #tpu.memory_space<vmem>>, %arg6: memref<1x16xf32, #tpu.memory_space<vmem>>, %arg7: memref<8x16xf32, #tpu.memory_space<vmem>>, %arg8: memref<1x16xf32, #tpu.memory_space<vmem>>, %arg9: memref<1x8x16xf32, #tpu.memory_space<vmem>>, %arg10: memref<1x8x16xf32, #tpu.memory_space<vmem>>) attributes {dimension_semantics = [#tpu.dimension_semantics<parallel>], iteration_bounds = array<i64: 2>, scalar_prefetch = 0 : i64, scratch_operands = 0 : i64, tpu.core_type = #tpu.core_type<tc>, window_params = [{transform_indices = @transform_0, window_bounds = array<i64: 1, 8, 8, 16>}, {pipeline_mode = #tpu.pipeline_mode<synchronous>, transform_indices = @transform_1, window_bounds = array<i64: 16, 8>}, {pipeline_mode = #tpu.pipeline_mode<synchronous>, transform_indices = @transform_2, window_bounds = array<i64: 1, 8>}, {pipeline_mode = #tpu.pipeline_mode<synchronous>, transform_indices = @transform_3, window_bounds = array<i64: 1, 8>}, {pipeline_mode = #tpu.pipeline_mode<synchronous>, transform_indices = @transform_4, window_bounds = array<i64: 8, 16>}, {pipeline_mode = #tpu.pipeline_mode<synchronous>, transform_indices = @transform_5, window_bounds = array<i64: 1, 16>}, {pipeline_mode = #tpu.pipeline_mode<synchronous>, transform_indices = @transform_6, window_bounds = array<i64: 8, 16>}, {pipeline_mode = #tpu.pipeline_mode<synchronous>, transform_indices = @transform_7, window_bounds = array<i64: 1, 16>}, {transform_indices = @transform_8, window_bounds = array<i64: 1, 8, 16>}, {transform_indices = @transform_9, window_bounds = array<i64: 1, 8, 16>}]} {
    %c0 = arith.constant 0 : index
    %c0_0 = arith.constant 0 : index
    %c0_1 = arith.constant 0 : index
    %c0_2 = arith.constant 0 : index
    %0 = vector.load %arg1[%c0, %c0_0, %c0_1, %c0_2] : memref<1x8x8x16xbf16, #tpu.memory_space<vmem>>, vector<1x8x8x16xbf16>
    %1 = vector.shape_cast %0 : vector<1x8x8x16xbf16> to vector<8x8x16xbf16>
    %2 = arith.extf %1 : vector<8x8x16xbf16> to vector<8x8x16xf32>
    %cst = arith.constant dense<0.000000e+00> : vector<8x16xf32>
    %3 = vector.multi_reduction <add>, %2, %cst [1] : vector<8x8x16xf32> to vector<8x16xf32>
    %cst_3 = arith.constant 8.000000e+00 : f32
    %4 = vector.broadcast %cst_3 : f32 to vector<8x16xf32>
    %5 = arith.divf %3, %4 : vector<8x16xf32>
    %cst_4 = arith.constant dense<0.000000e+00> : vector<8x16xf32>
    %6 = vector.multi_reduction <add>, %2, %cst_4 [0] : vector<8x8x16xf32> to vector<8x16xf32>
    %cst_5 = arith.constant 8.000000e+00 : f32
    %7 = vector.broadcast %cst_5 : f32 to vector<8x16xf32>
    %8 = arith.divf %6, %7 : vector<8x16xf32>
    %9 = tpu.concatenate %5, %8 in 0 : vector<8x16xf32>, vector<8x16xf32> -> vector<16x16xf32>
    %c0_6 = arith.constant 0 : index
    %c0_7 = arith.constant 0 : index
    %10 = vector.load %arg2[%c0_6, %c0_7] : memref<16x8xf32, #tpu.memory_space<vmem>>, vector<16x8xf32>
    %cst_8 = arith.constant dense<0.000000e+00> : vector<16x8xf32>
    %11 = tpu.matmul %9, %10, %cst_8 {dimension_numbers = #tpu.dot_dimension_numbers<[1], [0], [0], [1], [0, 0, 1, 1], [], []>} : vector<16x16xf32>, vector<16x8xf32>, vector<16x8xf32> -> vector<16x8xf32>
    %c0_9 = arith.constant 0 : index
    %c0_10 = arith.constant 0 : index
    %12 = vector.load %arg3[%c0_9, %c0_10] : memref<1x8xf32, #tpu.memory_space<vmem>>, vector<1x8xf32>
    %13 = vector.broadcast %12 : vector<1x8xf32> to vector<16x8xf32>
    %14 = arith.mulf %11, %13 : vector<16x8xf32>
    %c0_11 = arith.constant 0 : index
    %c0_12 = arith.constant 0 : index
    %15 = vector.load %arg4[%c0_11, %c0_12] : memref<1x8xf32, #tpu.memory_space<vmem>>, vector<1x8xf32>
    %16 = vector.broadcast %15 : vector<1x8xf32> to vector<16x8xf32>
    %17 = arith.addf %14, %16 : vector<16x8xf32>
    %cst_13 = arith.constant 3.000000e+00 : f32
    %18 = vector.broadcast %cst_13 : f32 to vector<16x8xf32>
    %19 = arith.addf %17, %18 : vector<16x8xf32>
    %cst_14 = arith.constant 0.000000e+00 : f32
    %cst_15 = arith.constant 6.000000e+00 : f32
    %20 = vector.broadcast %cst_14 : f32 to vector<16x8xf32>
    %21 = arith.maximumf %20, %19 : vector<16x8xf32>
    %22 = vector.broadcast %cst_15 : f32 to vector<16x8xf32>
    %23 = arith.minimumf %22, %21 : vector<16x8xf32>
    %cst_16 = arith.constant 0.166666672 : f32
    %24 = vector.broadcast %cst_16 : f32 to vector<16x8xf32>
    %25 = arith.mulf %23, %24 : vector<16x8xf32>
    %26 = arith.mulf %17, %25 : vector<16x8xf32>
    %27 = vector.extract_strided_slice %26 {offsets = [0, 0], sizes = [8, 8], strides = [1, 1]} : vector<16x8xf32> to vector<8x8xf32>
    %c0_17 = arith.constant 0 : index
    %c0_18 = arith.constant 0 : index
    %28 = vector.load %arg5[%c0_17, %c0_18] : memref<8x16xf32, #tpu.memory_space<vmem>>, vector<8x16xf32>
    %cst_19 = arith.constant dense<0.000000e+00> : vector<8x16xf32>
    %29 = tpu.matmul %27, %28, %cst_19 {dimension_numbers = #tpu.dot_dimension_numbers<[1], [0], [0], [1], [0, 0, 1, 1], [], []>} : vector<8x8xf32>, vector<8x16xf32>, vector<8x16xf32> -> vector<8x16xf32>
    %c0_20 = arith.constant 0 : index
    %c0_21 = arith.constant 0 : index
    %30 = vector.load %arg6[%c0_20, %c0_21] : memref<1x16xf32, #tpu.memory_space<vmem>>, vector<1x16xf32>
    %31 = vector.broadcast %30 : vector<1x16xf32> to vector<8x16xf32>
    %32 = arith.addf %29, %31 : vector<8x16xf32>
    %33 = vector.extract_strided_slice %26 {offsets = [8, 0], sizes = [8, 8], strides = [1, 1]} : vector<16x8xf32> to vector<8x8xf32>
    %c0_22 = arith.constant 0 : index
    %c0_23 = arith.constant 0 : index
    %34 = vector.load %arg7[%c0_22, %c0_23] : memref<8x16xf32, #tpu.memory_space<vmem>>, vector<8x16xf32>
    %cst_24 = arith.constant dense<0.000000e+00> : vector<8x16xf32>
    %35 = tpu.matmul %33, %34, %cst_24 {dimension_numbers = #tpu.dot_dimension_numbers<[1], [0], [0], [1], [0, 0, 1, 1], [], []>} : vector<8x8xf32>, vector<8x16xf32>, vector<8x16xf32> -> vector<8x16xf32>
    %c0_25 = arith.constant 0 : index
    %c0_26 = arith.constant 0 : index
    %36 = vector.load %arg8[%c0_25, %c0_26] : memref<1x16xf32, #tpu.memory_space<vmem>>, vector<1x16xf32>
    %37 = vector.broadcast %36 : vector<1x16xf32> to vector<8x16xf32>
    %38 = arith.addf %35, %37 : vector<8x16xf32>
    %39 = arith.negf %32 : vector<8x16xf32>
    %40 = math.exp %39 : vector<8x16xf32>
    %cst_27 = arith.constant 1.000000e+00 : f32
    %41 = vector.broadcast %cst_27 : f32 to vector<8x16xf32>
    %42 = arith.addf %41, %40 : vector<8x16xf32>
    %43 = arith.divf %41, %42 : vector<8x16xf32>
    %c0_28 = arith.constant 0 : index
    %c0_29 = arith.constant 0 : index
    %c0_30 = arith.constant 0 : index
    %44 = vector.load %arg9[%c0_28, %c0_29, %c0_30] : memref<1x8x16xf32, #tpu.memory_space<vmem>>, vector<1x8x16xf32>
    %45 = vector.shape_cast %44 : vector<1x8x16xf32> to vector<8x16xf32>
    %46 = vector.shape_cast %43 : vector<8x16xf32> to vector<1x8x16xf32>
    tpu.vector_store %arg9[%c0_28, %c0_29, %c0_30], %46 {strides = array<i32>} : memref<1x8x16xf32, #tpu.memory_space<vmem>>, vector<1x8x16xf32>,
    %47 = arith.negf %38 : vector<8x16xf32>
    %48 = math.exp %47 : vector<8x16xf32>
    %cst_31 = arith.constant 1.000000e+00 : f32
    %49 = vector.broadcast %cst_31 : f32 to vector<8x16xf32>
    %50 = arith.addf %49, %48 : vector<8x16xf32>
    %51 = arith.divf %49, %50 : vector<8x16xf32>
    %c0_32 = arith.constant 0 : index
    %c0_33 = arith.constant 0 : index
    %c0_34 = arith.constant 0 : index
    %52 = vector.load %arg10[%c0_32, %c0_33, %c0_34] : memref<1x8x16xf32, #tpu.memory_space<vmem>>, vector<1x8x16xf32>
    %53 = vector.shape_cast %52 : vector<1x8x16xf32> to vector<8x16xf32>
    %54 = vector.shape_cast %51 : vector<8x16xf32> to vector<1x8x16xf32>
    tpu.vector_store %arg10[%c0_32, %c0_33, %c0_34], %54 {strides = array<i32>} : memref<1x8x16xf32, #tpu.memory_space<vmem>>, vector<1x8x16xf32>,
    return
  }
  func.func @transform_0(%arg0: i32) -> (i32, i32, i32, i32) {
    %c0_i32 = arith.constant 0 : i32
    %c0_i32_0 = arith.constant 0 : i32
    %c0_i32_1 = arith.constant 0 : i32
    %c0_i32_2 = arith.constant 0 : i32
    return %arg0, %c0_i32, %c0_i32_0, %c0_i32_1 : i32, i32, i32, i32
  }
  func.func @transform_1(%arg0: i32) -> (i32, i32) {
    %c0_i32 = arith.constant 0 : i32
    %c0_i32_0 = arith.constant 0 : i32
    %c0_i32_1 = arith.constant 0 : i32
    return %c0_i32, %c0_i32_0 : i32, i32
  }
  func.func @transform_2(%arg0: i32) -> (i32, i32) {
    %c0_i32 = arith.constant 0 : i32
    %c0_i32_0 = arith.constant 0 : i32
    %c0_i32_1 = arith.constant 0 : i32
    return %c0_i32, %c0_i32_0 : i32, i32
  }
  func.func @transform_3(%arg0: i32) -> (i32, i32) {
    %c0_i32 = arith.constant 0 : i32
    %c0_i32_0 = arith.constant 0 : i32
    %c0_i32_1 = arith.constant 0 : i32
    return %c0_i32, %c0_i32_0 : i32, i32
  }
  func.func @transform_4(%arg0: i32) -> (i32, i32) {
    %c0_i32 = arith.constant 0 : i32
    %c0_i32_0 = arith.constant 0 : i32
    %c0_i32_1 = arith.constant 0 : i32
    return %c0_i32, %c0_i32_0 : i32, i32
  }
  func.func @transform_5(%arg0: i32) -> (i32, i32) {
    %c0_i32 = arith.constant 0 : i32
    %c0_i32_0 = arith.constant 0 : i32
    %c0_i32_1 = arith.constant 0 : i32
    return %c0_i32, %c0_i32_0 : i32, i32
  }
  func.func @transform_6(%arg0: i32) -> (i32, i32) {
    %c0_i32 = arith.constant 0 : i32
    %c0_i32_0 = arith.constant 0 : i32
    %c0_i32_1 = arith.constant 0 : i32
    return %c0_i32, %c0_i32_0 : i32, i32
  }
  func.func @transform_7(%arg0: i32) -> (i32, i32) {
    %c0_i32 = arith.constant 0 : i32
    %c0_i32_0 = arith.constant 0 : i32
    %c0_i32_1 = arith.constant 0 : i32
    return %c0_i32, %c0_i32_0 : i32, i32
  }
  func.func @transform_8(%arg0: i32) -> (i32, i32, i32) {
    %c0_i32 = arith.constant 0 : i32
    %c0_i32_0 = arith.constant 0 : i32
    %c0_i32_1 = arith.constant 0 : i32
    return %arg0, %c0_i32, %c0_i32_0 : i32, i32, i32
  }
  func.func @transform_9(%arg0: i32) -> (i32, i32, i32) {
    %c0_i32 = arith.constant 0 : i32
    %c0_i32_0 = arith.constant 0 : i32
    %c0_i32_1 = arith.constant 0 : i32
    return %arg0, %c0_i32, %c0_i32_0 : i32, i32, i32
  }
}

module attributes {stable_mosaic.version = 11 : i64} {
  func.func @_attn_residual_kernel(%arg0: i32, %arg1: i32, %arg2: memref<1x8x8x16xbf16, #tpu.memory_space<vmem>>, %arg3: memref<1x8x16xf32, #tpu.memory_space<vmem>>, %arg4: memref<1x8x16xf32, #tpu.memory_space<vmem>>, %arg5: memref<1x8x8x16xbf16, #tpu.memory_space<vmem>>, %arg6: memref<1x8x8x16xbf16, #tpu.memory_space<vmem>>) attributes {dimension_semantics = [#tpu.dimension_semantics<parallel>, #tpu.dimension_semantics<parallel>], iteration_bounds = array<i64: 2, 1>, scalar_prefetch = 0 : i64, scratch_operands = 0 : i64, tpu.core_type = #tpu.core_type<tc>, window_params = [{transform_indices = @transform_0, window_bounds = array<i64: 1, 8, 8, 16>}, {transform_indices = @transform_1, window_bounds = array<i64: 1, 8, 16>}, {transform_indices = @transform_2, window_bounds = array<i64: 1, 8, 16>}, {transform_indices = @transform_3, window_bounds = array<i64: 1, 8, 8, 16>}, {transform_indices = @transform_4, window_bounds = array<i64: 1, 8, 8, 16>}]} {
    %c0 = arith.constant 0 : index
    %c0_0 = arith.constant 0 : index
    %c0_1 = arith.constant 0 : index
    %c0_2 = arith.constant 0 : index
    %0 = vector.load %arg2[%c0, %c0_0, %c0_1, %c0_2] : memref<1x8x8x16xbf16, #tpu.memory_space<vmem>>, vector<1x8x8x16xbf16>
    %1 = arith.extf %0 : vector<1x8x8x16xbf16> to vector<1x8x8x16xf32>
    %c0_3 = arith.constant 0 : index
    %c0_4 = arith.constant 0 : index
    %c0_5 = arith.constant 0 : index
    %c0_6 = arith.constant 0 : index
    %2 = vector.load %arg5[%c0_3, %c0_4, %c0_5, %c0_6] : memref<1x8x8x16xbf16, #tpu.memory_space<vmem>>, vector<1x8x8x16xbf16>
    %3 = arith.extf %2 : vector<1x8x8x16xbf16> to vector<1x8x8x16xf32>
    %c0_7 = arith.constant 0 : index
    %c0_8 = arith.constant 0 : index
    %c0_9 = arith.constant 0 : index
    %4 = vector.load %arg3[%c0_7, %c0_8, %c0_9] : memref<1x8x16xf32, #tpu.memory_space<vmem>>, vector<1x8x16xf32>
    %5 = vector.shape_cast %4 : vector<1x8x16xf32> to vector<1x8x1x16xf32>
    %c0_10 = arith.constant 0 : index
    %c0_11 = arith.constant 0 : index
    %c0_12 = arith.constant 0 : index
    %6 = vector.load %arg4[%c0_10, %c0_11, %c0_12] : memref<1x8x16xf32, #tpu.memory_space<vmem>>, vector<1x8x16xf32>
    %7 = vector.shape_cast %6 : vector<1x8x16xf32> to vector<1x1x8x16xf32>
    %8 = vector.broadcast %5 : vector<1x8x1x16xf32> to vector<1x8x8x16xf32>
    %9 = vector.broadcast %7 : vector<1x1x8x16xf32> to vector<1x8x8x16xf32>
    %10 = arith.mulf %8, %9 : vector<1x8x8x16xf32>
    %11 = arith.mulf %1, %10 : vector<1x8x8x16xf32>
    %12 = arith.addf %11, %3 : vector<1x8x8x16xf32>
    %cst = arith.constant 0.000000e+00 : f32
    %13 = vector.broadcast %cst : f32 to vector<1x8x8x16xf32>
    %14 = arith.maximumf %12, %13 : vector<1x8x8x16xf32>
    %15 = arith.truncf %14 : vector<1x8x8x16xf32> to vector<1x8x8x16xbf16>
    %c0_13 = arith.constant 0 : index
    %c0_14 = arith.constant 0 : index
    %c0_15 = arith.constant 0 : index
    %c0_16 = arith.constant 0 : index
    %16 = vector.load %arg6[%c0_13, %c0_14, %c0_15, %c0_16] : memref<1x8x8x16xbf16, #tpu.memory_space<vmem>>, vector<1x8x8x16xbf16>
    tpu.vector_store %arg6[%c0_13, %c0_14, %c0_15, %c0_16], %15 {strides = array<i32>} : memref<1x8x8x16xbf16, #tpu.memory_space<vmem>>, vector<1x8x8x16xbf16>,
    return
  }
  func.func @transform_0(%arg0: i32, %arg1: i32) -> (i32, i32, i32, i32) {
    %c0_i32 = arith.constant 0 : i32
    %c0_i32_0 = arith.constant 0 : i32
    %c0_i32_1 = arith.constant 0 : i32
    return %arg0, %arg1, %c0_i32, %c0_i32_0 : i32, i32, i32, i32
  }
  func.func @transform_1(%arg0: i32, %arg1: i32) -> (i32, i32, i32) {
    %c0_i32 = arith.constant 0 : i32
    %c0_i32_0 = arith.constant 0 : i32
    return %arg0, %arg1, %c0_i32 : i32, i32, i32
  }
  func.func @transform_2(%arg0: i32, %arg1: i32) -> (i32, i32, i32) {
    %c0_i32 = arith.constant 0 : i32
    %c0_i32_0 = arith.constant 0 : i32
    %c0_i32_1 = arith.constant 0 : i32
    return %arg0, %c0_i32, %c0_i32_0 : i32, i32, i32
  }
  func.func @transform_3(%arg0: i32, %arg1: i32) -> (i32, i32, i32, i32) {
    %c0_i32 = arith.constant 0 : i32
    %c0_i32_0 = arith.constant 0 : i32
    %c0_i32_1 = arith.constant 0 : i32
    return %arg0, %arg1, %c0_i32, %c0_i32_0 : i32, i32, i32, i32
  }
  func.func @transform_4(%arg0: i32, %arg1: i32) -> (i32, i32, i32, i32) {
    %c0_i32 = arith.constant 0 : i32
    %c0_i32_0 = arith.constant 0 : i32
    %c0_i32_1 = arith.constant 0 : i32
    return %arg0, %arg1, %c0_i32, %c0_i32_0 : i32, i32, i32, i32
  }
}

</mosaic_0001>

<llo_original>
// kernel: _lambda_.7
$region0: #{_lambda_.7}
  #allocation0 [shape = 'u32[]', space=smem, size = 0x4, offset = 0x4, fixed_abs, tag = 'smem constant byte address 0x4 - core index']
  #allocation1 [shape = 'u32[144,128]{1,0:T(1,128)}', space=vmem, size = 0x12000, scoped, tag = 'internal scratch']
  %s0 = inlined_call_operand.vmem [shape: bf16[128,4], index: 0, kind: input, shape index: {}]
  %s1 = inlined_call_operand.vmem [shape: bf16[4,16], index: 1, kind: input, shape index: {}]
  %s2 = inlined_call_operand.vmem [shape: f32[1,16], index: 2, kind: input, shape index: {}]
  %s3 = inlined_call_operand.vmem [shape: f32[1,16], index: 3, kind: input, shape index: {}]
  %s4 = inlined_call_operand.vmem [shape: bf16[128,16], index: 4, kind: output, shape index: {}]
  %s5 = sld [smem:[#allocation0]]
  $region26: #{_lambda_.7} parent=0
    _
  %s7 = ssub.s32 1, %s5
  %s8 = scalar_select 0, %s7, %s5
  // Predicated region
  $region2: #{_lambda_.7} parent=0 // pred_check
    _
  $region3: #{_lambda_.7} parent=0 // pred_check_branch
    %10 = sbr.rel (0) target = $region5
  $region4: #{_lambda_.7} parent=0 // pred_region
    _
  $region5: #{_lambda_.7} parent=0 // pred_fallthru
    _
  // Predicated region
  $region6: #{_lambda_.7} parent=0 // pred_check
    _
  $region7: #{_lambda_.7} parent=0 // pred_check_branch
    %12 = sbr.rel (0) target = $region9
  $region8: #{_lambda_.7} parent=0 // pred_region
    _
  $region9: #{_lambda_.7} parent=0 // pred_fallthru
    _
  // Predicated region
  $region10: #{_lambda_.7} parent=0 // pred_check
    _
  $region11: #{_lambda_.7} parent=0 // pred_check_branch
    %14 = sbr.rel (0) target = $region13
  $region12: #{_lambda_.7} parent=0 // pred_region
    _
  $region13: #{_lambda_.7} parent=0 // pred_fallthru
    _
  // Predicated region
  $region14: #{_lambda_.7} parent=0 // pred_check
    _
  $region15: #{_lambda_.7} parent=0 // pred_check_branch
    %16 = sbr.rel (0) target = $region17
  $region16: #{_lambda_.7} parent=0 // pred_region
    _
  $region17: #{_lambda_.7} parent=0 // pred_fallthru
    _
  %v18 = vld [vmem:[%s0] sm:$0xf]
  %v19 = vld [vmem:[%s0 + $0x4] sm:$0xf]
  %v20 = vld [vmem:[%s0 + $0x8] sm:$0xf]
  %v21 = vld [vmem:[%s0 + $0xc] sm:$0xf]
  %v22 = vld [vmem:[%s0 + $0x10] sm:$0xf]
  %v23 = vld [vmem:[%s0 + $0x14] sm:$0xf]
  %v24 = vld [vmem:[%s0 + $0x18] sm:$0xf]
  %v25 = vld [vmem:[%s0 + $0x1c] sm:$0xf]
  %v26 = vld [vmem:[%s0 + $0x20] sm:$0xf]
  %v27 = vld [vmem:[%s0 + $0x24] sm:$0xf]
  %v28 = vld [vmem:[%s0 + $0x28] sm:$0xf]
  %v29 = vld [vmem:[%s0 + $0x2c] sm:$0xf]
  %v30 = vld [vmem:[%s0 + $0x30] sm:$0xf]
  %v31 = vld [vmem:[%s0 + $0x34] sm:$0xf]
  %v32 = vld [vmem:[%s0 + $0x38] sm:$0xf]
  %v33 = vld [vmem:[%s0 + $0x3c] sm:$0xf]
  %v34 = vld [vmem:[%s1] sm:$0x3]
  %v51 = vunpack.c.l.b16 %v18
  %v52 = vunpack.c.l.b16 %v19
  %v53 = vunpack.c.l.b16 %v20
  %v54 = vunpack.c.l.b16 %v21
  %v55 = vunpack.c.l.b16 %v22
  %v56 = vunpack.c.l.b16 %v23
  %v57 = vunpack.c.l.b16 %v24
  %v58 = vunpack.c.l.b16 %v25
  %v59 = vunpack.c.l.b16 %v26
  %v60 = vunpack.c.l.b16 %v27
  %v61 = vunpack.c.l.b16 %v28
  %v62 = vunpack.c.l.b16 %v29
  %v63 = vunpack.c.l.b16 %v30
  %v64 = vunpack.c.l.b16 %v31
  %v65 = vunpack.c.l.b16 %v32
  %v66 = vunpack.c.l.b16 %v33
  %v67 = vpack.c.b16 %v52, %v51
  %v68 = vpack.c.b16 %v54, %v53
  %v69 = vpack.c.b16 %v56, %v55
  %v70 = vpack.c.b16 %v58, %v57
  %v71 = vpack.c.b16 %v60, %v59
  %v72 = vpack.c.b16 %v62, %v61
  %v73 = vpack.c.b16 %v64, %v63
  %v74 = vpack.c.b16 %v66, %v65
  %vm75 = vcmask 31744
  %v77 = vsel %vm75, %v67, 0
  %v80 = vsel %vm75, %v68, 0
  %v83 = vsel %vm75, %v69, 0
  %v86 = vsel %vm75, %v70, 0
  %v89 = vsel %vm75, %v71, 0
  %v92 = vsel %vm75, %v72, 0
  %v95 = vsel %vm75, %v73, 0
  %v98 = vsel %vm75, %v74, 0
  %vm100 = vcmask 1041408
  %v102 = vsel %vm100, %v34, 0
  %104 = vmatprep.subr.bf16.mxu0 0
  %105 = vmatpush1.bf16.msra.mxu0 %v102
  %106 = vmatprep.subr.bf16.mxu0 0
  %107 = vmatpush1.bf16.msra.mxu0 0
  %108 = vmatprep.subr.bf16.mxu0 0
  %109 = vmatpush1.bf16.msra.mxu0 0
  %110 = vmatprep.subr.bf16.mxu0 0
  %111 = vmatpush1.bf16.msra.mxu0 0
  %112 = vmatprep.subr.bf16.mxu0 0
  %113 = vmatpush1.bf16.msra.mxu0 0
  %114 = vmatprep.subr.bf16.mxu0 0
  %115 = vmatpush1.bf16.msra.mxu0 0
  %116 = vmatprep.subr.bf16.mxu0 0
  %117 = vmatpush1.bf16.msra.mxu0 0
  %118 = vmatprep.subr.bf16.mxu0 0
  %119 = vmatpush1.bf16.msra.mxu0 0
  %120 = vmatprep.subr.bf16.mxu0 0
  %121 = vmatpush1.bf16.msra.mxu0 0
  %122 = vmatprep.subr.bf16.mxu0 0
  %123 = vmatpush1.bf16.msra.mxu0 0
  %124 = vmatprep.subr.bf16.mxu0 0
  %125 = vmatpush1.bf16.msra.mxu0 0
  %126 = vmatprep.subr.bf16.mxu0 0
  %127 = vmatpush1.bf16.msra.mxu0 0
  %128 = vmatprep.subr.bf16.mxu0 0
  %129 = vmatpush1.bf16.msra.mxu0 0
  %130 = vmatprep.subr.bf16.mxu0 0
  %131 = vmatpush1.bf16.msra.mxu0 0
  %132 = vmatprep.subr.bf16.mxu0 0
  %133 = vmatpush1.bf16.msra.mxu0 0
  %134 = vmatprep.subr.bf16.mxu0 0
  %135 = vmatpush1.bf16.msra.mxu0 0
  %136 = vmatprep.mubr.bf16.mxu0 0
  %137 = vmatmul.mubr.bf16.gmra.mrb[0].mxu0 %v77
  %v138 = vpop.f32.mrb[0].mxu0
  %v139 = vadd.f32 0.0, %v138
  %v140 = vpop.f32.mrb[0].mxu0
  %v141 = vpop.f32.mrb[0].mxu0
  %v142 = vadd.f32 0.0, %v141
  %v143 = vpop.f32.mrb[0].mxu0
  %144 = vmatprep.mubr.bf16.mxu0 0
  %145 = vmatmul.mubr.bf16.gmra.mrb[0].mxu0 %v80
  %v146 = vpop.f32.mrb[0].mxu0
  %v147 = vadd.f32 0.0, %v146
  %v148 = vpop.f32.mrb[0].mxu0
  %v149 = vpop.f32.mrb[0].mxu0
  %v150 = vadd.f32 0.0, %v149
  %v151 = vpop.f32.mrb[0].mxu0
  %152 = vmatprep.mubr.bf16.mxu0 0
  %153 = vmatmul.mubr.bf16.gmra.mrb[0].mxu0 %v83
  %v154 = vpop.f32.mrb[0].mxu0
  %v155 = vadd.f32 0.0, %v154
  %v156 = vpop.f32.mrb[0].mxu0
  %v157 = vpop.f32.mrb[0].mxu0
  %v158 = vadd.f32 0.0, %v157
  %v159 = vpop.f32.mrb[0].mxu0
  %160 = vmatprep.mubr.bf16.mxu0 0
  %161 = vmatmul.mubr.bf16.gmra.mrb[0].mxu0 %v86
  %v162 = vpop.f32.mrb[0].mxu0
  %v163 = vadd.f32 0.0, %v162
  %v164 = vpop.f32.mrb[0].mxu0
  %v165 = vpop.f32.mrb[0].mxu0
  %v166 = vadd.f32 0.0, %v165
  %v167 = vpop.f32.mrb[0].mxu0
  %168 = vmatprep.mubr.bf16.mxu0 0
  %169 = vmatmul.mubr.bf16.gmra.mrb[0].mxu0 %v89
  %v170 = vpop.f32.mrb[0].mxu0
  %v171 = vadd.f32 0.0, %v170
  %v172 = vpop.f32.mrb[0].mxu0
  %v173 = vpop.f32.mrb[0].mxu0
  %v174 = vadd.f32 0.0, %v173
  %v175 = vpop.f32.mrb[0].mxu0
  %176 = vmatprep.mubr.bf16.mxu0 0
  %177 = vmatmul.mubr.bf16.gmra.mrb[0].mxu0 %v92
  %v178 = vpop.f32.mrb[0].mxu0
  %v179 = vadd.f32 0.0, %v178
  %v180 = vpop.f32.mrb[0].mxu0
  %v181 = vpop.f32.mrb[0].mxu0
  %v182 = vadd.f32 0.0, %v181
  %v183 = vpop.f32.mrb[0].mxu0
  %184 = vmatprep.mubr.bf16.mxu0 0
  %185 = vmatmul.mubr.bf16.gmra.mrb[0].mxu0 %v95
  %v186 = vpop.f32.mrb[0].mxu0
  %v187 = vadd.f32 0.0, %v186
  %v188 = vpop.f32.mrb[0].mxu0
  %v189 = vpop.f32.mrb[0].mxu0
  %v190 = vadd.f32 0.0, %v189
  %v191 = vpop.f32.mrb[0].mxu0
  %192 = vmatprep.mubr.bf16.mxu0 0
  %193 = vmatmul.mubr.bf16.gmra.mrb[0].mxu0 %v98
  %v194 = vpop.f32.mrb[0].mxu0
  %v195 = vadd.f32 0.0, %v194
  %v196 = vpop.f32.mrb[0].mxu0
  %v197 = vpop.f32.mrb[0].mxu0
  %v198 = vadd.f32 0.0, %v197
  %v199 = vpop.f32.mrb[0].mxu0
  %200 = vdwg.mxu0
  %v201 = vld [vmem:[%s2] sm:$0x1]
  %v203 = vlaneseq
  %v204 = vshrl.u32 %v203, 7
  %v205 = vsub.s32 0, %v204
  %v206 = vrot.slane %v201, %v205
  %v208 = vmul.f32 %v139, %v206
  %v209 = vmul.f32 %v142, %v206
  %v210 = vmul.f32 %v147, %v206
  %v211 = vmul.f32 %v150, %v206
  %v212 = vmul.f32 %v155, %v206
  %v213 = vmul.f32 %v158, %v206
  %v214 = vmul.f32 %v163, %v206
  %v215 = vmul.f32 %v166, %v206
  %v216 = vmul.f32 %v171, %v206
  %v217 = vmul.f32 %v174, %v206
  %v218 = vmul.f32 %v179, %v206
  %v219 = vmul.f32 %v182, %v206
  %v220 = vmul.f32 %v187, %v206
  %v221 = vmul.f32 %v190, %v206
  %v222 = vmul.f32 %v195, %v206
  %v223 = vmul.f32 %v198, %v206
  %v224 = vld [vmem:[%s3] sm:$0x1]
  %v226 = vlaneseq
  %v227 = vshrl.u32 %v226, 7
  %v228 = vsub.s32 0, %v227
  %v229 = vrot.slane %v224, %v228
  %v231 = vadd.f32 %v208, %v229
  %v232 = vadd.f32 %v209, %v229
  %v233 = vadd.f32 %v210, %v229
  %v234 = vadd.f32 %v211, %v229
  %v235 = vadd.f32 %v212, %v229
  %v236 = vadd.f32 %v213, %v229
  %v237 = vadd.f32 %v214, %v229
  %v238 = vadd.f32 %v215, %v229
  %v239 = vadd.f32 %v216, %v229
  %v240 = vadd.f32 %v217, %v229
  %v241 = vadd.f32 %v218, %v229
  %v242 = vadd.f32 %v219, %v229
  %v243 = vadd.f32 %v220, %v229
  %v244 = vadd.f32 %v221, %v229
  %v245 = vadd.f32 %v222, %v229
  %v246 = vadd.f32 %v223, %v229
  %v247 = vpack.c.bf16 %v232, %v231
  %v248 = vpack.c.bf16 %v234, %v233
  %v249 = vpack.c.bf16 %v236, %v235
  %v250 = vpack.c.bf16 %v238, %v237
  %v251 = vpack.c.bf16 %v240, %v239
  %v252 = vpack.c.bf16 %v242, %v241
  %v253 = vpack.c.bf16 %v244, %v243
  %v254 = vpack.c.bf16 %v246, %v245
  %v263 = vunpack.c.l.b16 %v247
  %v264 = vunpack.c.h.b16 %v247
  %v265 = vunpack.c.l.b16 %v248
  %v266 = vunpack.c.h.b16 %v248
  %v267 = vunpack.c.l.b16 %v249
  %v268 = vunpack.c.h.b16 %v249
  %v269 = vunpack.c.l.b16 %v250
  %v270 = vunpack.c.h.b16 %v250
  %v271 = vunpack.c.l.b16 %v251
  %v272 = vunpack.c.h.b16 %v251
  %v273 = vunpack.c.l.b16 %v252
  %v274 = vunpack.c.h.b16 %v252
  %v275 = vunpack.c.l.b16 %v253
  %v276 = vunpack.c.h.b16 %v253
  %v277 = vunpack.c.l.b16 %v254
  %v278 = vunpack.c.h.b16 %v254
  %v279 = vpack.c.b16 %v263, %v263
  %v280 = vpack.c.b16 %v264, %v264
  %v281 = vpack.c.b16 %v265, %v265
  %v282 = vpack.c.b16 %v266, %v266
  %v283 = vpack.c.b16 %v267, %v267
  %v284 = vpack.c.b16 %v268, %v268
  %v285 = vpack.c.b16 %v269, %v269
  %v286 = vpack.c.b16 %v270, %v270
  %v287 = vpack.c.b16 %v271, %v271
  %v288 = vpack.c.b16 %v272, %v272
  %v289 = vpack.c.b16 %v273, %v273
  %v290 = vpack.c.b16 %v274, %v274
  %v291 = vpack.c.b16 %v275, %v275
  %v292 = vpack.c.b16 %v276, %v276
  %v293 = vpack.c.b16 %v277, %v277
  %v294 = vpack.c.b16 %v278, %v278
  %vm311 = vcmask 125952
  %312 = vst.msk [vmem:[%s4] sm:$0xf] %vm311, %v279
  %313 = vst.msk [vmem:[%s4 + $0x4] sm:$0xf] %vm311, %v280
  %314 = vst.msk [vmem:[%s4 + $0x8] sm:$0xf] %vm311, %v281
  %315 = vst.msk [vmem:[%s4 + $0xc] sm:$0xf] %vm311, %v282
  %316 = vst.msk [vmem:[%s4 + $0x10] sm:$0xf] %vm311, %v283
  %317 = vst.msk [vmem:[%s4 + $0x14] sm:$0xf] %vm311, %v284
  %318 = vst.msk [vmem:[%s4 + $0x18] sm:$0xf] %vm311, %v285
  %319 = vst.msk [vmem:[%s4 + $0x1c] sm:$0xf] %vm311, %v286
  %320 = vst.msk [vmem:[%s4 + $0x20] sm:$0xf] %vm311, %v287
  %321 = vst.msk [vmem:[%s4 + $0x24] sm:$0xf] %vm311, %v288
  %322 = vst.msk [vmem:[%s4 + $0x28] sm:$0xf] %vm311, %v289
  %323 = vst.msk [vmem:[%s4 + $0x2c] sm:$0xf] %vm311, %v290
  %324 = vst.msk [vmem:[%s4 + $0x30] sm:$0xf] %vm311, %v291
  %325 = vst.msk [vmem:[%s4 + $0x34] sm:$0xf] %vm311, %v292
  %326 = vst.msk [vmem:[%s4 + $0x38] sm:$0xf] %vm311, %v293
  %327 = vst.msk [vmem:[%s4 + $0x3c] sm:$0xf] %vm311, %v294
  // Predicated region
  $region18: #{_lambda_.7} parent=0 // pred_check
    _
  $region19: #{_lambda_.7} parent=0 // pred_check_branch
    %329 = sbr.rel (0) target = $region21
  $region20: #{_lambda_.7} parent=0 // pred_region
    _
  $region21: #{_lambda_.7} parent=0 // pred_fallthru
    _
  // Predicated region
  $region22: #{_lambda_.7} parent=0 // pred_check
    _
  $region23: #{_lambda_.7} parent=0 // pred_check_branch
    %331 = sbr.rel (0) target = $region25
  $region24: #{_lambda_.7} parent=0 // pred_region
    _
  $region25: #{_lambda_.7} parent=0 // pred_fallthru
    _

// kernel: _lambda_.5
$region0: #{_lambda_.5}
  #allocation0 [shape = 'u32[]', space=smem, size = 0x4, offset = 0x4, fixed_abs, tag = 'smem constant byte address 0x4 - core index']
  #allocation1 [shape = 'u32[144,128]{1,0:T(1,128)}', space=vmem, size = 0x12000, scoped, tag = 'internal scratch']
  %s0 = inlined_call_operand.vmem [shape: bf16[128,16], index: 0, kind: input, shape index: {}]
  %s1 = inlined_call_operand.vmem [shape: bf16[16,4], index: 1, kind: input, shape index: {}]
  %s2 = inlined_call_operand.vmem [shape: f32[1,4], index: 2, kind: input, shape index: {}]
  %s3 = inlined_call_operand.vmem [shape: f32[1,4], index: 3, kind: input, shape index: {}]
  %s4 = inlined_call_operand.vmem [shape: bf16[128,4], index: 4, kind: output, shape index: {}]
  %s5 = sld [smem:[#allocation0]]
  $region26: #{_lambda_.5} parent=0
    _
  %s7 = ssub.s32 1, %s5
  %s8 = scalar_select 0, %s7, %s5
  // Predicated region
  $region2: #{_lambda_.5} parent=0 // pred_check
    _
  $region3: #{_lambda_.5} parent=0 // pred_check_branch
    %10 = sbr.rel (0) target = $region5
  $region4: #{_lambda_.5} parent=0 // pred_region
    _
  $region5: #{_lambda_.5} parent=0 // pred_fallthru
    _
  // Predicated region
  $region6: #{_lambda_.5} parent=0 // pred_check
    _
  $region7: #{_lambda_.5} parent=0 // pred_check_branch
    %12 = sbr.rel (0) target = $region9
  $region8: #{_lambda_.5} parent=0 // pred_region
    _
  $region9: #{_lambda_.5} parent=0 // pred_fallthru
    _
  // Predicated region
  $region10: #{_lambda_.5} parent=0 // pred_check
    _
  $region11: #{_lambda_.5} parent=0 // pred_check_branch
    %14 = sbr.rel (0) target = $region13
  $region12: #{_lambda_.5} parent=0 // pred_region
    _
  $region13: #{_lambda_.5} parent=0 // pred_fallthru
    _
  // Predicated region
  $region14: #{_lambda_.5} parent=0 // pred_check
    _
  $region15: #{_lambda_.5} parent=0 // pred_check_branch
    %16 = sbr.rel (0) target = $region17
  $region16: #{_lambda_.5} parent=0 // pred_region
    _
  $region17: #{_lambda_.5} parent=0 // pred_fallthru
    _
  %v18 = vld [vmem:[%s0] sm:$0xf]
  %v19 = vld [vmem:[%s0 + $0x4] sm:$0xf]
  %v20 = vld [vmem:[%s0 + $0x8] sm:$0xf]
  %v21 = vld [vmem:[%s0 + $0xc] sm:$0xf]
  %v22 = vld [vmem:[%s0 + $0x10] sm:$0xf]
  %v23 = vld [vmem:[%s0 + $0x14] sm:$0xf]
  %v24 = vld [vmem:[%s0 + $0x18] sm:$0xf]
  %v25 = vld [vmem:[%s0 + $0x1c] sm:$0xf]
  %v26 = vld [vmem:[%s0 + $0x20] sm:$0xf]
  %v27 = vld [vmem:[%s0 + $0x24] sm:$0xf]
  %v28 = vld [vmem:[%s0 + $0x28] sm:$0xf]
  %v29 = vld [vmem:[%s0 + $0x2c] sm:$0xf]
  %v30 = vld [vmem:[%s0 + $0x30] sm:$0xf]
  %v31 = vld [vmem:[%s0 + $0x34] sm:$0xf]
  %v32 = vld [vmem:[%s0 + $0x38] sm:$0xf]
  %v33 = vld [vmem:[%s0 + $0x3c] sm:$0xf]
  %v34 = vld [vmem:[%s1] sm:$0xf]
  %v35 = vld [vmem:[%s1 + $0x4] sm:$0xf]
  %v52 = vunpack.c.l.b16 %v18
  %v53 = vunpack.c.l.b16 %v19
  %v54 = vunpack.c.l.b16 %v20
  %v55 = vunpack.c.l.b16 %v21
  %v56 = vunpack.c.l.b16 %v22
  %v57 = vunpack.c.l.b16 %v23
  %v58 = vunpack.c.l.b16 %v24
  %v59 = vunpack.c.l.b16 %v25
  %v60 = vunpack.c.l.b16 %v26
  %v61 = vunpack.c.l.b16 %v27
  %v62 = vunpack.c.l.b16 %v28
  %v63 = vunpack.c.l.b16 %v29
  %v64 = vunpack.c.l.b16 %v30
  %v65 = vunpack.c.l.b16 %v31
  %v66 = vunpack.c.l.b16 %v32
  %v67 = vunpack.c.l.b16 %v33
  %v68 = vpack.c.b16 %v53, %v52
  %v69 = vpack.c.b16 %v55, %v54
  %v70 = vpack.c.b16 %v57, %v56
  %v71 = vpack.c.b16 %v59, %v58
  %v72 = vpack.c.b16 %v61, %v60
  %v73 = vpack.c.b16 %v63, %v62
  %v74 = vpack.c.b16 %v65, %v64
  %v75 = vpack.c.b16 %v67, %v66
  %v78 = vunpack.c.l.b16 %v34
  %v79 = vunpack.c.l.b16 %v35
  %v80 = vpack.c.b16 %v79, %v78
  %vm82 = vcmask 130048
  %v84 = vsel %vm82, %v68, 0
  %v87 = vsel %vm82, %v69, 0
  %v90 = vsel %vm82, %v70, 0
  %v93 = vsel %vm82, %v71, 0
  %v96 = vsel %vm82, %v72, 0
  %v99 = vsel %vm82, %v73, 0
  %v102 = vsel %vm82, %v74, 0
  %v105 = vsel %vm82, %v75, 0
  %107 = vmatprep.subr.bf16.mxu0 0
  %108 = vmatpush1.bf16.msra.mxu0 %v80
  %109 = vmatprep.subr.bf16.mxu0 0
  %110 = vmatpush1.bf16.msra.mxu0 0
  %111 = vmatprep.subr.bf16.mxu0 0
  %112 = vmatpush1.bf16.msra.mxu0 0
  %113 = vmatprep.subr.bf16.mxu0 0
  %114 = vmatpush1.bf16.msra.mxu0 0
  %115 = vmatprep.subr.bf16.mxu0 0
  %116 = vmatpush1.bf16.msra.mxu0 0
  %117 = vmatprep.subr.bf16.mxu0 0
  %118 = vmatpush1.bf16.msra.mxu0 0
  %119 = vmatprep.subr.bf16.mxu0 0
  %120 = vmatpush1.bf16.msra.mxu0 0
  %121 = vmatprep.subr.bf16.mxu0 0
  %122 = vmatpush1.bf16.msra.mxu0 0
  %123 = vmatprep.subr.bf16.mxu0 0
  %124 = vmatpush1.bf16.msra.mxu0 0
  %125 = vmatprep.subr.bf16.mxu0 0
  %126 = vmatpush1.bf16.msra.mxu0 0
  %127 = vmatprep.subr.bf16.mxu0 0
  %128 = vmatpush1.bf16.msra.mxu0 0
  %129 = vmatprep.subr.bf16.mxu0 0
  %130 = vmatpush1.bf16.msra.mxu0 0
  %131 = vmatprep.subr.bf16.mxu0 0
  %132 = vmatpush1.bf16.msra.mxu0 0
  %133 = vmatprep.subr.bf16.mxu0 0
  %134 = vmatpush1.bf16.msra.mxu0 0
  %135 = vmatprep.subr.bf16.mxu0 0
  %136 = vmatpush1.bf16.msra.mxu0 0
  %137 = vmatprep.subr.bf16.mxu0 0
  %138 = vmatpush1.bf16.msra.mxu0 0
  %139 = vmatprep.mubr.bf16.mxu0 0
  %140 = vmatmul.mubr.bf16.gmra.mrb[0].mxu0 %v84
  %v141 = vpop.f32.mrb[0].mxu0
  %v142 = vadd.f32 0.0, %v141
  %v143 = vpop.f32.mrb[0].mxu0
  %v144 = vpop.f32.mrb[0].mxu0
  %v145 = vadd.f32 0.0, %v144
  %v146 = vpop.f32.mrb[0].mxu0
  %147 = vmatprep.mubr.bf16.mxu0 0
  %148 = vmatmul.mubr.bf16.gmra.mrb[0].mxu0 %v87
  %v149 = vpop.f32.mrb[0].mxu0
  %v150 = vadd.f32 0.0, %v149
  %v151 = vpop.f32.mrb[0].mxu0
  %v152 = vpop.f32.mrb[0].mxu0
  %v153 = vadd.f32 0.0, %v152
  %v154 = vpop.f32.mrb[0].mxu0
  %155 = vmatprep.mubr.bf16.mxu0 0
  %156 = vmatmul.mubr.bf16.gmra.mrb[0].mxu0 %v90
  %v157 = vpop.f32.mrb[0].mxu0
  %v158 = vadd.f32 0.0, %v157
  %v159 = vpop.f32.mrb[0].mxu0
  %v160 = vpop.f32.mrb[0].mxu0
  %v161 = vadd.f32 0.0, %v160
  %v162 = vpop.f32.mrb[0].mxu0
  %163 = vmatprep.mubr.bf16.mxu0 0
  %164 = vmatmul.mubr.bf16.gmra.mrb[0].mxu0 %v93
  %v165 = vpop.f32.mrb[0].mxu0
  %v166 = vadd.f32 0.0, %v165
  %v167 = vpop.f32.mrb[0].mxu0
  %v168 = vpop.f32.mrb[0].mxu0
  %v169 = vadd.f32 0.0, %v168
  %v170 = vpop.f32.mrb[0].mxu0
  %171 = vmatprep.mubr.bf16.mxu0 0
  %172 = vmatmul.mubr.bf16.gmra.mrb[0].mxu0 %v96
  %v173 = vpop.f32.mrb[0].mxu0
  %v174 = vadd.f32 0.0, %v173
  %v175 = vpop.f32.mrb[0].mxu0
  %v176 = vpop.f32.mrb[0].mxu0
  %v177 = vadd.f32 0.0, %v176
  %v178 = vpop.f32.mrb[0].mxu0
  %179 = vmatprep.mubr.bf16.mxu0 0
  %180 = vmatmul.mubr.bf16.gmra.mrb[0].mxu0 %v99
  %v181 = vpop.f32.mrb[0].mxu0
  %v182 = vadd.f32 0.0, %v181
  %v183 = vpop.f32.mrb[0].mxu0
  %v184 = vpop.f32.mrb[0].mxu0
  %v185 = vadd.f32 0.0, %v184
  %v186 = vpop.f32.mrb[0].mxu0
  %187 = vmatprep.mubr.bf16.mxu0 0
  %188 = vmatmul.mubr.bf16.gmra.mrb[0].mxu0 %v102
  %v189 = vpop.f32.mrb[0].mxu0
  %v190 = vadd.f32 0.0, %v189
  %v191 = vpop.f32.mrb[0].mxu0
  %v192 = vpop.f32.mrb[0].mxu0
  %v193 = vadd.f32 0.0, %v192
  %v194 = vpop.f32.mrb[0].mxu0
  %195 = vmatprep.mubr.bf16.mxu0 0
  %196 = vmatmul.mubr.bf16.gmra.mrb[0].mxu0 %v105
  %v197 = vpop.f32.mrb[0].mxu0
  %v198 = vadd.f32 0.0, %v197
  %v199 = vpop.f32.mrb[0].mxu0
  %v200 = vpop.f32.mrb[0].mxu0
  %v201 = vadd.f32 0.0, %v200
  %v202 = vpop.f32.mrb[0].mxu0
  %203 = vdwg.mxu0
  %v204 = vld [vmem:[%s2] sm:$0x1]
  %v206 = vlaneseq
  %v207 = vshrl.u32 %v206, 7
  %v208 = vsub.s32 0, %v207
  %v209 = vrot.slane %v204, %v208
  %v211 = vmul.f32 %v142, %v209
  %v212 = vmul.f32 %v145, %v209
  %v213 = vmul.f32 %v150, %v209
  %v214 = vmul.f32 %v153, %v209
  %v215 = vmul.f32 %v158, %v209
  %v216 = vmul.f32 %v161, %v209
  %v217 = vmul.f32 %v166, %v209
  %v218 = vmul.f32 %v169, %v209
  %v219 = vmul.f32 %v174, %v209
  %v220 = vmul.f32 %v177, %v209
  %v221 = vmul.f32 %v182, %v209
  %v222 = vmul.f32 %v185, %v209
  %v223 = vmul.f32 %v190, %v209
  %v224 = vmul.f32 %v193, %v209
  %v225 = vmul.f32 %v198, %v209
  %v226 = vmul.f32 %v201, %v209
  %v227 = vld [vmem:[%s3] sm:$0x1]
  %v229 = vlaneseq
  %v230 = vshrl.u32 %v229, 7
  %v231 = vsub.s32 0, %v230
  %v232 = vrot.slane %v227, %v231
  %v234 = vadd.f32 %v211, %v232
  %v235 = vadd.f32 %v212, %v232
  %v236 = vadd.f32 %v213, %v232
  %v237 = vadd.f32 %v214, %v232
  %v238 = vadd.f32 %v215, %v232
  %v239 = vadd.f32 %v216, %v232
  %v240 = vadd.f32 %v217, %v232
  %v241 = vadd.f32 %v218, %v232
  %v242 = vadd.f32 %v219, %v232
  %v243 = vadd.f32 %v220, %v232
  %v244 = vadd.f32 %v221, %v232
  %v245 = vadd.f32 %v222, %v232
  %v246 = vadd.f32 %v223, %v232
  %v247 = vadd.f32 %v224, %v232
  %v248 = vadd.f32 %v225, %v232
  %v249 = vadd.f32 %v226, %v232
  %v250 = vmax.f32 %v234, 0.0
  %v251 = vmax.f32 %v235, 0.0
  %v252 = vmax.f32 %v236, 0.0
  %v253 = vmax.f32 %v237, 0.0
  %v254 = vmax.f32 %v238, 0.0
  %v255 = vmax.f32 %v239, 0.0
  %v256 = vmax.f32 %v240, 0.0
  %v257 = vmax.f32 %v241, 0.0
  %v258 = vmax.f32 %v242, 0.0
  %v259 = vmax.f32 %v243, 0.0
  %v260 = vmax.f32 %v244, 0.0
  %v261 = vmax.f32 %v245, 0.0
  %v262 = vmax.f32 %v246, 0.0
  %v263 = vmax.f32 %v247, 0.0
  %v264 = vmax.f32 %v248, 0.0
  %v265 = vmax.f32 %v249, 0.0
  %v266 = vpack.c.bf16 %v251, %v250
  %v267 = vpack.c.bf16 %v253, %v252
  %v268 = vpack.c.bf16 %v255, %v254
  %v269 = vpack.c.bf16 %v257, %v256
  %v270 = vpack.c.bf16 %v259, %v258
  %v271 = vpack.c.bf16 %v261, %v260
  %v272 = vpack.c.bf16 %v263, %v262
  %v273 = vpack.c.bf16 %v265, %v264
  %v282 = vunpack.c.l.b16 %v266
  %v283 = vunpack.c.h.b16 %v266
  %v284 = vunpack.c.l.b16 %v267
  %v285 = vunpack.c.h.b16 %v267
  %v286 = vunpack.c.l.b16 %v268
  %v287 = vunpack.c.h.b16 %v268
  %v288 = vunpack.c.l.b16 %v269
  %v289 = vunpack.c.h.b16 %v269
  %v290 = vunpack.c.l.b16 %v270
  %v291 = vunpack.c.h.b16 %v270
  %v292 = vunpack.c.l.b16 %v271
  %v293 = vunpack.c.h.b16 %v271
  %v294 = vunpack.c.l.b16 %v272
  %v295 = vunpack.c.h.b16 %v272
  %v296 = vunpack.c.l.b16 %v273
  %v297 = vunpack.c.h.b16 %v273
  %v298 = vpack.c.b16 %v282, %v282
  %v299 = vpack.c.b16 %v283, %v283
  %v300 = vpack.c.b16 %v284, %v284
  %v301 = vpack.c.b16 %v285, %v285
  %v302 = vpack.c.b16 %v286, %v286
  %v303 = vpack.c.b16 %v287, %v287
  %v304 = vpack.c.b16 %v288, %v288
  %v305 = vpack.c.b16 %v289, %v289
  %v306 = vpack.c.b16 %v290, %v290
  %v307 = vpack.c.b16 %v291, %v291
  %v308 = vpack.c.b16 %v292, %v292
  %v309 = vpack.c.b16 %v293, %v293
  %v310 = vpack.c.b16 %v294, %v294
  %v311 = vpack.c.b16 %v295, %v295
  %v312 = vpack.c.b16 %v296, %v296
  %v313 = vpack.c.b16 %v297, %v297
  %vm330 = vcmask 27648
  %331 = vst.msk [vmem:[%s4] sm:$0xf] %vm330, %v298
  %332 = vst.msk [vmem:[%s4 + $0x4] sm:$0xf] %vm330, %v299
  %333 = vst.msk [vmem:[%s4 + $0x8] sm:$0xf] %vm330, %v300
  %334 = vst.msk [vmem:[%s4 + $0xc] sm:$0xf] %vm330, %v301
  %335 = vst.msk [vmem:[%s4 + $0x10] sm:$0xf] %vm330, %v302
  %336 = vst.msk [vmem:[%s4 + $0x14] sm:$0xf] %vm330, %v303
  %337 = vst.msk [vmem:[%s4 + $0x18] sm:$0xf] %vm330, %v304
  %338 = vst.msk [vmem:[%s4 + $0x1c] sm:$0xf] %vm330, %v305
  %339 = vst.msk [vmem:[%s4 + $0x20] sm:$0xf] %vm330, %v306
  %340 = vst.msk [vmem:[%s4 + $0x24] sm:$0xf] %vm330, %v307
  %341 = vst.msk [vmem:[%s4 + $0x28] sm:$0xf] %vm330, %v308
  %342 = vst.msk [vmem:[%s4 + $0x2c] sm:$0xf] %vm330, %v309
  %343 = vst.msk [vmem:[%s4 + $0x30] sm:$0xf] %vm330, %v310
  %344 = vst.msk [vmem:[%s4 + $0x34] sm:$0xf] %vm330, %v311
  %345 = vst.msk [vmem:[%s4 + $0x38] sm:$0xf] %vm330, %v312
  %346 = vst.msk [vmem:[%s4 + $0x3c] sm:$0xf] %vm330, %v313
  // Predicated region
  $region18: #{_lambda_.5} parent=0 // pred_check
    _
  $region19: #{_lambda_.5} parent=0 // pred_check_branch
    %348 = sbr.rel (0) target = $region21
  $region20: #{_lambda_.5} parent=0 // pred_region
    _
  $region21: #{_lambda_.5} parent=0 // pred_fallthru
    _
  // Predicated region
  $region22: #{_lambda_.5} parent=0 // pred_check
    _
  $region23: #{_lambda_.5} parent=0 // pred_check_branch
    %350 = sbr.rel (0) target = $region25
  $region24: #{_lambda_.5} parent=0 // pred_region
    _
  $region25: #{_lambda_.5} parent=0 // pred_fallthru
    _

// kernel: _lambda_.8
$region0: #{_lambda_.8}
  #allocation0 [shape = 'u32[]', space=smem, size = 0x4, offset = 0x4, fixed_abs, tag = 'smem constant byte address 0x4 - core index']
  #allocation1 [shape = 'u32[144,128]{1,0:T(1,128)}', space=vmem, size = 0x12000, scoped, tag = 'internal scratch']
  %s0 = inlined_call_operand.vmem [shape: bf16[2,8,8,16], index: 0, kind: input, shape index: {}]
  %s1 = inlined_call_operand.vmem [shape: f32[16,8], index: 1, kind: input, shape index: {}]
  %s2 = inlined_call_operand.vmem [shape: f32[1,8], index: 2, kind: input, shape index: {}]
  %s3 = inlined_call_operand.vmem [shape: f32[1,8], index: 3, kind: input, shape index: {}]
  %s4 = inlined_call_operand.vmem [shape: f32[8,16], index: 4, kind: input, shape index: {}]
  %s5 = inlined_call_operand.vmem [shape: f32[1,16], index: 5, kind: input, shape index: {}]
  %s6 = inlined_call_operand.vmem [shape: f32[8,16], index: 6, kind: input, shape index: {}]
  %s7 = inlined_call_operand.vmem [shape: f32[1,16], index: 7, kind: input, shape index: {}]
  %s8 = inlined_call_operand.vmem [shape: f32[2,8,16], index: 8, kind: output, shape index: {0}]
  %s9 = inlined_call_operand.vmem [shape: f32[2,8,16], index: 9, kind: output, shape index: {1}]
  %10 = xla_tuple %s8, %s9
  %s11 = sld [smem:[#allocation0]]
  $region73: #{_lambda_.8} parent=0
    _
  %s13 = ssub.s32 1, %s11
  %s14 = scalar_select 0, %s13, %s11
  loop: start=0, step=1, limit=4
  $region2: #{_lambda_.8} parent=0 // loop_pre_header
    _
  $region3: #{_lambda_.8} parent=0 // loop_header
    %s16 = sphi 0, %s20
    %p17 = scmp.ge.s32.totalorder %s16, 4
    %s26 = sphi 0, %s28
    %s29 = sphi 0, %s26
    %s30 = sphi 0, %s29
    %s46 = sphi 0, %s30
    %s50 = sphi 0, %s50
    %s52 = sphi 0, %s50
    %s53 = sphi 0, %s52
    %s67 = sphi 0, %s53
    %s71 = sphi 0, %s71
    %s73 = sphi 0, %s71
    %s74 = sphi 0, %s73
    %s88 = sphi 0, %s74
    %s92 = sphi 0, %s92
    %s94 = sphi 0, %s92
    %s95 = sphi 0, %s94
    %s109 = sphi 0, %s95
    %s113 = sphi 0, %s113
    %s115 = sphi 0, %s113
    %s116 = sphi 0, %s115
    %s130 = sphi 0, %s116
    %s134 = sphi 0, %s134
    %s136 = sphi 0, %s134
    %s137 = sphi 0, %s136
    %s151 = sphi 0, %s137
    %s155 = sphi 0, %s155
    %s157 = sphi 0, %s155
    %s158 = sphi 0, %s157
    %s172 = sphi 0, %s158
    %s176 = sphi 0, %s176
    %s178 = sphi 0, %s176
    %s179 = sphi 0, %s178
    %s193 = sphi 0, %s179
    %s199 = sphi 0, %s201
    %s202 = sphi 0, %s199
    %s203 = sphi 0, %s202
    %s219 = sphi 0, %s203
    %s225 = sphi 0, %s227
    %s228 = sphi 0, %s225
    %s229 = sphi 0, %s228
    %s245 = sphi 0, %s229
  $region4: #{_lambda_.8} parent=0 // loop_header_branch
    %19 = sbr.rel (%p17) target = $region8
  $region5: #{_lambda_.8} parent=0 // loop_body
    %s21 = ssub.s32 %s16, 1
    %s22 = ssub.s32 %s16, 2
    %s23 = sadd.s32 %s16, 1
    %s24 = ssub.s32 %s16, %s23
    %p25 = scmp.eq.s32.totalorder %s24, 0
    %s27 = sadd.s32 %s26, 1
    %s28 = scalar_select %p25, %s26, %s27
    %p31 = pneg %p25
    %p32 = scmp.eq.s32.totalorder %s16, 1
    %p33 = por %p31, %p32
    %p34 = scmp.ne.s32.totalorder %s26, %s29
    %p35 = scmp.eq.s32.totalorder %s16, 0
    %p36 = por %p34, %p35
    %p37 = scmp.ne.s32.totalorder %s26, %s29
    %p38 = scmp.eq.s32.totalorder %s21, 1
    %p39 = por %p37, %p38
    %p40 = scmp.ne.s32.totalorder %s29, %s30
    %p41 = scmp.eq.s32.totalorder %s21, 0
    %p42 = por %p40, %p41
    %p43 = scmp.ne.s32.totalorder %s29, %s30
    %p44 = scmp.eq.s32.totalorder %s22, 1
    %p45 = por %p43, %p44
    %p47 = scmp.ne.s32.totalorder %s30, %s46
    %p48 = scmp.eq.s32.totalorder %s22, 0
    %p49 = por %p47, %p48
    %s51 = sadd.s32 %s50, 1
    %p54 = scmp.eq.s32.totalorder %s16, 1
    %p55 = scmp.ne.s32.totalorder %s50, %s52
    %p56 = scmp.eq.s32.totalorder %s16, 0
    %p57 = por %p55, %p56
    %p58 = scmp.ne.s32.totalorder %s50, %s52
    %p59 = scmp.eq.s32.totalorder %s21, 1
    %p60 = por %p58, %p59
    %p61 = scmp.ne.s32.totalorder %s52, %s53
    %p62 = scmp.eq.s32.totalorder %s21, 0
    %p63 = por %p61, %p62
    %p64 = scmp.ne.s32.totalorder %s52, %s53
    %p65 = scmp.eq.s32.totalorder %s22, 1
    %p66 = por %p64, %p65
    %p68 = scmp.ne.s32.totalorder %s53, %s67
    %p69 = scmp.eq.s32.totalorder %s22, 0
    %p70 = por %p68, %p69
    %s72 = sadd.s32 %s71, 1
    %p75 = scmp.eq.s32.totalorder %s16, 1
    %p76 = scmp.ne.s32.totalorder %s71, %s73
    %p77 = scmp.eq.s32.totalorder %s16, 0
    %p78 = por %p76, %p77
    %p79 = scmp.ne.s32.totalorder %s71, %s73
    %p80 = scmp.eq.s32.totalorder %s21, 1
    %p81 = por %p79, %p80
    %p82 = scmp.ne.s32.totalorder %s73, %s74
    %p83 = scmp.eq.s32.totalorder %s21, 0
    %p84 = por %p82, %p83
    %p85 = scmp.ne.s32.totalorder %s73, %s74
    %p86 = scmp.eq.s32.totalorder %s22, 1
    %p87 = por %p85, %p86
    %p89 = scmp.ne.s32.totalorder %s74, %s88
    %p90 = scmp.eq.s32.totalorder %s22, 0
    %p91 = por %p89, %p90
    %s93 = sadd.s32 %s92, 1
    %p96 = scmp.eq.s32.totalorder %s16, 1
    %p97 = scmp.ne.s32.totalorder %s92, %s94
    %p98 = scmp.eq.s32.totalorder %s16, 0
    %p99 = por %p97, %p98
    %p100 = scmp.ne.s32.totalorder %s92, %s94
    %p101 = scmp.eq.s32.totalorder %s21, 1
    %p102 = por %p100, %p101
    %p103 = scmp.ne.s32.totalorder %s94, %s95
    %p104 = scmp.eq.s32.totalorder %s21, 0
    %p105 = por %p103, %p104
    %p106 = scmp.ne.s32.totalorder %s94, %s95
    %p107 = scmp.eq.s32.totalorder %s22, 1
    %p108 = por %p106, %p107
    %p110 = scmp.ne.s32.totalorder %s95, %s109
    %p111 = scmp.eq.s32.totalorder %s22, 0
    %p112 = por %p110, %p111
    %s114 = sadd.s32 %s113, 1
    %p117 = scmp.eq.s32.totalorder %s16, 1
    %p118 = scmp.ne.s32.totalorder %s113, %s115
    %p119 = scmp.eq.s32.totalorder %s16, 0
    %p120 = por %p118, %p119
    %p121 = scmp.ne.s32.totalorder %s113, %s115
    %p122 = scmp.eq.s32.totalorder %s21, 1
    %p123 = por %p121, %p122
    %p124 = scmp.ne.s32.totalorder %s115, %s116
    %p125 = scmp.eq.s32.totalorder %s21, 0
    %p126 = por %p124, %p125
    %p127 = scmp.ne.s32.totalorder %s115, %s116
    %p128 = scmp.eq.s32.totalorder %s22, 1
    %p129 = por %p127, %p128
    %p131 = scmp.ne.s32.totalorder %s116, %s130
    %p132 = scmp.eq.s32.totalorder %s22, 0
    %p133 = por %p131, %p132
    %s135 = sadd.s32 %s134, 1
    %p138 = scmp.eq.s32.totalorder %s16, 1
    %p139 = scmp.ne.s32.totalorder %s134, %s136
    %p140 = scmp.eq.s32.totalorder %s16, 0
    %p141 = por %p139, %p140
    %p142 = scmp.ne.s32.totalorder %s134, %s136
    %p143 = scmp.eq.s32.totalorder %s21, 1
    %p144 = por %p142, %p143
    %p145 = scmp.ne.s32.totalorder %s136, %s137
    %p146 = scmp.eq.s32.totalorder %s21, 0
    %p147 = por %p145, %p146
    %p148 = scmp.ne.s32.totalorder %s136, %s137
    %p149 = scmp.eq.s32.totalorder %s22, 1
    %p150 = por %p148, %p149
    %p152 = scmp.ne.s32.totalorder %s137, %s151
    %p153 = scmp.eq.s32.totalorder %s22, 0
    %p154 = por %p152, %p153
    %s156 = sadd.s32 %s155, 1
    %p159 = scmp.eq.s32.totalorder %s16, 1
    %p160 = scmp.ne.s32.totalorder %s155, %s157
    %p161 = scmp.eq.s32.totalorder %s16, 0
    %p162 = por %p160, %p161
    %p163 = scmp.ne.s32.totalorder %s155, %s157
    %p164 = scmp.eq.s32.totalorder %s21, 1
    %p165 = por %p163, %p164
    %p166 = scmp.ne.s32.totalorder %s157, %s158
    %p167 = scmp.eq.s32.totalorder %s21, 0
    %p168 = por %p166, %p167
    %p169 = scmp.ne.s32.totalorder %s157, %s158
    %p170 = scmp.eq.s32.totalorder %s22, 1
    %p171 = por %p169, %p170
    %p173 = scmp.ne.s32.totalorder %s158, %s172
    %p174 = scmp.eq.s32.totalorder %s22, 0
    %p175 = por %p173, %p174
    %s177 = sadd.s32 %s176, 1
    %p180 = scmp.eq.s32.totalorder %s16, 1
    %p181 = scmp.ne.s32.totalorder %s176, %s178
    %p182 = scmp.eq.s32.totalorder %s16, 0
    %p183 = por %p181, %p182
    %p184 = scmp.ne.s32.totalorder %s176, %s178
    %p185 = scmp.eq.s32.totalorder %s21, 1
    %p186 = por %p184, %p185
    %p187 = scmp.ne.s32.totalorder %s178, %s179
    %p188 = scmp.eq.s32.totalorder %s21, 0
    %p189 = por %p187, %p188
    %p190 = scmp.ne.s32.totalorder %s178, %s179
    %p191 = scmp.eq.s32.totalorder %s22, 1
    %p192 = por %p190, %p191
    %p194 = scmp.ne.s32.totalorder %s179, %s193
    %p195 = scmp.eq.s32.totalorder %s22, 0
    %p196 = por %p194, %p195
    %s197 = ssub.s32 %s16, %s23
    %p198 = scmp.eq.s32.totalorder %s197, 0
    %s200 = sadd.s32 %s199, 1
    %s201 = scalar_select %p198, %s199, %s200
    %p204 = pneg %p198
    %p205 = scmp.eq.s32.totalorder %s16, 1
    %p206 = por %p204, %p205
    %p207 = scmp.ne.s32.totalorder %s199, %s202
    %p208 = scmp.eq.s32.totalorder %s16, 0
    %p209 = por %p207, %p208
    %p210 = scmp.ne.s32.totalorder %s199, %s202
    %p211 = scmp.eq.s32.totalorder %s21, 1
    %p212 = por %p210, %p211
    %p213 = scmp.ne.s32.totalorder %s202, %s203
    %p214 = scmp.eq.s32.totalorder %s21, 0
    %p215 = por %p213, %p214
    %p216 = scmp.ne.s32.totalorder %s202, %s203
    %p217 = scmp.eq.s32.totalorder %s22, 1
    %p218 = por %p216, %p217
    %p220 = scmp.ne.s32.totalorder %s203, %s219
    %p221 = scmp.eq.s32.totalorder %s22, 0
    %p222 = por %p220, %p221
    %s223 = ssub.s32 %s16, %s23
    %p224 = scmp.eq.s32.totalorder %s223, 0
    %s226 = sadd.s32 %s225, 1
    %s227 = scalar_select %p224, %s225, %s226
    %p230 = pneg %p224
    %p231 = scmp.eq.s32.totalorder %s16, 1
    %p232 = por %p230, %p231
    %p233 = scmp.ne.s32.totalorder %s225, %s228
    %p234 = scmp.eq.s32.totalorder %s16, 0
    %p235 = por %p233, %p234
    %p236 = scmp.ne.s32.totalorder %s225, %s228
    %p237 = scmp.eq.s32.totalorder %s21, 1
    %p238 = por %p236, %p237
    %p239 = scmp.ne.s32.totalorder %s228, %s229
    %p240 = scmp.eq.s32.totalorder %s21, 0
    %p241 = por %p239, %p240
    %p242 = scmp.ne.s32.totalorder %s228, %s229
    %p243 = scmp.eq.s32.totalorder %s22, 1
    %p244 = por %p242, %p243
    %p246 = scmp.ne.s32.totalorder %s229, %s245
    %p247 = scmp.eq.s32.totalorder %s22, 0
    %p248 = por %p246, %p247
    %p249 = scmp.le.s32.totalorder 1, %s16
    %p250 = scmp.lt.s32.totalorder %s16, 3
    %p251 = pnand %p249, %p250
    %p252 = pneg %p251
    // Predicated region
    $region9: #{_lambda_.8} parent=5 // pred_check
      _
    $region10: #{_lambda_.8} parent=5 // pred_check_branch
      %254 = sbr.rel (%p251) target = $region12
    $region11: #{_lambda_.8} parent=5 // pred_region
      %s255 = ssub.s32 %s16, 1
      // Predicated region
      $region13: #{_lambda_.8} parent=11 // pred_check
        %p256 = pneg %p63
      $region14: #{_lambda_.8} parent=11 // pred_check_branch
        %258 = sbr.rel (%p256) target = $region16
      $region15: #{_lambda_.8} parent=11 // pred_region
        _
      $region16: #{_lambda_.8} parent=11 // pred_fallthru
        _
      // Predicated region
      $region17: #{_lambda_.8} parent=11 // pred_check
        %p259 = pneg %p84
      $region18: #{_lambda_.8} parent=11 // pred_check_branch
        %261 = sbr.rel (%p259) target = $region20
      $region19: #{_lambda_.8} parent=11 // pred_region
        _
      $region20: #{_lambda_.8} parent=11 // pred_fallthru
        _
      // Predicated region
      $region21: #{_lambda_.8} parent=11 // pred_check
        %p262 = pneg %p105
      $region22: #{_lambda_.8} parent=11 // pred_check_branch
        %264 = sbr.rel (%p262) target = $region24
      $region23: #{_lambda_.8} parent=11 // pred_region
        _
      $region24: #{_lambda_.8} parent=11 // pred_fallthru
        _
      // Predicated region
      $region25: #{_lambda_.8} parent=11 // pred_check
        %p265 = pneg %p126
      $region26: #{_lambda_.8} parent=11 // pred_check_branch
        %267 = sbr.rel (%p265) target = $region28
      $region27: #{_lambda_.8} parent=11 // pred_region
        _
      $region28: #{_lambda_.8} parent=11 // pred_fallthru
        _
      // Predicated region
      $region29: #{_lambda_.8} parent=11 // pred_check
        %p268 = pneg %p147
      $region30: #{_lambda_.8} parent=11 // pred_check_branch
        %270 = sbr.rel (%p268) target = $region32
      $region31: #{_lambda_.8} parent=11 // pred_region
        _
      $region32: #{_lambda_.8} parent=11 // pred_fallthru
        _
      // Predicated region
      $region33: #{_lambda_.8} parent=11 // pred_check
        %p271 = pneg %p168
      $region34: #{_lambda_.8} parent=11 // pred_check_branch
        %273 = sbr.rel (%p271) target = $region36
      $region35: #{_lambda_.8} parent=11 // pred_region
        _
      $region36: #{_lambda_.8} parent=11 // pred_fallthru
        _
      // Predicated region
      $region37: #{_lambda_.8} parent=11 // pred_check
        %p274 = pneg %p189
      $region38: #{_lambda_.8} parent=11 // pred_check_branch
        %276 = sbr.rel (%p274) target = $region40
      $region39: #{_lambda_.8} parent=11 // pred_region
        _
      $region40: #{_lambda_.8} parent=11 // pred_fallthru
        _
    $region12: #{_lambda_.8} parent=5 // pred_fallthru
      _
    %p277 = scmp.lt.s32.totalorder %s16, 2
    // Predicated region
    $region41: #{_lambda_.8} parent=5 // pred_check
      %p278 = pneg %p277
    $region42: #{_lambda_.8} parent=5 // pred_check_branch
      %280 = sbr.rel (%p278) target = $region44
    $region43: #{_lambda_.8} parent=5 // pred_region
      // Predicated region
      $region45: #{_lambda_.8} parent=43 // pred_check
        %p281 = pneg %p36
      $region46: #{_lambda_.8} parent=43 // pred_check_branch
        %283 = sbr.rel (%p281) target = $region48
      $region47: #{_lambda_.8} parent=43 // pred_region
        %p284 = scmp.lt.s32.totalorder %s16, 1
        %s285 = scalar_select %p284, %s16, 1
        %s286 = smul.addr %s285, 8
        %s287 = smul.addr %s286, 4
        %s288 = scalar_lea.vmem %s0, %s287
      $region48: #{_lambda_.8} parent=43 // pred_fallthru
        _
    $region44: #{_lambda_.8} parent=5 // pred_fallthru
      _
    %p289 = scmp.le.s32.totalorder 1, %s16
    %p290 = scmp.lt.s32.totalorder %s16, 3
    %p291 = pnand %p289, %p290
    %p292 = pneg %p291
    // Predicated region
    $region49: #{_lambda_.8} parent=5 // pred_check
      _
    $region50: #{_lambda_.8} parent=5 // pred_check_branch
      %294 = sbr.rel (%p291) target = $region52
    $region51: #{_lambda_.8} parent=5 // pred_region
      %s295 = ssub.s32 %s16, 1
      %p296 = scmp.lt.s32.totalorder %s21, 1
      %s297 = scalar_select %p296, %s21, 1
      %s298 = smul.addr %s297, 8
      %s299 = smul.addr %s298, 4
      %s300 = scalar_lea.vmem %s0, %s299
      %p301 = pneg %p42
      %p302 = pneg %p39
      %p303 = pneg %p63
      %p304 = pneg %p60
      %p305 = pneg %p84
      %p306 = pneg %p81
      %p307 = pneg %p105
      %p308 = pneg %p102
      %p309 = pneg %p126
      %p310 = pneg %p123
      %p311 = pneg %p147
      %p312 = pneg %p144
      %p313 = pneg %p168
      %p314 = pneg %p165
      %p315 = pneg %p189
      %p316 = pneg %p186
      %p317 = pneg %p215
      %p318 = pneg %p212
      %p319 = scmp.lt.s32.totalorder %s21, 1
      %s320 = scalar_select %p319, %s21, 1
      %s321 = smul.addr %s320, 8
      %s322 = scalar_lea.vmem %s8, %s321
      %p323 = pneg %p241
      %p324 = pneg %p238
      %p325 = scmp.lt.s32.totalorder %s21, 1
      %s326 = scalar_select %p325, %s21, 1
      %s327 = smul.addr %s326, 8
      %s328 = scalar_lea.vmem %s9, %s327
      %p329 = scmp.lt.s32.totalorder %s21, 1
      %s330 = scalar_select %p329, %s21, 1
      %s331 = smul.addr %s330, 8
      %s332 = smul.addr %s331, 4
      %s333 = scalar_lea.vmem %s0, %s332
      %p334 = scmp.lt.s32.totalorder %s21, 1
      %s335 = scalar_select %p334, %s21, 1
      %s336 = smul.addr %s335, 8
      %s337 = scalar_lea.vmem %s8, %s336
      %p338 = scmp.lt.s32.totalorder %s21, 1
      %s339 = scalar_select %p338, %s21, 1
      %s340 = smul.addr %s339, 8
      %s341 = scalar_lea.vmem %s9, %s340
      %v342 = vld [vmem:[%s333] sm:$0xf]
      %v343 = vld [vmem:[%s333 + $0x4] sm:$0xf]
      %v344 = vld [vmem:[%s333 + $0x8] sm:$0xf]
      %v345 = vld [vmem:[%s333 + $0xc] sm:$0xf]
      %v346 = vld [vmem:[%s333 + $0x10] sm:$0xf]
      %v347 = vld [vmem:[%s333 + $0x14] sm:$0xf]
      %v348 = vld [vmem:[%s333 + $0x18] sm:$0xf]
      %v349 = vld [vmem:[%s333 + $0x1c] sm:$0xf]
      %v350 = vunpack.c.l.bf16 %v342
      %v351 = vunpack.c.l.bf16 %v343
      %v352 = vunpack.c.l.bf16 %v344
      %v353 = vunpack.c.l.bf16 %v345
      %v354 = vunpack.c.l.bf16 %v346
      %v355 = vunpack.c.l.bf16 %v347
      %v356 = vunpack.c.l.bf16 %v348
      %v357 = vunpack.c.l.bf16 %v349
      %vm358 = vcmask 130048
      %v359 = vsel %vm358, %v350, 0.0
      %v360 = vrot.slane %v359, 4
      %v361 = vadd.f32 %v359, %v360
      %v362 = vrot.slane %v361, 2
      %v363 = vadd.f32 %v361, %v362
      %v364 = vrot.slane %v363, 1
      %v365 = vadd.f32 %v363, %v364
      %v366 = vsel %vm358, %v351, 0.0
      %v367 = vrot.slane %v366, 4
      %v368 = vadd.f32 %v366, %v367
      %v369 = vrot.slane %v368, 2
      %v370 = vadd.f32 %v368, %v369
      %v371 = vrot.slane %v370, 1
      %v372 = vadd.f32 %v370, %v371
      %v373 = vsel %vm358, %v352, 0.0
      %v374 = vrot.slane %v373, 4
      %v375 = vadd.f32 %v373, %v374
      %v376 = vrot.slane %v375, 2
      %v377 = vadd.f32 %v375, %v376
      %v378 = vrot.slane %v377, 1
      %v379 = vadd.f32 %v377, %v378
      %v380 = vsel %vm358, %v353, 0.0
      %v381 = vrot.slane %v380, 4
      %v382 = vadd.f32 %v380, %v381
      %v383 = vrot.slane %v382, 2
      %v384 = vadd.f32 %v382, %v383
      %v385 = vrot.slane %v384, 1
      %v386 = vadd.f32 %v384, %v385
      %v387 = vsel %vm358, %v354, 0.0
      %v388 = vrot.slane %v387, 4
      %v389 = vadd.f32 %v387, %v388
      %v390 = vrot.slane %v389, 2
      %v391 = vadd.f32 %v389, %v390
      %v392 = vrot.slane %v391, 1
      %v393 = vadd.f32 %v391, %v392
      %v394 = vsel %vm358, %v355, 0.0
      %v395 = vrot.slane %v394, 4
      %v396 = vadd.f32 %v394, %v395
      %v397 = vrot.slane %v396, 2
      %v398 = vadd.f32 %v396, %v397
      %v399 = vrot.slane %v398, 1
      %v400 = vadd.f32 %v398, %v399
      %v401 = vsel %vm358, %v356, 0.0
      %v402 = vrot.slane %v401, 4
      %v403 = vadd.f32 %v401, %v402
      %v404 = vrot.slane %v403, 2
      %v405 = vadd.f32 %v403, %v404
      %v406 = vrot.slane %v405, 1
      %v407 = vadd.f32 %v405, %v406
      %v408 = vsel %vm358, %v357, 0.0
      %v409 = vrot.slane %v408, 4
      %v410 = vadd.f32 %v408, %v409
      %v411 = vrot.slane %v410, 2
      %v412 = vadd.f32 %v410, %v411
      %v413 = vrot.slane %v412, 1
      %v414 = vadd.f32 %v412, %v413
      %v415 = vrcp.pop 8.0
      %v416 = vmul.f32 %v365, %v415
      %v417 = vmul.f32 %v372, %v415
      %v418 = vmul.f32 %v379, %v415
      %v419 = vmul.f32 %v386, %v415
      %v420 = vmul.f32 %v393, %v415
      %v421 = vmul.f32 %v400, %v415
      %v422 = vmul.f32 %v407, %v415
      %v423 = vmul.f32 %v414, %v415
      %v424 = vadd.f32 %v359, %v366
      %v425 = vadd.f32 %v424, %v373
      %v426 = vadd.f32 %v425, %v380
      %v427 = vadd.f32 %v426, %v387
      %v428 = vadd.f32 %v427, %v394
      %v429 = vadd.f32 %v428, %v401
      %v430 = vadd.f32 %v429, %v408
      %v431 = vmul.f32 %v430, %v415
      %vm440 = vcmask 1041409
      %v441 = vsel %vm440, %v417, %v416
      %vm442 = vcmask 1042434
      %v443 = vsel %vm442, %v418, %v441
      %vm444 = vcmask 1043459
      %v445 = vsel %vm444, %v419, %v443
      %vm446 = vcmask 1044484
      %v447 = vsel %vm446, %v420, %v445
      %vm448 = vcmask 1045509
      %v449 = vsel %vm448, %v421, %v447
      %vm450 = vcmask 1046534
      %v451 = vsel %vm450, %v422, %v449
      %vm452 = vcmask 1047559
      %v453 = vsel %vm452, %v423, %v451
      %v454 = vld [vmem:[%s1] sm:$0xff]
      %v455 = vld [vmem:[%s1 + $0x8] sm:$0xff]
      %v456 = vsel %vm358, %v453, 0
      %v459 = vsel %vm358, %v431, 0
      %461 = vmatprep.subr.mxu0 0.0
      %462 = vmatpush1.msra.mxu0 %v454
      %463 = vmatprep.subr.mxu0 0.0
      %464 = vmatpush1.msra.mxu0 %v455
      %465 = vmatprep.subr.mxu0 0.0
      %466 = vmatpush1.msra.mxu0 0.0
      %467 = vmatprep.subr.mxu0 0.0
      %468 = vmatpush1.msra.mxu0 0.0
      %469 = vmatprep.subr.mxu0 0.0
      %470 = vmatpush1.msra.mxu0 0.0
      %471 = vmatprep.subr.mxu0 0.0
      %472 = vmatpush1.msra.mxu0 0.0
      %473 = vmatprep.subr.mxu0 0.0
      %474 = vmatpush1.msra.mxu0 0.0
      %475 = vmatprep.subr.mxu0 0.0
      %476 = vmatpush1.msra.mxu0 0.0
      %477 = vmatprep.subr.mxu0 0.0
      %478 = vmatpush1.msra.mxu0 0.0
      %479 = vmatprep.subr.mxu0 0.0
      %480 = vmatpush1.msra.mxu0 0.0
      %481 = vmatprep.subr.mxu0 0.0
      %482 = vmatpush1.msra.mxu0 0.0
      %483 = vmatprep.subr.mxu0 0.0
      %484 = vmatpush1.msra.mxu0 0.0
      %485 = vmatprep.subr.mxu0 0.0
      %486 = vmatpush1.msra.mxu0 0.0
      %487 = vmatprep.subr.mxu0 0.0
      %488 = vmatpush1.msra.mxu0 0.0
      %489 = vmatprep.subr.mxu0 0.0
      %490 = vmatpush1.msra.mxu0 0.0
      %491 = vmatprep.subr.mxu0 0.0
      %492 = vmatpush1.msra.mxu0 0.0
      %493 = vmatprep.subr.mxu0 0.0
      %494 = vmatpush1.msra.mxu0 0.0
      %495 = vmatprep.subr.mxu0 0.0
      %496 = vmatpush1.msra.mxu0 0.0
      %497 = vmatprep.subr.mxu0 0.0
      %498 = vmatpush1.msra.mxu0 0.0
      %499 = vmatprep.subr.mxu0 0.0
      %500 = vmatpush1.msra.mxu0 0.0
      %501 = vmatprep.subr.mxu0 0.0
      %502 = vmatpush1.msra.mxu0 0.0
      %503 = vmatprep.subr.mxu0 0.0
      %504 = vmatpush1.msra.mxu0 0.0
      %505 = vmatprep.subr.mxu0 0.0
      %506 = vmatpush1.msra.mxu0 0.0
      %507 = vmatprep.subr.mxu0 0.0
      %508 = vmatpush1.msra.mxu0 0.0
      %509 = vmatprep.subr.mxu0 0.0
      %510 = vmatpush1.msra.mxu0 0.0
      %511 = vmatprep.subr.mxu0 0.0
      %512 = vmatpush1.msra.mxu0 0.0
      %513 = vmatprep.subr.mxu0 0.0
      %514 = vmatpush1.msra.mxu0 0.0
      %515 = vmatprep.subr.mxu0 0.0
      %516 = vmatpush1.msra.mxu0 0.0
      %517 = vmatprep.subr.mxu0 0.0
      %518 = vmatpush1.msra.mxu0 0.0
      %519 = vmatprep.subr.mxu0 0.0
      %520 = vmatpush1.msra.mxu0 0.0
      %521 = vmatprep.subr.mxu0 0.0
      %522 = vmatpush1.msra.mxu0 0.0
      %523 = vmatprep.subr.mxu0 0.0
      %524 = vmatpush1.msra.mxu0 0.0
      %525 = vmatprep.mubr.f32.mxu0 0.0
      %526 = vmatmul.mubr.f32.gmra.mrb[0].mxu0 %v456
      %v527 = vpop.f32.mrb[0].mxu0
      %v528 = vadd.f32 0.0, %v527
      %v529 = vpop.f32.mrb[0].mxu0
      %530 = vmatprep.mubr.f32.mxu0 0.0
      %531 = vmatmul.mubr.f32.gmra.mrb[0].mxu0 %v459
      %v532 = vpop.f32.mrb[0].mxu0
      %v533 = vadd.f32 0.0, %v532
      %v534 = vpop.f32.mrb[0].mxu0
      %535 = vdwg.mxu0
      %v536 = vld [vmem:[%s2] sm:$0x1]
      %v538 = vlaneseq
      %v539 = vshrl.u32 %v538, 7
      %v540 = vsub.s32 0, %v539
      %v541 = vrot.slane %v536, %v540
      %v543 = vmul.f32 %v528, %v541
      %v544 = vmul.f32 %v533, %v541
      %v545 = vld [vmem:[%s3] sm:$0x1]
      %v547 = vlaneseq
      %v548 = vshrl.u32 %v547, 7
      %v549 = vsub.s32 0, %v548
      %v550 = vrot.slane %v545, %v549
      %v552 = vadd.f32 %v543, %v550
      %v553 = vadd.f32 %v544, %v550
      %v554 = vadd.f32 %v552, 3.0
      %v555 = vadd.f32 %v553, 3.0
      %v556 = vmax.f32 %v554, 0.0
      %v557 = vmax.f32 %v555, 0.0
      %v558 = vmin.f32 %v556, 6.0
      %v559 = vmin.f32 %v557, 6.0
      %v560 = vmul.f32 %v558, 0.16666667
      %v561 = vmul.f32 %v559, 0.16666667
      %v562 = vmul.f32 %v552, %v560
      %v563 = vmul.f32 %v553, %v561
      %v564 = vld [vmem:[%s4] sm:$0xff]
      %v565 = vld [vmem:[%s5] sm:$0x1]
      %v567 = vlaneseq
      %v568 = vshrl.u32 %v567, 7
      %v569 = vsub.s32 0, %v568
      %v570 = vrot.slane %v565, %v569
      %vm572 = vcmask 64512
      %v574 = vsel %vm572, %v562, 0
      %576 = vmatprep.subr.mxu0 0.0
      %577 = vmatpush1.msra.mxu0 %v564
      %578 = vmatprep.subr.mxu0 0.0
      %579 = vmatpush1.msra.mxu0 0.0
      %580 = vmatprep.subr.mxu0 0.0
      %581 = vmatpush1.msra.mxu0 0.0
      %582 = vmatprep.subr.mxu0 0.0
      %583 = vmatpush1.msra.mxu0 0.0
      %584 = vmatprep.subr.mxu0 0.0
      %585 = vmatpush1.msra.mxu0 0.0
      %586 = vmatprep.subr.mxu0 0.0
      %587 = vmatpush1.msra.mxu0 0.0
      %588 = vmatprep.subr.mxu0 0.0
      %589 = vmatpush1.msra.mxu0 0.0
      %590 = vmatprep.subr.mxu0 0.0
      %591 = vmatpush1.msra.mxu0 0.0
      %592 = vmatprep.subr.mxu0 0.0
      %593 = vmatpush1.msra.mxu0 0.0
      %594 = vmatprep.subr.mxu0 0.0
      %595 = vmatpush1.msra.mxu0 0.0
      %596 = vmatprep.subr.mxu0 0.0
      %597 = vmatpush1.msra.mxu0 0.0
      %598 = vmatprep.subr.mxu0 0.0
      %599 = vmatpush1.msra.mxu0 0.0
      %600 = vmatprep.subr.mxu0 0.0
      %601 = vmatpush1.msra.mxu0 0.0
      %602 = vmatprep.subr.mxu0 0.0
      %603 = vmatpush1.msra.mxu0 0.0
      %604 = vmatprep.subr.mxu0 0.0
      %605 = vmatpush1.msra.mxu0 0.0
      %606 = vmatprep.subr.mxu0 0.0
      %607 = vmatpush1.msra.mxu0 0.0
      %608 = vmatprep.subr.mxu0 0.0
      %609 = vmatpush1.msra.mxu0 0.0
      %610 = vmatprep.subr.mxu0 0.0
      %611 = vmatpush1.msra.mxu0 0.0
      %612 = vmatprep.subr.mxu0 0.0
      %613 = vmatpush1.msra.mxu0 0.0
      %614 = vmatprep.subr.mxu0 0.0
      %615 = vmatpush1.msra.mxu0 0.0
      %616 = vmatprep.subr.mxu0 0.0
      %617 = vmatpush1.msra.mxu0 0.0
      %618 = vmatprep.subr.mxu0 0.0
      %619 = vmatpush1.msra.mxu0 0.0
      %620 = vmatprep.subr.mxu0 0.0
      %621 = vmatpush1.msra.mxu0 0.0
      %622 = vmatprep.subr.mxu0 0.0
      %623 = vmatpush1.msra.mxu0 0.0
      %624 = vmatprep.subr.mxu0 0.0
      %625 = vmatpush1.msra.mxu0 0.0
      %626 = vmatprep.subr.mxu0 0.0
      %627 = vmatpush1.msra.mxu0 0.0
      %628 = vmatprep.subr.mxu0 0.0
      %629 = vmatpush1.msra.mxu0 0.0
      %630 = vmatprep.subr.mxu0 0.0
      %631 = vmatpush1.msra.mxu0 0.0
      %632 = vmatprep.subr.mxu0 0.0
      %633 = vmatpush1.msra.mxu0 0.0
      %634 = vmatprep.subr.mxu0 0.0
      %635 = vmatpush1.msra.mxu0 0.0
      %636 = vmatprep.subr.mxu0 0.0
      %637 = vmatpush1.msra.mxu0 0.0
      %638 = vmatprep.subr.mxu0 0.0
      %639 = vmatpush1.msra.mxu0 0.0
      %640 = vmatprep.mubr.f32.mxu0 0.0
      %641 = vmatmul.mubr.f32.gmra.mrb[0].mxu0 %v574
      %v642 = vpop.f32.mrb[0].mxu0
      %v643 = vadd.f32 %v570, %v642
      %v644 = vpop.f32.mrb[0].mxu0
      %645 = vdwg.mxu0
      %v646 = vld [vmem:[%s6] sm:$0xff]
      %v647 = vld [vmem:[%s7] sm:$0x1]
      %v649 = vlaneseq
      %v650 = vshrl.u32 %v649, 7
      %v651 = vsub.s32 0, %v650
      %v652 = vrot.slane %v647, %v651
      %v655 = vsel %vm572, %v563, 0
      %657 = vmatprep.subr.mxu0 0.0
      %658 = vmatpush1.msra.mxu0 %v646
      %659 = vmatprep.subr.mxu0 0.0
      %660 = vmatpush1.msra.mxu0 0.0
      %661 = vmatprep.subr.mxu0 0.0
      %662 = vmatpush1.msra.mxu0 0.0
      %663 = vmatprep.subr.mxu0 0.0
      %664 = vmatpush1.msra.mxu0 0.0
      %665 = vmatprep.subr.mxu0 0.0
      %666 = vmatpush1.msra.mxu0 0.0
      %667 = vmatprep.subr.mxu0 0.0
      %668 = vmatpush1.msra.mxu0 0.0
      %669 = vmatprep.subr.mxu0 0.0
      %670 = vmatpush1.msra.mxu0 0.0
      %671 = vmatprep.subr.mxu0 0.0
      %672 = vmatpush1.msra.mxu0 0.0
      %673 = vmatprep.subr.mxu0 0.0
      %674 = vmatpush1.msra.mxu0 0.0
      %675 = vmatprep.subr.mxu0 0.0
      %676 = vmatpush1.msra.mxu0 0.0
      %677 = vmatprep.subr.mxu0 0.0
      %678 = vmatpush1.msra.mxu0 0.0
      %679 = vmatprep.subr.mxu0 0.0
      %680 = vmatpush1.msra.mxu0 0.0
      %681 = vmatprep.subr.mxu0 0.0
      %682 = vmatpush1.msra.mxu0 0.0
      %683 = vmatprep.subr.mxu0 0.0
      %684 = vmatpush1.msra.mxu0 0.0
      %685 = vmatprep.subr.mxu0 0.0
      %686 = vmatpush1.msra.mxu0 0.0
      %687 = vmatprep.subr.mxu0 0.0
      %688 = vmatpush1.msra.mxu0 0.0
      %689 = vmatprep.subr.mxu0 0.0
      %690 = vmatpush1.msra.mxu0 0.0
      %691 = vmatprep.subr.mxu0 0.0
      %692 = vmatpush1.msra.mxu0 0.0
      %693 = vmatprep.subr.mxu0 0.0
      %694 = vmatpush1.msra.mxu0 0.0
      %695 = vmatprep.subr.mxu0 0.0
      %696 = vmatpush1.msra.mxu0 0.0
      %697 = vmatprep.subr.mxu0 0.0
      %698 = vmatpush1.msra.mxu0 0.0
      %699 = vmatprep.subr.mxu0 0.0
      %700 = vmatpush1.msra.mxu0 0.0
      %701 = vmatprep.subr.mxu0 0.0
      %702 = vmatpush1.msra.mxu0 0.0
      %703 = vmatprep.subr.mxu0 0.0
      %704 = vmatpush1.msra.mxu0 0.0
      %705 = vmatprep.subr.mxu0 0.0
      %706 = vmatpush1.msra.mxu0 0.0
      %707 = vmatprep.subr.mxu0 0.0
      %708 = vmatpush1.msra.mxu0 0.0
      %709 = vmatprep.subr.mxu0 0.0
      %710 = vmatpush1.msra.mxu0 0.0
      %711 = vmatprep.subr.mxu0 0.0
      %712 = vmatpush1.msra.mxu0 0.0
      %713 = vmatprep.subr.mxu0 0.0
      %714 = vmatpush1.msra.mxu0 0.0
      %715 = vmatprep.subr.mxu0 0.0
      %716 = vmatpush1.msra.mxu0 0.0
      %717 = vmatprep.subr.mxu0 0.0
      %718 = vmatpush1.msra.mxu0 0.0
      %719 = vmatprep.subr.mxu0 0.0
      %720 = vmatpush1.msra.mxu0 0.0
      %721 = vmatprep.mubr.f32.mxu0 0.0
      %722 = vmatmul.mubr.f32.gmra.mrb[0].mxu0 %v655
      %v723 = vpop.f32.mrb[0].mxu0
      %v724 = vadd.f32 %v652, %v723
      %v725 = vpop.f32.mrb[0].mxu0
      %726 = vdwg.mxu0
      %v727 = vxor.u32 %v643, 2147483648
      %v728 = vmul.f32 %v727, 1.442695
      %v729 = vpow.pop %v728
      %v730 = vadd.f32 %v729, 1.0
      %v731 = vrcp.pop %v730
      %v732 = vmul.f32 1.0, %v731
      %733 = vst.msk [vmem:[%s337] sm:$0xff] %vm358, %v732
      %v734 = vxor.u32 %v724, 2147483648
      %v735 = vmul.f32 %v734, 1.442695
      %v736 = vpow.pop %v735
      %v737 = vadd.f32 %v736, 1.0
      %v738 = vrcp.pop %v737
      %v739 = vmul.f32 1.0, %v738
      %740 = vst.msk [vmem:[%s341] sm:$0xff] %vm358, %v739
      %p741 = scmp.lt.s32.totalorder %s21, 1
      %s742 = scalar_select %p741, %s21, 1
      %s743 = smul.addr %s742, 8
      %s744 = scalar_lea.vmem %s8, %s743
      %p745 = scmp.lt.s32.totalorder %s21, 1
      %s746 = scalar_select %p745, %s21, 1
      %s747 = smul.addr %s746, 8
      %s748 = scalar_lea.vmem %s9, %s747
      // Predicated region
      $region53: #{_lambda_.8} parent=51 // pred_check
        %p749 = pneg %p212
      $region54: #{_lambda_.8} parent=51 // pred_check_branch
        %751 = sbr.rel (%p749) target = $region56
      $region55: #{_lambda_.8} parent=51 // pred_region
        _
      $region56: #{_lambda_.8} parent=51 // pred_fallthru
        _
      // Predicated region
      $region57: #{_lambda_.8} parent=51 // pred_check
        %p752 = pneg %p238
      $region58: #{_lambda_.8} parent=51 // pred_check_branch
        %754 = sbr.rel (%p752) target = $region60
      $region59: #{_lambda_.8} parent=51 // pred_region
        _
      $region60: #{_lambda_.8} parent=51 // pred_fallthru
        _
    $region52: #{_lambda_.8} parent=5 // pred_fallthru
      _
    %p755 = scmp.le.s32.totalorder 2, %s16
    // Predicated region
    $region61: #{_lambda_.8} parent=5 // pred_check
      %p756 = pneg %p755
    $region62: #{_lambda_.8} parent=5 // pred_check_branch
      %758 = sbr.rel (%p756) target = $region64
    $region63: #{_lambda_.8} parent=5 // pred_region
      %s759 = ssub.s32 %s16, 2
      // Predicated region
      $region65: #{_lambda_.8} parent=63 // pred_check
        %p760 = pneg %p218
      $region66: #{_lambda_.8} parent=63 // pred_check_branch
        %762 = sbr.rel (%p760) target = $region68
      $region67: #{_lambda_.8} parent=63 // pred_region
        %p763 = scmp.lt.s32.totalorder %s22, 1
        %s764 = scalar_select %p763, %s22, 1
        %s765 = smul.addr %s764, 8
        %s766 = scalar_lea.vmem %s8, %s765
      $region68: #{_lambda_.8} parent=63 // pred_fallthru
        _
      // Predicated region
      $region69: #{_lambda_.8} parent=63 // pred_check
        %p767 = pneg %p244
      $region70: #{_lambda_.8} parent=63 // pred_check_branch
        %769 = sbr.rel (%p767) target = $region72
      $region71: #{_lambda_.8} parent=63 // pred_region
        %p770 = scmp.lt.s32.totalorder %s22, 1
        %s771 = scalar_select %p770, %s22, 1
        %s772 = smul.addr %s771, 8
        %s773 = scalar_lea.vmem %s9, %s772
      $region72: #{_lambda_.8} parent=63 // pred_fallthru
        _
    $region64: #{_lambda_.8} parent=5 // pred_fallthru
      _
  $region6: #{_lambda_.8} parent=0 // loop_footer
    %s20 = sadd.s32 1, %s16
  $region7: #{_lambda_.8} parent=0 // loop_footer_branch
    %15 = sbr.rel target = $region3
  $region8: #{_lambda_.8} parent=0 // loop_exit
    _

// kernel: _lambda_.6
$region0: #{_lambda_.6}
  #allocation0 [shape = 'u32[]', space=smem, size = 0x4, offset = 0x4, fixed_abs, tag = 'smem constant byte address 0x4 - core index']
  #allocation1 [shape = 'u32[144,128]{1,0:T(1,128)}', space=vmem, size = 0x12000, scoped, tag = 'internal scratch']
  %s0 = inlined_call_operand.vmem [shape: bf16[2,10,10,4], index: 0, kind: input, shape index: {}]
  %s1 = inlined_call_operand.vmem [shape: bf16[3,12,4], index: 1, kind: input, shape index: {}]
  %s2 = inlined_call_operand.vmem [shape: f32[1,4], index: 2, kind: input, shape index: {}]
  %s3 = inlined_call_operand.vmem [shape: f32[1,4], index: 3, kind: input, shape index: {}]
  %s4 = inlined_call_operand.vmem [shape: bf16[2,8,8,4], index: 4, kind: output, shape index: {}]
  %s5 = sld [smem:[#allocation0]]
  $region49: #{_lambda_.6} parent=0
    _
  %s7 = ssub.s32 1, %s5
  %s8 = scalar_select 0, %s7, %s5
  loop: start=0, step=1, limit=4
  $region2: #{_lambda_.6} parent=0 // loop_pre_header
    _
  $region3: #{_lambda_.6} parent=0 // loop_header
    %s10 = sphi 0, %s14
    %p11 = scmp.ge.s32.totalorder %s10, 4
    %s20 = sphi 0, %s22
    %s23 = sphi 0, %s20
    %s24 = sphi 0, %s23
    %s40 = sphi 0, %s24
    %s44 = sphi 0, %s44
    %s46 = sphi 0, %s44
    %s47 = sphi 0, %s46
    %s61 = sphi 0, %s47
    %s65 = sphi 0, %s65
    %s67 = sphi 0, %s65
    %s68 = sphi 0, %s67
    %s82 = sphi 0, %s68
    %s86 = sphi 0, %s86
    %s88 = sphi 0, %s86
    %s89 = sphi 0, %s88
    %s103 = sphi 0, %s89
    %s109 = sphi 0, %s111
    %s112 = sphi 0, %s109
    %s113 = sphi 0, %s112
    %s129 = sphi 0, %s113
  $region4: #{_lambda_.6} parent=0 // loop_header_branch
    %13 = sbr.rel (%p11) target = $region8
  $region5: #{_lambda_.6} parent=0 // loop_body
    %s15 = ssub.s32 %s10, 1
    %s16 = ssub.s32 %s10, 2
    %s17 = sadd.s32 %s10, 1
    %s18 = ssub.s32 %s10, %s17
    %p19 = scmp.eq.s32.totalorder %s18, 0
    %s21 = sadd.s32 %s20, 1
    %s22 = scalar_select %p19, %s20, %s21
    %p25 = pneg %p19
    %p26 = scmp.eq.s32.totalorder %s10, 1
    %p27 = por %p25, %p26
    %p28 = scmp.ne.s32.totalorder %s20, %s23
    %p29 = scmp.eq.s32.totalorder %s10, 0
    %p30 = por %p28, %p29
    %p31 = scmp.ne.s32.totalorder %s20, %s23
    %p32 = scmp.eq.s32.totalorder %s15, 1
    %p33 = por %p31, %p32
    %p34 = scmp.ne.s32.totalorder %s23, %s24
    %p35 = scmp.eq.s32.totalorder %s15, 0
    %p36 = por %p34, %p35
    %p37 = scmp.ne.s32.totalorder %s23, %s24
    %p38 = scmp.eq.s32.totalorder %s16, 1
    %p39 = por %p37, %p38
    %p41 = scmp.ne.s32.totalorder %s24, %s40
    %p42 = scmp.eq.s32.totalorder %s16, 0
    %p43 = por %p41, %p42
    %s45 = sadd.s32 %s44, 1
    %p48 = scmp.eq.s32.totalorder %s10, 1
    %p49 = scmp.ne.s32.totalorder %s44, %s46
    %p50 = scmp.eq.s32.totalorder %s10, 0
    %p51 = por %p49, %p50
    %p52 = scmp.ne.s32.totalorder %s44, %s46
    %p53 = scmp.eq.s32.totalorder %s15, 1
    %p54 = por %p52, %p53
    %p55 = scmp.ne.s32.totalorder %s46, %s47
    %p56 = scmp.eq.s32.totalorder %s15, 0
    %p57 = por %p55, %p56
    %p58 = scmp.ne.s32.totalorder %s46, %s47
    %p59 = scmp.eq.s32.totalorder %s16, 1
    %p60 = por %p58, %p59
    %p62 = scmp.ne.s32.totalorder %s47, %s61
    %p63 = scmp.eq.s32.totalorder %s16, 0
    %p64 = por %p62, %p63
    %s66 = sadd.s32 %s65, 1
    %p69 = scmp.eq.s32.totalorder %s10, 1
    %p70 = scmp.ne.s32.totalorder %s65, %s67
    %p71 = scmp.eq.s32.totalorder %s10, 0
    %p72 = por %p70, %p71
    %p73 = scmp.ne.s32.totalorder %s65, %s67
    %p74 = scmp.eq.s32.totalorder %s15, 1
    %p75 = por %p73, %p74
    %p76 = scmp.ne.s32.totalorder %s67, %s68
    %p77 = scmp.eq.s32.totalorder %s15, 0
    %p78 = por %p76, %p77
    %p79 = scmp.ne.s32.totalorder %s67, %s68
    %p80 = scmp.eq.s32.totalorder %s16, 1
    %p81 = por %p79, %p80
    %p83 = scmp.ne.s32.totalorder %s68, %s82
    %p84 = scmp.eq.s32.totalorder %s16, 0
    %p85 = por %p83, %p84
    %s87 = sadd.s32 %s86, 1
    %p90 = scmp.eq.s32.totalorder %s10, 1
    %p91 = scmp.ne.s32.totalorder %s86, %s88
    %p92 = scmp.eq.s32.totalorder %s10, 0
    %p93 = por %p91, %p92
    %p94 = scmp.ne.s32.totalorder %s86, %s88
    %p95 = scmp.eq.s32.totalorder %s15, 1
    %p96 = por %p94, %p95
    %p97 = scmp.ne.s32.totalorder %s88, %s89
    %p98 = scmp.eq.s32.totalorder %s15, 0
    %p99 = por %p97, %p98
    %p100 = scmp.ne.s32.totalorder %s88, %s89
    %p101 = scmp.eq.s32.totalorder %s16, 1
    %p102 = por %p100, %p101
    %p104 = scmp.ne.s32.totalorder %s89, %s103
    %p105 = scmp.eq.s32.totalorder %s16, 0
    %p106 = por %p104, %p105
    %s107 = ssub.s32 %s10, %s17
    %p108 = scmp.eq.s32.totalorder %s107, 0
    %s110 = sadd.s32 %s109, 1
    %s111 = scalar_select %p108, %s109, %s110
    %p114 = pneg %p108
    %p115 = scmp.eq.s32.totalorder %s10, 1
    %p116 = por %p114, %p115
    %p117 = scmp.ne.s32.totalorder %s109, %s112
    %p118 = scmp.eq.s32.totalorder %s10, 0
    %p119 = por %p117, %p118
    %p120 = scmp.ne.s32.totalorder %s109, %s112
    %p121 = scmp.eq.s32.totalorder %s15, 1
    %p122 = por %p120, %p121
    %p123 = scmp.ne.s32.totalorder %s112, %s113
    %p124 = scmp.eq.s32.totalorder %s15, 0
    %p125 = por %p123, %p124
    %p126 = scmp.ne.s32.totalorder %s112, %s113
    %p127 = scmp.eq.s32.totalorder %s16, 1
    %p128 = por %p126, %p127
    %p130 = scmp.ne.s32.totalorder %s113, %s129
    %p131 = scmp.eq.s32.totalorder %s16, 0
    %p132 = por %p130, %p131
    %p133 = scmp.le.s32.totalorder 1, %s10
    %p134 = scmp.lt.s32.totalorder %s10, 3
    %p135 = pnand %p133, %p134
    %p136 = pneg %p135
    // Predicated region
    $region9: #{_lambda_.6} parent=5 // pred_check
      _
    $region10: #{_lambda_.6} parent=5 // pred_check_branch
      %138 = sbr.rel (%p135) target = $region12
    $region11: #{_lambda_.6} parent=5 // pred_region
      %s139 = ssub.s32 %s10, 1
      // Predicated region
      $region13: #{_lambda_.6} parent=11 // pred_check
        %p140 = pneg %p57
      $region14: #{_lambda_.6} parent=11 // pred_check_branch
        %142 = sbr.rel (%p140) target = $region16
      $region15: #{_lambda_.6} parent=11 // pred_region
        _
      $region16: #{_lambda_.6} parent=11 // pred_fallthru
        _
      // Predicated region
      $region17: #{_lambda_.6} parent=11 // pred_check
        %p143 = pneg %p78
      $region18: #{_lambda_.6} parent=11 // pred_check_branch
        %145 = sbr.rel (%p143) target = $region20
      $region19: #{_lambda_.6} parent=11 // pred_region
        _
      $region20: #{_lambda_.6} parent=11 // pred_fallthru
        _
      // Predicated region
      $region21: #{_lambda_.6} parent=11 // pred_check
        %p146 = pneg %p99
      $region22: #{_lambda_.6} parent=11 // pred_check_branch
        %148 = sbr.rel (%p146) target = $region24
      $region23: #{_lambda_.6} parent=11 // pred_region
        _
      $region24: #{_lambda_.6} parent=11 // pred_fallthru
        _
    $region12: #{_lambda_.6} parent=5 // pred_fallthru
      _
    %p149 = scmp.lt.s32.totalorder %s10, 2
    // Predicated region
    $region25: #{_lambda_.6} parent=5 // pred_check
      %p150 = pneg %p149
    $region26: #{_lambda_.6} parent=5 // pred_check_branch
      %152 = sbr.rel (%p150) target = $region28
    $region27: #{_lambda_.6} parent=5 // pred_region
      // Predicated region
      $region29: #{_lambda_.6} parent=27 // pred_check
        %p153 = pneg %p30
      $region30: #{_lambda_.6} parent=27 // pred_check_branch
        %155 = sbr.rel (%p153) target = $region32
      $region31: #{_lambda_.6} parent=27 // pred_region
        %p156 = scmp.lt.s32.totalorder %s10, 1
        %s157 = scalar_select %p156, %s10, 1
        %s158 = smul.addr %s157, 20
        %s159 = smul.addr %s158, 4
        %s160 = scalar_lea.vmem %s0, %s159
      $region32: #{_lambda_.6} parent=27 // pred_fallthru
        _
    $region28: #{_lambda_.6} parent=5 // pred_fallthru
      _
    %p161 = scmp.le.s32.totalorder 1, %s10
    %p162 = scmp.lt.s32.totalorder %s10, 3
    %p163 = pnand %p161, %p162
    %p164 = pneg %p163
    // Predicated region
    $region33: #{_lambda_.6} parent=5 // pred_check
      _
    $region34: #{_lambda_.6} parent=5 // pred_check_branch
      %166 = sbr.rel (%p163) target = $region36
    $region35: #{_lambda_.6} parent=5 // pred_region
      %s167 = ssub.s32 %s10, 1
      %p168 = scmp.lt.s32.totalorder %s15, 1
      %s169 = scalar_select %p168, %s15, 1
      %s170 = smul.addr %s169, 20
      %s171 = smul.addr %s170, 4
      %s172 = scalar_lea.vmem %s0, %s171
      %p173 = pneg %p36
      %p174 = pneg %p33
      %p175 = pneg %p57
      %p176 = pneg %p54
      %p177 = pneg %p78
      %p178 = pneg %p75
      %p179 = pneg %p99
      %p180 = pneg %p96
      %p181 = pneg %p125
      %p182 = pneg %p122
      %p183 = scmp.lt.s32.totalorder %s15, 1
      %s184 = scalar_select %p183, %s15, 1
      %s185 = smul.addr %s184, 8
      %s186 = smul.addr %s185, 4
      %s187 = scalar_lea.vmem %s4, %s186
      %p188 = scmp.lt.s32.totalorder %s15, 1
      %s189 = scalar_select %p188, %s15, 1
      %s190 = smul.addr %s189, 20
      %s191 = smul.addr %s190, 4
      %s192 = scalar_lea.vmem %s0, %s191
      %p193 = scmp.lt.s32.totalorder %s15, 1
      %s194 = scalar_select %p193, %s15, 1
      %s195 = smul.addr %s194, 8
      %s196 = smul.addr %s195, 4
      %s197 = scalar_lea.vmem %s4, %s196
      %v199 = vld [vmem:[%s2] sm:$0x1]
      %v200 = vld [vmem:[%s3] sm:$0x1]
      %v201 = vld [vmem:[%s192] sm:$0xf]
      %v202 = vld [vmem:[%s192 + $0x4] sm:$0x1]
      %v203 = vld [vmem:[%s192 + $0x8] sm:$0xf]
      %v204 = vld [vmem:[%s192 + $0xc] sm:$0x1]
      %v205 = vld [vmem:[%s192 + $0x10] sm:$0xf]
      %v206 = vld [vmem:[%s192 + $0x14] sm:$0x1]
      %v207 = vld [vmem:[%s192 + $0x18] sm:$0xf]
      %v208 = vld [vmem:[%s192 + $0x1c] sm:$0x1]
      %v209 = vld [vmem:[%s192 + $0x20] sm:$0xf]
      %v210 = vld [vmem:[%s192 + $0x24] sm:$0x1]
      %v211 = vld [vmem:[%s192 + $0x28] sm:$0xf]
      %v212 = vld [vmem:[%s192 + $0x2c] sm:$0x1]
      %v213 = vld [vmem:[%s192 + $0x30] sm:$0xf]
      %v214 = vld [vmem:[%s192 + $0x34] sm:$0x1]
      %v215 = vld [vmem:[%s192 + $0x38] sm:$0xf]
      %v216 = vld [vmem:[%s192 + $0x3c] sm:$0x1]
      %v233 = vunpack.c.l.b16 %v201
      %v234 = vunpack.c.l.b16 %v202
      %v235 = vunpack.c.l.b16 %v203
      %v236 = vunpack.c.l.b16 %v204
      %v237 = vunpack.c.l.b16 %v205
      %v238 = vunpack.c.l.b16 %v206
      %v239 = vunpack.c.l.b16 %v207
      %v240 = vunpack.c.l.b16 %v208
      %v241 = vunpack.c.l.b16 %v209
      %v242 = vunpack.c.l.b16 %v210
      %v243 = vunpack.c.l.b16 %v211
      %v244 = vunpack.c.l.b16 %v212
      %v245 = vunpack.c.l.b16 %v213
      %v246 = vunpack.c.l.b16 %v214
      %v247 = vunpack.c.l.b16 %v215
      %v248 = vunpack.c.l.b16 %v216
      %v249 = vpack.c.b16 %v234, %v233
      %v250 = vpack.c.b16 %v236, %v235
      %v251 = vpack.c.b16 %v238, %v237
      %v252 = vpack.c.b16 %v240, %v239
      %v253 = vpack.c.b16 %v242, %v241
      %v254 = vpack.c.b16 %v244, %v243
      %v255 = vpack.c.b16 %v246, %v245
      %v256 = vpack.c.b16 %v248, %v247
      %v258 = vshrl.u32 %v249, 16
      %v260 = vshll.u32 %v249, 16
      %v262 = vrot.slane %v260, 1
      %v263 = vor.u32 %v258, %v262
      %v265 = vshrl.u32 %v250, 16
      %v267 = vshll.u32 %v250, 16
      %v269 = vrot.slane %v267, 1
      %v270 = vor.u32 %v265, %v269
      %v272 = vshrl.u32 %v251, 16
      %v274 = vshll.u32 %v251, 16
      %v276 = vrot.slane %v274, 1
      %v277 = vor.u32 %v272, %v276
      %v279 = vshrl.u32 %v252, 16
      %v281 = vshll.u32 %v252, 16
      %v283 = vrot.slane %v281, 1
      %v284 = vor.u32 %v279, %v283
      %v286 = vshrl.u32 %v253, 16
      %v288 = vshll.u32 %v253, 16
      %v290 = vrot.slane %v288, 1
      %v291 = vor.u32 %v286, %v290
      %v293 = vshrl.u32 %v254, 16
      %v295 = vshll.u32 %v254, 16
      %v297 = vrot.slane %v295, 1
      %v298 = vor.u32 %v293, %v297
      %v300 = vshrl.u32 %v255, 16
      %v302 = vshll.u32 %v255, 16
      %v304 = vrot.slane %v302, 1
      %v305 = vor.u32 %v300, %v304
      %v307 = vshrl.u32 %v256, 16
      %v309 = vshll.u32 %v256, 16
      %v311 = vrot.slane %v309, 1
      %v312 = vor.u32 %v307, %v311
      %313 = vrot.lane.b32.xlu0 %v263, 4
      %v314 = vpop.permute.xlu0 %313
      %315 = vrot.lane.b32.xlu0 %v270, 4
      %v316 = vpop.permute.xlu0 %315
      %317 = vrot.lane.b32.xlu0 %v277, 4
      %v318 = vpop.permute.xlu0 %317
      %319 = vrot.lane.b32.xlu0 %v284, 4
      %v320 = vpop.permute.xlu0 %319
      %321 = vrot.lane.b32.xlu0 %v291, 4
      %v322 = vpop.permute.xlu0 %321
      %323 = vrot.lane.b32.xlu0 %v298, 4
      %v324 = vpop.permute.xlu0 %323
      %325 = vrot.lane.b32.xlu0 %v305, 4
      %v326 = vpop.permute.xlu0 %325
      %327 = vrot.lane.b32.xlu0 %v312, 4
      %v328 = vpop.permute.xlu0 %327
      %v329 = vrot.slane %v249, 1
      %v330 = vrot.slane %v250, 1
      %v331 = vrot.slane %v251, 1
      %v332 = vrot.slane %v252, 1
      %v333 = vrot.slane %v253, 1
      %v334 = vrot.slane %v254, 1
      %v335 = vrot.slane %v255, 1
      %v336 = vrot.slane %v256, 1
      %337 = vrot.lane.b32.xlu0 %v329, 8
      %v338 = vpop.permute.xlu0 %337
      %339 = vrot.lane.b32.xlu0 %v330, 8
      %v340 = vpop.permute.xlu0 %339
      %341 = vrot.lane.b32.xlu0 %v331, 8
      %v342 = vpop.permute.xlu0 %341
      %343 = vrot.lane.b32.xlu0 %v332, 8
      %v344 = vpop.permute.xlu0 %343
      %345 = vrot.lane.b32.xlu0 %v333, 8
      %v346 = vpop.permute.xlu0 %345
      %347 = vrot.lane.b32.xlu0 %v334, 8
      %v348 = vpop.permute.xlu0 %347
      %349 = vrot.lane.b32.xlu0 %v335, 8
      %v350 = vpop.permute.xlu0 %349
      %351 = vrot.lane.b32.xlu0 %v336, 8
      %v352 = vpop.permute.xlu0 %351
      %vm353 = vcmask 31744
      %v356 = vsel %vm353, %v201, %v314
      %v359 = vsel %vm353, %v203, %v316
      %v362 = vsel %vm353, %v205, %v318
      %v365 = vsel %vm353, %v207, %v320
      %v368 = vsel %vm353, %v209, %v322
      %v371 = vsel %vm353, %v211, %v324
      %v374 = vsel %vm353, %v213, %v326
      %v377 = vsel %vm353, %v215, %v328
      %vm378 = vcmask 64512
      %v380 = vsel %vm378, %v356, %v338
      %v382 = vsel %vm378, %v359, %v340
      %v384 = vsel %vm378, %v362, %v342
      %v386 = vsel %vm378, %v365, %v344
      %v388 = vsel %vm378, %v368, %v346
      %v390 = vsel %vm378, %v371, %v348
      %v392 = vsel %vm378, %v374, %v350
      %v394 = vsel %vm378, %v377, %v352
      %v395 = vld [vmem:[%s1] sm:$0xf]
      %v396 = vld [vmem:[%s1 + $0x4] sm:$0x3]
      %s397 = scalar_lea.vmem %s192, 8
      %v398 = vld [vmem:[%s397] sm:$0xf]
      %v399 = vld [vmem:[%s397 + $0x4] sm:$0x1]
      %v400 = vld [vmem:[%s397 + $0x8] sm:$0xf]
      %v401 = vld [vmem:[%s397 + $0xc] sm:$0x1]
      %v402 = vld [vmem:[%s397 + $0x10] sm:$0xf]
      %v403 = vld [vmem:[%s397 + $0x14] sm:$0x1]
      %v404 = vld [vmem:[%s397 + $0x18] sm:$0xf]
      %v405 = vld [vmem:[%s397 + $0x1c] sm:$0x1]
      %v406 = vld [vmem:[%s397 + $0x20] sm:$0xf]
      %v407 = vld [vmem:[%s397 + $0x24] sm:$0x1]
      %v408 = vld [vmem:[%s397 + $0x28] sm:$0xf]
      %v409 = vld [vmem:[%s397 + $0x2c] sm:$0x1]
      %v410 = vld [vmem:[%s397 + $0x30] sm:$0xf]
      %v411 = vld [vmem:[%s397 + $0x34] sm:$0x1]
      %v412 = vld [vmem:[%s397 + $0x38] sm:$0xf]
      %v413 = vld [vmem:[%s397 + $0x3c] sm:$0x1]
      %v430 = vunpack.c.l.b16 %v398
      %v431 = vunpack.c.l.b16 %v399
      %v432 = vunpack.c.l.b16 %v400
      %v433 = vunpack.c.l.b16 %v401
      %v434 = vunpack.c.l.b16 %v402
      %v435 = vunpack.c.l.b16 %v403
      %v436 = vunpack.c.l.b16 %v404
      %v437 = vunpack.c.l.b16 %v405
      %v438 = vunpack.c.l.b16 %v406
      %v439 = vunpack.c.l.b16 %v407
      %v440 = vunpack.c.l.b16 %v408
      %v441 = vunpack.c.l.b16 %v409
      %v442 = vunpack.c.l.b16 %v410
      %v443 = vunpack.c.l.b16 %v411
      %v444 = vunpack.c.l.b16 %v412
      %v445 = vunpack.c.l.b16 %v413
      %v446 = vpack.c.b16 %v431, %v430
      %v447 = vpack.c.b16 %v433, %v432
      %v448 = vpack.c.b16 %v435, %v434
      %v449 = vpack.c.b16 %v437, %v436
      %v450 = vpack.c.b16 %v439, %v438
      %v451 = vpack.c.b16 %v441, %v440
      %v452 = vpack.c.b16 %v443, %v442
      %v453 = vpack.c.b16 %v445, %v444
      %v455 = vshrl.u32 %v446, 16
      %v457 = vshll.u32 %v446, 16
      %v459 = vrot.slane %v457, 1
      %v460 = vor.u32 %v455, %v459
      %v462 = vshrl.u32 %v447, 16
      %v464 = vshll.u32 %v447, 16
      %v466 = vrot.slane %v464, 1
      %v467 = vor.u32 %v462, %v466
      %v469 = vshrl.u32 %v448, 16
      %v471 = vshll.u32 %v448, 16
      %v473 = vrot.slane %v471, 1
      %v474 = vor.u32 %v469, %v473
      %v476 = vshrl.u32 %v449, 16
      %v478 = vshll.u32 %v449, 16
      %v480 = vrot.slane %v478, 1
      %v481 = vor.u32 %v476, %v480
      %v483 = vshrl.u32 %v450, 16
      %v485 = vshll.u32 %v450, 16
      %v487 = vrot.slane %v485, 1
      %v488 = vor.u32 %v483, %v487
      %v490 = vshrl.u32 %v451, 16
      %v492 = vshll.u32 %v451, 16
      %v494 = vrot.slane %v492, 1
      %v495 = vor.u32 %v490, %v494
      %v497 = vshrl.u32 %v452, 16
      %v499 = vshll.u32 %v452, 16
      %v501 = vrot.slane %v499, 1
      %v502 = vor.u32 %v497, %v501
      %v504 = vshrl.u32 %v453, 16
      %v506 = vshll.u32 %v453, 16
      %v508 = vrot.slane %v506, 1
      %v509 = vor.u32 %v504, %v508
      %510 = vrot.lane.b32.xlu0 %v460, 4
      %v511 = vpop.permute.xlu0 %510
      %512 = vrot.lane.b32.xlu0 %v467, 4
      %v513 = vpop.permute.xlu0 %512
      %514 = vrot.lane.b32.xlu0 %v474, 4
      %v515 = vpop.permute.xlu0 %514
      %516 = vrot.lane.b32.xlu0 %v481, 4
      %v517 = vpop.permute.xlu0 %516
      %518 = vrot.lane.b32.xlu0 %v488, 4
      %v519 = vpop.permute.xlu0 %518
      %520 = vrot.lane.b32.xlu0 %v495, 4
      %v521 = vpop.permute.xlu0 %520
      %522 = vrot.lane.b32.xlu0 %v502, 4
      %v523 = vpop.permute.xlu0 %522
      %524 = vrot.lane.b32.xlu0 %v509, 4
      %v525 = vpop.permute.xlu0 %524
      %v526 = vrot.slane %v446, 1
      %v527 = vrot.slane %v447, 1
      %v528 = vrot.slane %v448, 1
      %v529 = vrot.slane %v449, 1
      %v530 = vrot.slane %v450, 1
      %v531 = vrot.slane %v451, 1
      %v532 = vrot.slane %v452, 1
      %v533 = vrot.slane %v453, 1
      %534 = vrot.lane.b32.xlu0 %v526, 8
      %v535 = vpop.permute.xlu0 %534
      %536 = vrot.lane.b32.xlu0 %v527, 8
      %v537 = vpop.permute.xlu0 %536
      %538 = vrot.lane.b32.xlu0 %v528, 8
      %v539 = vpop.permute.xlu0 %538
      %540 = vrot.lane.b32.xlu0 %v529, 8
      %v541 = vpop.permute.xlu0 %540
      %542 = vrot.lane.b32.xlu0 %v530, 8
      %v543 = vpop.permute.xlu0 %542
      %544 = vrot.lane.b32.xlu0 %v531, 8
      %v545 = vpop.permute.xlu0 %544
      %546 = vrot.lane.b32.xlu0 %v532, 8
      %v547 = vpop.permute.xlu0 %546
      %548 = vrot.lane.b32.xlu0 %v533, 8
      %v549 = vpop.permute.xlu0 %548
      %v552 = vsel %vm353, %v398, %v511
      %v555 = vsel %vm353, %v400, %v513
      %v558 = vsel %vm353, %v402, %v515
      %v561 = vsel %vm353, %v404, %v517
      %v564 = vsel %vm353, %v406, %v519
      %v567 = vsel %vm353, %v408, %v521
      %v570 = vsel %vm353, %v410, %v523
      %v573 = vsel %vm353, %v412, %v525
      %v575 = vsel %vm378, %v552, %v535
      %v577 = vsel %vm378, %v555, %v537
      %v579 = vsel %vm378, %v558, %v539
      %v581 = vsel %vm378, %v561, %v541
      %v583 = vsel %vm378, %v564, %v543
      %v585 = vsel %vm378, %v567, %v545
      %v587 = vsel %vm378, %v570, %v547
      %v589 = vsel %vm378, %v573, %v549
      %s590 = scalar_lea.vmem %s1, 8
      %v591 = vld [vmem:[%s590] sm:$0xf]
      %v592 = vld [vmem:[%s590 + $0x4] sm:$0x3]
      %v601 = vunpack.c.l.b16 %v575
      %v602 = vunpack.c.l.b16 %v577
      %v603 = vunpack.c.l.b16 %v579
      %v604 = vunpack.c.l.b16 %v581
      %v605 = vunpack.c.l.b16 %v583
      %v606 = vunpack.c.l.b16 %v585
      %v607 = vunpack.c.l.b16 %v587
      %v608 = vunpack.c.l.b16 %v589
      %v609 = vpack.c.b16 %v602, %v601
      %v610 = vpack.c.b16 %v604, %v603
      %v611 = vpack.c.b16 %v606, %v605
      %v612 = vpack.c.b16 %v608, %v607
      %v615 = vunpack.c.l.b16 %v591
      %v616 = vunpack.c.l.b16 %v592
      %v617 = vpack.c.b16 %v616, %v615
      %vm618 = vcmask 97280
      %v620 = vsel %vm618, %v609, 0
      %v623 = vsel %vm618, %v610, 0
      %v626 = vsel %vm618, %v611, 0
      %v629 = vsel %vm618, %v612, 0
      %vm631 = vcmask 1045504
      %v633 = vsel %vm631, %v617, 0
      %635 = vmatprep.subr.bf16.mxu0 0
      %636 = vmatpush1.bf16.msra.mxu0 %v633
      %637 = vmatprep.subr.bf16.mxu0 0
      %638 = vmatpush1.bf16.msra.mxu0 0
      %639 = vmatprep.subr.bf16.mxu0 0
      %640 = vmatpush1.bf16.msra.mxu0 0
      %641 = vmatprep.subr.bf16.mxu0 0
      %642 = vmatpush1.bf16.msra.mxu0 0
      %643 = vmatprep.subr.bf16.mxu0 0
      %644 = vmatpush1.bf16.msra.mxu0 0
      %645 = vmatprep.subr.bf16.mxu0 0
      %646 = vmatpush1.bf16.msra.mxu0 0
      %647 = vmatprep.subr.bf16.mxu0 0
      %648 = vmatpush1.bf16.msra.mxu0 0
      %649 = vmatprep.subr.bf16.mxu0 0
      %650 = vmatpush1.bf16.msra.mxu0 0
      %651 = vmatprep.subr.bf16.mxu0 0
      %652 = vmatpush1.bf16.msra.mxu0 0
      %653 = vmatprep.subr.bf16.mxu0 0
      %654 = vmatpush1.bf16.msra.mxu0 0
      %655 = vmatprep.subr.bf16.mxu0 0
      %656 = vmatpush1.bf16.msra.mxu0 0
      %657 = vmatprep.subr.bf16.mxu0 0
      %658 = vmatpush1.bf16.msra.mxu0 0
      %659 = vmatprep.subr.bf16.mxu0 0
      %660 = vmatpush1.bf16.msra.mxu0 0
      %661 = vmatprep.subr.bf16.mxu0 0
      %662 = vmatpush1.bf16.msra.mxu0 0
      %663 = vmatprep.subr.bf16.mxu0 0
      %664 = vmatpush1.bf16.msra.mxu0 0
      %665 = vmatprep.subr.bf16.mxu0 0
      %666 = vmatpush1.bf16.msra.mxu0 0
      %667 = vmatprep.mubr.bf16.mxu0 0
      %668 = vmatmul.mubr.bf16.gmra.mrb[0].mxu0 %v620
      %v669 = vpop.f32.mrb[0].mxu0
      %v670 = vadd.f32 0.0, %v669
      %v671 = vpop.f32.mrb[0].mxu0
      %v672 = vpop.f32.mrb[0].mxu0
      %v673 = vadd.f32 0.0, %v672
      %v674 = vpop.f32.mrb[0].mxu0
      %675 = vmatprep.mubr.bf16.mxu0 0
      %676 = vmatmul.mubr.bf16.gmra.mrb[0].mxu0 %v623
      %v677 = vpop.f32.mrb[0].mxu0
      %v678 = vadd.f32 0.0, %v677
      %v679 = vpop.f32.mrb[0].mxu0
      %v680 = vpop.f32.mrb[0].mxu0
      %v681 = vadd.f32 0.0, %v680
      %v682 = vpop.f32.mrb[0].mxu0
      %683 = vmatprep.mubr.bf16.mxu0 0
      %684 = vmatmul.mubr.bf16.gmra.mrb[0].mxu0 %v626
      %v685 = vpop.f32.mrb[0].mxu0
      %v686 = vadd.f32 0.0, %v685
      %v687 = vpop.f32.mrb[0].mxu0
      %v688 = vpop.f32.mrb[0].mxu0
      %v689 = vadd.f32 0.0, %v688
      %v690 = vpop.f32.mrb[0].mxu0
      %691 = vmatprep.mubr.bf16.mxu0 0
      %692 = vmatmul.mubr.bf16.gmra.mrb[0].mxu0 %v629
      %v693 = vpop.f32.mrb[0].mxu0
      %v694 = vadd.f32 0.0, %v693
      %v695 = vpop.f32.mrb[0].mxu0
      %v696 = vpop.f32.mrb[0].mxu0
      %v697 = vadd.f32 0.0, %v696
      %v698 = vpop.f32.mrb[0].mxu0
      %699 = vdwg.mxu0
      %v708 = vunpack.c.l.b16 %v380
      %v709 = vunpack.c.l.b16 %v382
      %v710 = vunpack.c.l.b16 %v384
      %v711 = vunpack.c.l.b16 %v386
      %v712 = vunpack.c.l.b16 %v388
      %v713 = vunpack.c.l.b16 %v390
      %v714 = vunpack.c.l.b16 %v392
      %v715 = vunpack.c.l.b16 %v394
      %v716 = vpack.c.b16 %v709, %v708
      %v717 = vpack.c.b16 %v711, %v710
      %v718 = vpack.c.b16 %v713, %v712
      %v719 = vpack.c.b16 %v715, %v714
      %v722 = vunpack.c.l.b16 %v395
      %v723 = vunpack.c.l.b16 %v396
      %v724 = vpack.c.b16 %v723, %v722
      %v726 = vsel %vm618, %v716, 0
      %v729 = vsel %vm618, %v717, 0
      %v732 = vsel %vm618, %v718, 0
      %v735 = vsel %vm618, %v719, 0
      %v738 = vsel %vm631, %v724, 0
      %740 = vmatprep.subr.bf16.mxu0 0
      %741 = vmatpush1.bf16.msra.mxu0 %v738
      %742 = vmatprep.subr.bf16.mxu0 0
      %743 = vmatpush1.bf16.msra.mxu0 0
      %744 = vmatprep.subr.bf16.mxu0 0
      %745 = vmatpush1.bf16.msra.mxu0 0
      %746 = vmatprep.subr.bf16.mxu0 0
      %747 = vmatpush1.bf16.msra.mxu0 0
      %748 = vmatprep.subr.bf16.mxu0 0
      %749 = vmatpush1.bf16.msra.mxu0 0
      %750 = vmatprep.subr.bf16.mxu0 0
      %751 = vmatpush1.bf16.msra.mxu0 0
      %752 = vmatprep.subr.bf16.mxu0 0
      %753 = vmatpush1.bf16.msra.mxu0 0
      %754 = vmatprep.subr.bf16.mxu0 0
      %755 = vmatpush1.bf16.msra.mxu0 0
      %756 = vmatprep.subr.bf16.mxu0 0
      %757 = vmatpush1.bf16.msra.mxu0 0
      %758 = vmatprep.subr.bf16.mxu0 0
      %759 = vmatpush1.bf16.msra.mxu0 0
      %760 = vmatprep.subr.bf16.mxu0 0
      %761 = vmatpush1.bf16.msra.mxu0 0
      %762 = vmatprep.subr.bf16.mxu0 0
      %763 = vmatpush1.bf16.msra.mxu0 0
      %764 = vmatprep.subr.bf16.mxu0 0
      %765 = vmatpush1.bf16.msra.mxu0 0
      %766 = vmatprep.subr.bf16.mxu0 0
      %767 = vmatpush1.bf16.msra.mxu0 0
      %768 = vmatprep.subr.bf16.mxu0 0
      %769 = vmatpush1.bf16.msra.mxu0 0
      %770 = vmatprep.subr.bf16.mxu0 0
      %771 = vmatpush1.bf16.msra.mxu0 0
      %772 = vmatprep.mubr.bf16.mxu0 0
      %773 = vmatmul.mubr.bf16.gmra.mrb[0].mxu0 %v726
      %v774 = vpop.f32.mrb[0].mxu0
      %v775 = vadd.f32 %v670, %v774
      %v776 = vpop.f32.mrb[0].mxu0
      %v777 = vpop.f32.mrb[0].mxu0
      %v778 = vadd.f32 %v673, %v777
      %v779 = vpop.f32.mrb[0].mxu0
      %780 = vmatprep.mubr.bf16.mxu0 0
      %781 = vmatmul.mubr.bf16.gmra.mrb[0].mxu0 %v729
      %v782 = vpop.f32.mrb[0].mxu0
      %v783 = vadd.f32 %v678, %v782
      %v784 = vpop.f32.mrb[0].mxu0
      %v785 = vpop.f32.mrb[0].mxu0
      %v786 = vadd.f32 %v681, %v785
      %v787 = vpop.f32.mrb[0].mxu0
      %788 = vmatprep.mubr.bf16.mxu0 0
      %789 = vmatmul.mubr.bf16.gmra.mrb[0].mxu0 %v732
      %v790 = vpop.f32.mrb[0].mxu0
      %v791 = vadd.f32 %v686, %v790
      %v792 = vpop.f32.mrb[0].mxu0
      %v793 = vpop.f32.mrb[0].mxu0
      %v794 = vadd.f32 %v689, %v793
      %v795 = vpop.f32.mrb[0].mxu0
      %796 = vmatprep.mubr.bf16.mxu0 0
      %797 = vmatmul.mubr.bf16.gmra.mrb[0].mxu0 %v735
      %v798 = vpop.f32.mrb[0].mxu0
      %v799 = vadd.f32 %v694, %v798
      %v800 = vpop.f32.mrb[0].mxu0
      %v801 = vpop.f32.mrb[0].mxu0
      %v802 = vadd.f32 %v697, %v801
      %v803 = vpop.f32.mrb[0].mxu0
      %804 = vdwg.mxu0
      %s805 = scalar_lea.vmem %s192, 16
      %v806 = vld [vmem:[%s805] sm:$0xf]
      %v807 = vld [vmem:[%s805 + $0x4] sm:$0x1]
      %v808 = vld [vmem:[%s805 + $0x8] sm:$0xf]
      %v809 = vld [vmem:[%s805 + $0xc] sm:$0x1]
      %v810 = vld [vmem:[%s805 + $0x10] sm:$0xf]
      %v811 = vld [vmem:[%s805 + $0x14] sm:$0x1]
      %v812 = vld [vmem:[%s805 + $0x18] sm:$0xf]
      %v813 = vld [vmem:[%s805 + $0x1c] sm:$0x1]
      %v814 = vld [vmem:[%s805 + $0x20] sm:$0xf]
      %v815 = vld [vmem:[%s805 + $0x24] sm:$0x1]
      %v816 = vld [vmem:[%s805 + $0x28] sm:$0xf]
      %v817 = vld [vmem:[%s805 + $0x2c] sm:$0x1]
      %v818 = vld [vmem:[%s805 + $0x30] sm:$0xf]
      %v819 = vld [vmem:[%s805 + $0x34] sm:$0x1]
      %v820 = vld [vmem:[%s805 + $0x38] sm:$0xf]
      %v821 = vld [vmem:[%s805 + $0x3c] sm:$0x1]
      %v838 = vunpack.c.l.b16 %v806
      %v839 = vunpack.c.l.b16 %v807
      %v840 = vunpack.c.l.b16 %v808
      %v841 = vunpack.c.l.b16 %v809
      %v842 = vunpack.c.l.b16 %v810
      %v843 = vunpack.c.l.b16 %v811
      %v844 = vunpack.c.l.b16 %v812
      %v845 = vunpack.c.l.b16 %v813
      %v846 = vunpack.c.l.b16 %v814
      %v847 = vunpack.c.l.b16 %v815
      %v848 = vunpack.c.l.b16 %v816
      %v849 = vunpack.c.l.b16 %v817
      %v850 = vunpack.c.l.b16 %v818
      %v851 = vunpack.c.l.b16 %v819
      %v852 = vunpack.c.l.b16 %v820
      %v853 = vunpack.c.l.b16 %v821
      %v854 = vpack.c.b16 %v839, %v838
      %v855 = vpack.c.b16 %v841, %v840
      %v856 = vpack.c.b16 %v843, %v842
      %v857 = vpack.c.b16 %v845, %v844
      %v858 = vpack.c.b16 %v847, %v846
      %v859 = vpack.c.b16 %v849, %v848
      %v860 = vpack.c.b16 %v851, %v850
      %v861 = vpack.c.b16 %v853, %v852
      %v863 = vshrl.u32 %v854, 16
      %v865 = vshll.u32 %v854, 16
      %v867 = vrot.slane %v865, 1
      %v868 = vor.u32 %v863, %v867
      %v870 = vshrl.u32 %v855, 16
      %v872 = vshll.u32 %v855, 16
      %v874 = vrot.slane %v872, 1
      %v875 = vor.u32 %v870, %v874
      %v877 = vshrl.u32 %v856, 16
      %v879 = vshll.u32 %v856, 16
      %v881 = vrot.slane %v879, 1
      %v882 = vor.u32 %v877, %v881
      %v884 = vshrl.u32 %v857, 16
      %v886 = vshll.u32 %v857, 16
      %v888 = vrot.slane %v886, 1
      %v889 = vor.u32 %v884, %v888
      %v891 = vshrl.u32 %v858, 16
      %v893 = vshll.u32 %v858, 16
      %v895 = vrot.slane %v893, 1
      %v896 = vor.u32 %v891, %v895
      %v898 = vshrl.u32 %v859, 16
      %v900 = vshll.u32 %v859, 16
      %v902 = vrot.slane %v900, 1
      %v903 = vor.u32 %v898, %v902
      %v905 = vshrl.u32 %v860, 16
      %v907 = vshll.u32 %v860, 16
      %v909 = vrot.slane %v907, 1
      %v910 = vor.u32 %v905, %v909
      %v912 = vshrl.u32 %v861, 16
      %v914 = vshll.u32 %v861, 16
      %v916 = vrot.slane %v914, 1
      %v917 = vor.u32 %v912, %v916
      %918 = vrot.lane.b32.xlu0 %v868, 4
      %v919 = vpop.permute.xlu0 %918
      %920 = vrot.lane.b32.xlu0 %v875, 4
      %v921 = vpop.permute.xlu0 %920
      %922 = vrot.lane.b32.xlu0 %v882, 4
      %v923 = vpop.permute.xlu0 %922
      %924 = vrot.lane.b32.xlu0 %v889, 4
      %v925 = vpop.permute.xlu0 %924
      %926 = vrot.lane.b32.xlu0 %v896, 4
      %v927 = vpop.permute.xlu0 %926
      %928 = vrot.lane.b32.xlu0 %v903, 4
      %v929 = vpop.permute.xlu0 %928
      %930 = vrot.lane.b32.xlu0 %v910, 4
      %v931 = vpop.permute.xlu0 %930
      %932 = vrot.lane.b32.xlu0 %v917, 4
      %v933 = vpop.permute.xlu0 %932
      %v934 = vrot.slane %v854, 1
      %v935 = vrot.slane %v855, 1
      %v936 = vrot.slane %v856, 1
      %v937 = vrot.slane %v857, 1
      %v938 = vrot.slane %v858, 1
      %v939 = vrot.slane %v859, 1
      %v940 = vrot.slane %v860, 1
      %v941 = vrot.slane %v861, 1
      %942 = vrot.lane.b32.xlu0 %v934, 8
      %v943 = vpop.permute.xlu0 %942
      %944 = vrot.lane.b32.xlu0 %v935, 8
      %v945 = vpop.permute.xlu0 %944
      %946 = vrot.lane.b32.xlu0 %v936, 8
      %v947 = vpop.permute.xlu0 %946
      %948 = vrot.lane.b32.xlu0 %v937, 8
      %v949 = vpop.permute.xlu0 %948
      %950 = vrot.lane.b32.xlu0 %v938, 8
      %v951 = vpop.permute.xlu0 %950
      %952 = vrot.lane.b32.xlu0 %v939, 8
      %v953 = vpop.permute.xlu0 %952
      %954 = vrot.lane.b32.xlu0 %v940, 8
      %v955 = vpop.permute.xlu0 %954
      %956 = vrot.lane.b32.xlu0 %v941, 8
      %v957 = vpop.permute.xlu0 %956
      %v960 = vsel %vm353, %v806, %v919
      %v963 = vsel %vm353, %v808, %v921
      %v966 = vsel %vm353, %v810, %v923
      %v969 = vsel %vm353, %v812, %v925
      %v972 = vsel %vm353, %v814, %v927
      %v975 = vsel %vm353, %v816, %v929
      %v978 = vsel %vm353, %v818, %v931
      %v981 = vsel %vm353, %v820, %v933
      %v983 = vsel %vm378, %v960, %v943
      %v985 = vsel %vm378, %v963, %v945
      %v987 = vsel %vm378, %v966, %v947
      %v989 = vsel %vm378, %v969, %v949
      %v991 = vsel %vm378, %v972, %v951
      %v993 = vsel %vm378, %v975, %v953
      %v995 = vsel %vm378, %v978, %v955
      %v997 = vsel %vm378, %v981, %v957
      %s998 = scalar_lea.vmem %s1, 16
      %v999 = vld [vmem:[%s998] sm:$0xf]
      %v1000 = vld [vmem:[%s998 + $0x4] sm:$0x3]
      %v1009 = vunpack.c.l.b16 %v983
      %v1010 = vunpack.c.l.b16 %v985
      %v1011 = vunpack.c.l.b16 %v987
      %v1012 = vunpack.c.l.b16 %v989
      %v1013 = vunpack.c.l.b16 %v991
      %v1014 = vunpack.c.l.b16 %v993
      %v1015 = vunpack.c.l.b16 %v995
      %v1016 = vunpack.c.l.b16 %v997
      %v1017 = vpack.c.b16 %v1010, %v1009
      %v1018 = vpack.c.b16 %v1012, %v1011
      %v1019 = vpack.c.b16 %v1014, %v1013
      %v1020 = vpack.c.b16 %v1016, %v1015
      %v1023 = vunpack.c.l.b16 %v999
      %v1024 = vunpack.c.l.b16 %v1000
      %v1025 = vpack.c.b16 %v1024, %v1023
      %v1027 = vsel %vm618, %v1017, 0
      %v1030 = vsel %vm618, %v1018, 0
      %v1033 = vsel %vm618, %v1019, 0
      %v1036 = vsel %vm618, %v1020, 0
      %v1039 = vsel %vm631, %v1025, 0
      %1041 = vmatprep.subr.bf16.mxu0 0
      %1042 = vmatpush1.bf16.msra.mxu0 %v1039
      %1043 = vmatprep.subr.bf16.mxu0 0
      %1044 = vmatpush1.bf16.msra.mxu0 0
      %1045 = vmatprep.subr.bf16.mxu0 0
      %1046 = vmatpush1.bf16.msra.mxu0 0
      %1047 = vmatprep.subr.bf16.mxu0 0
      %1048 = vmatpush1.bf16.msra.mxu0 0
      %1049 = vmatprep.subr.bf16.mxu0 0
      %1050 = vmatpush1.bf16.msra.mxu0 0
      %1051 = vmatprep.subr.bf16.mxu0 0
      %1052 = vmatpush1.bf16.msra.mxu0 0
      %1053 = vmatprep.subr.bf16.mxu0 0
      %1054 = vmatpush1.bf16.msra.mxu0 0
      %1055 = vmatprep.subr.bf16.mxu0 0
      %1056 = vmatpush1.bf16.msra.mxu0 0
      %1057 = vmatprep.subr.bf16.mxu0 0
      %1058 = vmatpush1.bf16.msra.mxu0 0
      %1059 = vmatprep.subr.bf16.mxu0 0
      %1060 = vmatpush1.bf16.msra.mxu0 0
      %1061 = vmatprep.subr.bf16.mxu0 0
      %1062 = vmatpush1.bf16.msra.mxu0 0
      %1063 = vmatprep.subr.bf16.mxu0 0
      %1064 = vmatpush1.bf16.msra.mxu0 0
      %1065 = vmatprep.subr.bf16.mxu0 0
      %1066 = vmatpush1.bf16.msra.mxu0 0
      %1067 = vmatprep.subr.bf16.mxu0 0
      %1068 = vmatpush1.bf16.msra.mxu0 0
      %1069 = vmatprep.subr.bf16.mxu0 0
      %1070 = vmatpush1.bf16.msra.mxu0 0
      %1071 = vmatprep.subr.bf16.mxu0 0
      %1072 = vmatpush1.bf16.msra.mxu0 0
      %1073 = vmatprep.mubr.bf16.mxu0 0
      %1074 = vmatmul.mubr.bf16.gmra.mrb[0].mxu0 %v1027
      %v1075 = vpop.f32.mrb[0].mxu0
      %v1076 = vadd.f32 0.0, %v1075
      %v1077 = vpop.f32.mrb[0].mxu0
      %v1078 = vpop.f32.mrb[0].mxu0
      %v1079 = vadd.f32 0.0, %v1078
      %v1080 = vpop.f32.mrb[0].mxu0
      %1081 = vmatprep.mubr.bf16.mxu0 0
      %1082 = vmatmul.mubr.bf16.gmra.mrb[0].mxu0 %v1030
      %v1083 = vpop.f32.mrb[0].mxu0
      %v1084 = vadd.f32 0.0, %v1083
      %v1085 = vpop.f32.mrb[0].mxu0
      %v1086 = vpop.f32.mrb[0].mxu0
      %v1087 = vadd.f32 0.0, %v1086
      %v1088 = vpop.f32.mrb[0].mxu0
      %1089 = vmatprep.mubr.bf16.mxu0 0
      %1090 = vmatmul.mubr.bf16.gmra.mrb[0].mxu0 %v1033
      %v1091 = vpop.f32.mrb[0].mxu0
      %v1092 = vadd.f32 0.0, %v1091
      %v1093 = vpop.f32.mrb[0].mxu0
      %v1094 = vpop.f32.mrb[0].mxu0
      %v1095 = vadd.f32 0.0, %v1094
      %v1096 = vpop.f32.mrb[0].mxu0
      %1097 = vmatprep.mubr.bf16.mxu0 0
      %1098 = vmatmul.mubr.bf16.gmra.mrb[0].mxu0 %v1036
      %v1099 = vpop.f32.mrb[0].mxu0
      %v1100 = vadd.f32 0.0, %v1099
      %v1101 = vpop.f32.mrb[0].mxu0
      %v1102 = vpop.f32.mrb[0].mxu0
      %v1103 = vadd.f32 0.0, %v1102
      %v1104 = vpop.f32.mrb[0].mxu0
      %1105 = vdwg.mxu0
      %v1106 = vadd.f32 %v775, %v1076
      %v1107 = vadd.f32 %v778, %v1079
      %v1108 = vadd.f32 %v783, %v1084
      %v1109 = vadd.f32 %v786, %v1087
      %v1110 = vadd.f32 %v791, %v1092
      %v1111 = vadd.f32 %v794, %v1095
      %v1112 = vadd.f32 %v799, %v1100
      %v1113 = vadd.f32 %v802, %v1103
      %v1115 = vlaneseq
      %v1116 = vshrl.u32 %v1115, 7
      %v1117 = vsub.s32 0, %v1116
      %v1118 = vrot.slane %v199, %v1117
      %v1120 = vmul.f32 %v1106, %v1118
      %v1121 = vmul.f32 %v1107, %v1118
      %v1122 = vmul.f32 %v1108, %v1118
      %v1123 = vmul.f32 %v1109, %v1118
      %v1124 = vmul.f32 %v1110, %v1118
      %v1125 = vmul.f32 %v1111, %v1118
      %v1126 = vmul.f32 %v1112, %v1118
      %v1127 = vmul.f32 %v1113, %v1118
      %v1129 = vlaneseq
      %v1130 = vshrl.u32 %v1129, 7
      %v1131 = vsub.s32 0, %v1130
      %v1132 = vrot.slane %v200, %v1131
      %v1134 = vadd.f32 %v1120, %v1132
      %v1135 = vadd.f32 %v1121, %v1132
      %v1136 = vadd.f32 %v1122, %v1132
      %v1137 = vadd.f32 %v1123, %v1132
      %v1138 = vadd.f32 %v1124, %v1132
      %v1139 = vadd.f32 %v1125, %v1132
      %v1140 = vadd.f32 %v1126, %v1132
      %v1141 = vadd.f32 %v1127, %v1132
      %v1142 = vmax.f32 %v1134, 0.0
      %v1143 = vmax.f32 %v1135, 0.0
      %v1144 = vmax.f32 %v1136, 0.0
      %v1145 = vmax.f32 %v1137, 0.0
      %v1146 = vmax.f32 %v1138, 0.0
      %v1147 = vmax.f32 %v1139, 0.0
      %v1148 = vmax.f32 %v1140, 0.0
      %v1149 = vmax.f32 %v1141, 0.0
      %v1150 = vpack.c.bf16 %v1142, %v1142
      %v1151 = vpack.c.bf16 %v1143, %v1143
      %v1152 = vpack.c.bf16 %v1144, %v1144
      %v1153 = vpack.c.bf16 %v1145, %v1145
      %v1154 = vpack.c.bf16 %v1146, %v1146
      %v1155 = vpack.c.bf16 %v1147, %v1147
      %v1156 = vpack.c.bf16 %v1148, %v1148
      %v1157 = vpack.c.bf16 %v1149, %v1149
      %vm1158 = vcmask 27648
      %1159 = vst.msk [vmem:[%s197] sm:$0xf] %vm1158, %v1150
      %1160 = vst.msk [vmem:[%s197 + $0x4] sm:$0xf] %vm1158, %v1151
      %1161 = vst.msk [vmem:[%s197 + $0x8] sm:$0xf] %vm1158, %v1152
      %1162 = vst.msk [vmem:[%s197 + $0xc] sm:$0xf] %vm1158, %v1153
      %1163 = vst.msk [vmem:[%s197 + $0x10] sm:$0xf] %vm1158, %v1154
      %1164 = vst.msk [vmem:[%s197 + $0x14] sm:$0xf] %vm1158, %v1155
      %1165 = vst.msk [vmem:[%s197 + $0x18] sm:$0xf] %vm1158, %v1156
      %1166 = vst.msk [vmem:[%s197 + $0x1c] sm:$0xf] %vm1158, %v1157
      %p1167 = scmp.lt.s32.totalorder %s15, 1
      %s1168 = scalar_select %p1167, %s15, 1
      %s1169 = smul.addr %s1168, 8
      %s1170 = smul.addr %s1169, 4
      %s1171 = scalar_lea.vmem %s4, %s1170
      // Predicated region
      $region37: #{_lambda_.6} parent=35 // pred_check
        %p1172 = pneg %p122
      $region38: #{_lambda_.6} parent=35 // pred_check_branch
        %1174 = sbr.rel (%p1172) target = $region40
      $region39: #{_lambda_.6} parent=35 // pred_region
        _
      $region40: #{_lambda_.6} parent=35 // pred_fallthru
        _
    $region36: #{_lambda_.6} parent=5 // pred_fallthru
      _
    %p1175 = scmp.le.s32.totalorder 2, %s10
    // Predicated region
    $region41: #{_lambda_.6} parent=5 // pred_check
      %p1176 = pneg %p1175
    $region42: #{_lambda_.6} parent=5 // pred_check_branch
      %1178 = sbr.rel (%p1176) target = $region44
    $region43: #{_lambda_.6} parent=5 // pred_region
      %s1179 = ssub.s32 %s10, 2
      // Predicated region
      $region45: #{_lambda_.6} parent=43 // pred_check
        %p1180 = pneg %p128
      $region46: #{_lambda_.6} parent=43 // pred_check_branch
        %1182 = sbr.rel (%p1180) target = $region48
      $region47: #{_lambda_.6} parent=43 // pred_region
        %p1183 = scmp.lt.s32.totalorder %s16, 1
        %s1184 = scalar_select %p1183, %s16, 1
        %s1185 = smul.addr %s1184, 8
        %s1186 = smul.addr %s1185, 4
        %s1187 = scalar_lea.vmem %s4, %s1186
      $region48: #{_lambda_.6} parent=43 // pred_fallthru
        _
    $region44: #{_lambda_.6} parent=5 // pred_fallthru
      _
  $region6: #{_lambda_.6} parent=0 // loop_footer
    %s14 = sadd.s32 1, %s10
  $region7: #{_lambda_.6} parent=0 // loop_footer_branch
    %9 = sbr.rel target = $region3
  $region8: #{_lambda_.6} parent=0 // loop_exit
    _

// kernel: _lambda_.9
$region0: #{_lambda_.9}
  #allocation0 [shape = 'u32[]', space=smem, size = 0x4, offset = 0x4, fixed_abs, tag = 'smem constant byte address 0x4 - core index']
  #allocation1 [shape = 'u32[144,128]{1,0:T(1,128)}', space=vmem, size = 0x12000, scoped, tag = 'internal scratch']
  %s0 = inlined_call_operand.vmem [shape: bf16[2,8,8,16], index: 0, kind: input, shape index: {}]
  %s1 = inlined_call_operand.vmem [shape: f32[2,8,16], index: 1, kind: input, shape index: {}]
  %s2 = inlined_call_operand.vmem [shape: f32[2,8,16], index: 2, kind: input, shape index: {}]
  %s3 = inlined_call_operand.vmem [shape: bf16[2,8,8,16], index: 3, kind: input, shape index: {}]
  %s4 = inlined_call_operand.vmem [shape: bf16[2,8,8,16], index: 4, kind: output, shape index: {}]
  %s5 = sld [smem:[#allocation0]]
  $region49: #{_lambda_.9} parent=0
    _
  %s7 = ssub.s32 1, %s5
  %s8 = scalar_select 0, %s7, %s5
  loop: start=0, step=1, limit=4
  $region2: #{_lambda_.9} parent=0 // loop_pre_header
    _
  $region3: #{_lambda_.9} parent=0 // loop_header
    %s10 = sphi 0, %s14
    %p11 = scmp.ge.s32.totalorder %s10, 4
    %s17 = sphi 0, %s29
    %s18 = sphi 0, %s25
    %s19 = sphi 0, %s17
    %s20 = sphi 0, %s18
    %s21 = sphi 0, %s19
    %s22 = sphi 0, %s20
    %s34 = sphi 0, %s36
    %s37 = sphi 0, %s34
    %s38 = sphi 0, %s37
    %s54 = sphi 0, %s38
    %s62 = sphi 0, %s64
    %s65 = sphi 0, %s62
    %s66 = sphi 0, %s65
    %s82 = sphi 0, %s66
    %s88 = sphi 0, %s90
    %s91 = sphi 0, %s88
    %s92 = sphi 0, %s91
    %s108 = sphi 0, %s92
    %s116 = sphi 0, %s118
    %s119 = sphi 0, %s116
    %s120 = sphi 0, %s119
    %s136 = sphi 0, %s120
    %s144 = sphi 0, %s146
    %s147 = sphi 0, %s144
    %s148 = sphi 0, %s147
    %s164 = sphi 0, %s148
  $region4: #{_lambda_.9} parent=0 // loop_header_branch
    %13 = sbr.rel (%p11) target = $region8
  $region5: #{_lambda_.9} parent=0 // loop_body
    %s15 = ssub.s32 %s10, 1
    %s16 = ssub.s32 %s10, 2
    %s23 = sadd.s32 1, %s18
    %p24 = scmp.ge.s32.totalorder %s23, 1
    %s25 = scalar_select %p24, 0, %s23
    %s26 = sadd.s32 1, %s17
    %s27 = scalar_select %p24, %s26, %s17
    %p28 = scmp.ge.s32.totalorder %s27, 2
    %s29 = scalar_select %p28, 0, %s27
    %s30 = ssub.s32 %s17, %s29
    %s31 = ssub.s32 %s18, %s25
    %s32 = sor.u32 %s30, %s31
    %p33 = scmp.eq.s32.totalorder %s32, 0
    %s35 = sadd.s32 %s34, 1
    %s36 = scalar_select %p33, %s34, %s35
    %p39 = pneg %p33
    %p40 = scmp.eq.s32.totalorder %s10, 1
    %p41 = por %p39, %p40
    %p42 = scmp.ne.s32.totalorder %s34, %s37
    %p43 = scmp.eq.s32.totalorder %s10, 0
    %p44 = por %p42, %p43
    %p45 = scmp.ne.s32.totalorder %s34, %s37
    %p46 = scmp.eq.s32.totalorder %s15, 1
    %p47 = por %p45, %p46
    %p48 = scmp.ne.s32.totalorder %s37, %s38
    %p49 = scmp.eq.s32.totalorder %s15, 0
    %p50 = por %p48, %p49
    %p51 = scmp.ne.s32.totalorder %s37, %s38
    %p52 = scmp.eq.s32.totalorder %s16, 1
    %p53 = por %p51, %p52
    %p55 = scmp.ne.s32.totalorder %s38, %s54
    %p56 = scmp.eq.s32.totalorder %s16, 0
    %p57 = por %p55, %p56
    %s58 = ssub.s32 %s17, %s29
    %s59 = ssub.s32 %s18, %s25
    %s60 = sor.u32 %s58, %s59
    %p61 = scmp.eq.s32.totalorder %s60, 0
    %s63 = sadd.s32 %s62, 1
    %s64 = scalar_select %p61, %s62, %s63
    %p67 = pneg %p61
    %p68 = scmp.eq.s32.totalorder %s10, 1
    %p69 = por %p67, %p68
    %p70 = scmp.ne.s32.totalorder %s62, %s65
    %p71 = scmp.eq.s32.totalorder %s10, 0
    %p72 = por %p70, %p71
    %p73 = scmp.ne.s32.totalorder %s62, %s65
    %p74 = scmp.eq.s32.totalorder %s15, 1
    %p75 = por %p73, %p74
    %p76 = scmp.ne.s32.totalorder %s65, %s66
    %p77 = scmp.eq.s32.totalorder %s15, 0
    %p78 = por %p76, %p77
    %p79 = scmp.ne.s32.totalorder %s65, %s66
    %p80 = scmp.eq.s32.totalorder %s16, 1
    %p81 = por %p79, %p80
    %p83 = scmp.ne.s32.totalorder %s66, %s82
    %p84 = scmp.eq.s32.totalorder %s16, 0
    %p85 = por %p83, %p84
    %s86 = ssub.s32 %s17, %s29
    %p87 = scmp.eq.s32.totalorder %s86, 0
    %s89 = sadd.s32 %s88, 1
    %s90 = scalar_select %p87, %s88, %s89
    %p93 = pneg %p87
    %p94 = scmp.eq.s32.totalorder %s10, 1
    %p95 = por %p93, %p94
    %p96 = scmp.ne.s32.totalorder %s88, %s91
    %p97 = scmp.eq.s32.totalorder %s10, 0
    %p98 = por %p96, %p97
    %p99 = scmp.ne.s32.totalorder %s88, %s91
    %p100 = scmp.eq.s32.totalorder %s15, 1
    %p101 = por %p99, %p100
    %p102 = scmp.ne.s32.totalorder %s91, %s92
    %p103 = scmp.eq.s32.totalorder %s15, 0
    %p104 = por %p102, %p103
    %p105 = scmp.ne.s32.totalorder %s91, %s92
    %p106 = scmp.eq.s32.totalorder %s16, 1
    %p107 = por %p105, %p106
    %p109 = scmp.ne.s32.totalorder %s92, %s108
    %p110 = scmp.eq.s32.totalorder %s16, 0
    %p111 = por %p109, %p110
    %s112 = ssub.s32 %s17, %s29
    %s113 = ssub.s32 %s18, %s25
    %s114 = sor.u32 %s112, %s113
    %p115 = scmp.eq.s32.totalorder %s114, 0
    %s117 = sadd.s32 %s116, 1
    %s118 = scalar_select %p115, %s116, %s117
    %p121 = pneg %p115
    %p122 = scmp.eq.s32.totalorder %s10, 1
    %p123 = por %p121, %p122
    %p124 = scmp.ne.s32.totalorder %s116, %s119
    %p125 = scmp.eq.s32.totalorder %s10, 0
    %p126 = por %p124, %p125
    %p127 = scmp.ne.s32.totalorder %s116, %s119
    %p128 = scmp.eq.s32.totalorder %s15, 1
    %p129 = por %p127, %p128
    %p130 = scmp.ne.s32.totalorder %s119, %s120
    %p131 = scmp.eq.s32.totalorder %s15, 0
    %p132 = por %p130, %p131
    %p133 = scmp.ne.s32.totalorder %s119, %s120
    %p134 = scmp.eq.s32.totalorder %s16, 1
    %p135 = por %p133, %p134
    %p137 = scmp.ne.s32.totalorder %s120, %s136
    %p138 = scmp.eq.s32.totalorder %s16, 0
    %p139 = por %p137, %p138
    %s140 = ssub.s32 %s17, %s29
    %s141 = ssub.s32 %s18, %s25
    %s142 = sor.u32 %s140, %s141
    %p143 = scmp.eq.s32.totalorder %s142, 0
    %s145 = sadd.s32 %s144, 1
    %s146 = scalar_select %p143, %s144, %s145
    %p149 = pneg %p143
    %p150 = scmp.eq.s32.totalorder %s10, 1
    %p151 = por %p149, %p150
    %p152 = scmp.ne.s32.totalorder %s144, %s147
    %p153 = scmp.eq.s32.totalorder %s10, 0
    %p154 = por %p152, %p153
    %p155 = scmp.ne.s32.totalorder %s144, %s147
    %p156 = scmp.eq.s32.totalorder %s15, 1
    %p157 = por %p155, %p156
    %p158 = scmp.ne.s32.totalorder %s147, %s148
    %p159 = scmp.eq.s32.totalorder %s15, 0
    %p160 = por %p158, %p159
    %p161 = scmp.ne.s32.totalorder %s147, %s148
    %p162 = scmp.eq.s32.totalorder %s16, 1
    %p163 = por %p161, %p162
    %p165 = scmp.ne.s32.totalorder %s148, %s164
    %p166 = scmp.eq.s32.totalorder %s16, 0
    %p167 = por %p165, %p166
    %p168 = scmp.le.s32.totalorder 1, %s10
    %p169 = scmp.lt.s32.totalorder %s10, 3
    %p170 = pnand %p168, %p169
    %p171 = pneg %p170
    // Predicated region
    $region9: #{_lambda_.9} parent=5 // pred_check
      _
    $region10: #{_lambda_.9} parent=5 // pred_check_branch
      %173 = sbr.rel (%p170) target = $region12
    $region11: #{_lambda_.9} parent=5 // pred_region
      %s174 = ssub.s32 %s10, 1
    $region12: #{_lambda_.9} parent=5 // pred_fallthru
      _
    %p175 = scmp.lt.s32.totalorder %s10, 2
    // Predicated region
    $region13: #{_lambda_.9} parent=5 // pred_check
      %p176 = pneg %p175
    $region14: #{_lambda_.9} parent=5 // pred_check_branch
      %178 = sbr.rel (%p176) target = $region16
    $region15: #{_lambda_.9} parent=5 // pred_region
      // Predicated region
      $region17: #{_lambda_.9} parent=15 // pred_check
        %p179 = pneg %p44
      $region18: #{_lambda_.9} parent=15 // pred_check_branch
        %181 = sbr.rel (%p179) target = $region20
      $region19: #{_lambda_.9} parent=15 // pred_region
        %s182 = smul.u32 8, %s18
        %p183 = scmp.lt.s32.totalorder %s17, 1
        %s184 = scalar_select %p183, %s17, 1
        %p185 = scmp.lt.s32.totalorder %s182, 7
        %s186 = scalar_select %p185, %s182, 7
        %s187 = smul.addr %s184, 8
        %s188 = sadd.s32 %s186, %s187
        %s189 = smul.addr %s188, 4
        %s190 = scalar_lea.vmem %s0, %s189
        %s191 = smul.u32 8, %s18
      $region20: #{_lambda_.9} parent=15 // pred_fallthru
        _
      // Predicated region
      $region21: #{_lambda_.9} parent=15 // pred_check
        %p192 = pneg %p72
      $region22: #{_lambda_.9} parent=15 // pred_check_branch
        %194 = sbr.rel (%p192) target = $region24
      $region23: #{_lambda_.9} parent=15 // pred_region
        %p195 = scmp.lt.s32.totalorder %s17, 1
        %s196 = scalar_select %p195, %s17, 1
        %p197 = scmp.lt.s32.totalorder %s18, 0
        %s198 = scalar_select %p197, %s18, 0
        %s199 = sadd.s32 %s198, %s196
        %s200 = smul.addr %s199, 8
        %s201 = scalar_lea.vmem %s1, %s200
      $region24: #{_lambda_.9} parent=15 // pred_fallthru
        _
      // Predicated region
      $region25: #{_lambda_.9} parent=15 // pred_check
        %p202 = pneg %p98
      $region26: #{_lambda_.9} parent=15 // pred_check_branch
        %204 = sbr.rel (%p202) target = $region28
      $region27: #{_lambda_.9} parent=15 // pred_region
        %p205 = scmp.lt.s32.totalorder %s17, 1
        %s206 = scalar_select %p205, %s17, 1
        %s207 = smul.addr %s206, 8
        %s208 = scalar_lea.vmem %s2, %s207
      $region28: #{_lambda_.9} parent=15 // pred_fallthru
        _
      // Predicated region
      $region29: #{_lambda_.9} parent=15 // pred_check
        %p209 = pneg %p126
      $region30: #{_lambda_.9} parent=15 // pred_check_branch
        %211 = sbr.rel (%p209) target = $region32
      $region31: #{_lambda_.9} parent=15 // pred_region
        %s212 = smul.u32 8, %s18
        %p213 = scmp.lt.s32.totalorder %s17, 1
        %s214 = scalar_select %p213, %s17, 1
        %p215 = scmp.lt.s32.totalorder %s212, 7
        %s216 = scalar_select %p215, %s212, 7
        %s217 = smul.addr %s214, 8
        %s218 = sadd.s32 %s216, %s217
        %s219 = smul.addr %s218, 4
        %s220 = scalar_lea.vmem %s3, %s219
        %s221 = smul.u32 8, %s18
      $region32: #{_lambda_.9} parent=15 // pred_fallthru
        _
    $region16: #{_lambda_.9} parent=5 // pred_fallthru
      _
    %p222 = scmp.le.s32.totalorder 1, %s10
    %p223 = scmp.lt.s32.totalorder %s10, 3
    %p224 = pnand %p222, %p223
    %p225 = pneg %p224
    // Predicated region
    $region33: #{_lambda_.9} parent=5 // pred_check
      _
    $region34: #{_lambda_.9} parent=5 // pred_check_branch
      %227 = sbr.rel (%p224) target = $region36
    $region35: #{_lambda_.9} parent=5 // pred_region
      %s228 = ssub.s32 %s10, 1
      %s229 = smul.u32 8, %s20
      %p230 = scmp.lt.s32.totalorder %s19, 1
      %s231 = scalar_select %p230, %s19, 1
      %p232 = scmp.lt.s32.totalorder %s229, 7
      %s233 = scalar_select %p232, %s229, 7
      %s234 = smul.addr %s231, 8
      %s235 = sadd.s32 %s233, %s234
      %s236 = smul.addr %s235, 4
      %s237 = scalar_lea.vmem %s0, %s236
      %p238 = pneg %p50
      %p239 = pneg %p47
      %p240 = scmp.lt.s32.totalorder %s19, 1
      %s241 = scalar_select %p240, %s19, 1
      %p242 = scmp.lt.s32.totalorder %s20, 0
      %s243 = scalar_select %p242, %s20, 0
      %s244 = sadd.s32 %s243, %s241
      %s245 = smul.addr %s244, 8
      %s246 = scalar_lea.vmem %s1, %s245
      %p247 = pneg %p78
      %p248 = pneg %p75
      %p249 = scmp.lt.s32.totalorder %s19, 1
      %s250 = scalar_select %p249, %s19, 1
      %s251 = smul.addr %s250, 8
      %s252 = scalar_lea.vmem %s2, %s251
      %p253 = pneg %p104
      %p254 = pneg %p101
      %s255 = smul.u32 8, %s20
      %p256 = scmp.lt.s32.totalorder %s19, 1
      %s257 = scalar_select %p256, %s19, 1
      %p258 = scmp.lt.s32.totalorder %s255, 7
      %s259 = scalar_select %p258, %s255, 7
      %s260 = smul.addr %s257, 8
      %s261 = sadd.s32 %s259, %s260
      %s262 = smul.addr %s261, 4
      %s263 = scalar_lea.vmem %s3, %s262
      %p264 = pneg %p132
      %p265 = pneg %p129
      %p266 = pneg %p160
      %p267 = pneg %p157
      %s268 = smul.u32 8, %s20
      %p269 = scmp.lt.s32.totalorder %s19, 1
      %s270 = scalar_select %p269, %s19, 1
      %p271 = scmp.lt.s32.totalorder %s268, 7
      %s272 = scalar_select %p271, %s268, 7
      %s273 = smul.addr %s270, 8
      %s274 = sadd.s32 %s272, %s273
      %s275 = smul.addr %s274, 4
      %s276 = scalar_lea.vmem %s4, %s275
      %s277 = smul.u32 8, %s20
      %p278 = scmp.lt.s32.totalorder %s19, 1
      %s279 = scalar_select %p278, %s19, 1
      %p280 = scmp.lt.s32.totalorder %s277, 7
      %s281 = scalar_select %p280, %s277, 7
      %s282 = smul.addr %s279, 8
      %s283 = sadd.s32 %s281, %s282
      %s284 = smul.addr %s283, 4
      %s285 = scalar_lea.vmem %s0, %s284
      %s286 = smul.u32 8, %s20
      %p287 = scmp.lt.s32.totalorder %s19, 1
      %s288 = scalar_select %p287, %s19, 1
      %p289 = scmp.lt.s32.totalorder %s20, 0
      %s290 = scalar_select %p289, %s20, 0
      %s291 = sadd.s32 %s290, %s288
      %s292 = smul.addr %s291, 8
      %s293 = scalar_lea.vmem %s1, %s292
      %p294 = scmp.lt.s32.totalorder %s19, 1
      %s295 = scalar_select %p294, %s19, 1
      %s296 = smul.addr %s295, 8
      %s297 = scalar_lea.vmem %s2, %s296
      %s298 = smul.u32 8, %s20
      %p299 = scmp.lt.s32.totalorder %s19, 1
      %s300 = scalar_select %p299, %s19, 1
      %p301 = scmp.lt.s32.totalorder %s298, 7
      %s302 = scalar_select %p301, %s298, 7
      %s303 = smul.addr %s300, 8
      %s304 = sadd.s32 %s302, %s303
      %s305 = smul.addr %s304, 4
      %s306 = scalar_lea.vmem %s3, %s305
      %s307 = smul.u32 8, %s20
      %s308 = smul.u32 8, %s20
      %p309 = scmp.lt.s32.totalorder %s19, 1
      %s310 = scalar_select %p309, %s19, 1
      %p311 = scmp.lt.s32.totalorder %s308, 7
      %s312 = scalar_select %p311, %s308, 7
      %s313 = smul.addr %s310, 8
      %s314 = sadd.s32 %s312, %s313
      %s315 = smul.addr %s314, 4
      %s316 = scalar_lea.vmem %s4, %s315
      %s317 = smul.u32 8, %s20
      %v318 = vld [vmem:[%s285] sm:$0xf]
      %v319 = vld [vmem:[%s285 + $0x4] sm:$0xf]
      %v320 = vld [vmem:[%s285 + $0x8] sm:$0xf]
      %v321 = vld [vmem:[%s285 + $0xc] sm:$0xf]
      %v322 = vld [vmem:[%s285 + $0x10] sm:$0xf]
      %v323 = vld [vmem:[%s285 + $0x14] sm:$0xf]
      %v324 = vld [vmem:[%s285 + $0x18] sm:$0xf]
      %v325 = vld [vmem:[%s285 + $0x1c] sm:$0xf]
      %v326 = vunpack.c.l.bf16 %v318
      %v327 = vunpack.c.l.bf16 %v319
      %v328 = vunpack.c.l.bf16 %v320
      %v329 = vunpack.c.l.bf16 %v321
      %v330 = vunpack.c.l.bf16 %v322
      %v331 = vunpack.c.l.bf16 %v323
      %v332 = vunpack.c.l.bf16 %v324
      %v333 = vunpack.c.l.bf16 %v325
      %v334 = vld [vmem:[%s306] sm:$0xf]
      %v335 = vld [vmem:[%s306 + $0x4] sm:$0xf]
      %v336 = vld [vmem:[%s306 + $0x8] sm:$0xf]
      %v337 = vld [vmem:[%s306 + $0xc] sm:$0xf]
      %v338 = vld [vmem:[%s306 + $0x10] sm:$0xf]
      %v339 = vld [vmem:[%s306 + $0x14] sm:$0xf]
      %v340 = vld [vmem:[%s306 + $0x18] sm:$0xf]
      %v341 = vld [vmem:[%s306 + $0x1c] sm:$0xf]
      %v342 = vunpack.c.l.bf16 %v334
      %v343 = vunpack.c.l.bf16 %v335
      %v344 = vunpack.c.l.bf16 %v336
      %v345 = vunpack.c.l.bf16 %v337
      %v346 = vunpack.c.l.bf16 %v338
      %v347 = vunpack.c.l.bf16 %v339
      %v348 = vunpack.c.l.bf16 %v340
      %v349 = vunpack.c.l.bf16 %v341
      %v350 = vld [vmem:[%s293] sm:$0xff]
      %v352 = vcombine.high %v350, %v350
      %v354 = vunpack.c.l.s4 1966171168
      %v355 = vunpack.c.0.s8 %v354
      %v356 = vlaneseq
      %v357 = vshrl.u32 %v356, 7
      %v358 = vsub.s32 %v355, %v357
      %v359 = vrot.slane %v350, %v358
      %v361 = vunpack.c.l.s4 1966171168
      %v362 = vunpack.c.0.s8 %v361
      %v363 = vlaneseq
      %v364 = vshrl.u32 %v363, 7
      %v365 = vsub.s32 %v362, %v364
      %v366 = vrot.slane %v352, %v365
      %v367 = vcombine.high %v359, %v359
      %v368 = vcombine.high %v366, %v366
      %v370 = vunpack.c.l.s4 1966171168
      %v371 = vunpack.c.0.s8 %v370
      %v372 = vlaneseq
      %v373 = vshrl.u32 %v372, 7
      %v374 = vsub.s32 %v371, %v373
      %v375 = vrot.slane %v359, %v374
      %v377 = vunpack.c.l.s4 1966171168
      %v378 = vunpack.c.0.s8 %v377
      %v379 = vlaneseq
      %v380 = vshrl.u32 %v379, 7
      %v381 = vsub.s32 %v378, %v380
      %v382 = vrot.slane %v366, %v381
      %v384 = vunpack.c.l.s4 1966171168
      %v385 = vunpack.c.0.s8 %v384
      %v386 = vlaneseq
      %v387 = vshrl.u32 %v386, 7
      %v388 = vsub.s32 %v385, %v387
      %v389 = vrot.slane %v367, %v388
      %v391 = vunpack.c.l.s4 1966171168
      %v392 = vunpack.c.0.s8 %v391
      %v393 = vlaneseq
      %v394 = vshrl.u32 %v393, 7
      %v395 = vsub.s32 %v392, %v394
      %v396 = vrot.slane %v368, %v395
      %v397 = vcombine.high %v375, %v375
      %v398 = vcombine.high %v382, %v382
      %v399 = vcombine.high %v389, %v389
      %v400 = vcombine.high %v396, %v396
      %v401 = vld [vmem:[%s297] sm:$0xff]
      %v402 = vlaneseq
      %v403 = vshrl.u32 %v402, 7
      %v404 = vsub.s32 0, %v403
      %v405 = vrot.slane %v375, %v404
      %v406 = vlaneseq
      %v407 = vshrl.u32 %v406, 7
      %v408 = vsub.s32 0, %v407
      %v409 = vrot.slane %v389, %v408
      %v410 = vlaneseq
      %v411 = vshrl.u32 %v410, 7
      %v412 = vsub.s32 0, %v411
      %v413 = vrot.slane %v397, %v412
      %v414 = vlaneseq
      %v415 = vshrl.u32 %v414, 7
      %v416 = vsub.s32 0, %v415
      %v417 = vrot.slane %v399, %v416
      %v418 = vlaneseq
      %v419 = vshrl.u32 %v418, 7
      %v420 = vsub.s32 0, %v419
      %v421 = vrot.slane %v382, %v420
      %v422 = vlaneseq
      %v423 = vshrl.u32 %v422, 7
      %v424 = vsub.s32 0, %v423
      %v425 = vrot.slane %v396, %v424
      %v426 = vlaneseq
      %v427 = vshrl.u32 %v426, 7
      %v428 = vsub.s32 0, %v427
      %v429 = vrot.slane %v398, %v428
      %v430 = vlaneseq
      %v431 = vshrl.u32 %v430, 7
      %v432 = vsub.s32 0, %v431
      %v433 = vrot.slane %v400, %v432
      %v442 = vmul.f32 %v405, %v401
      %v443 = vmul.f32 %v409, %v401
      %v444 = vmul.f32 %v413, %v401
      %v445 = vmul.f32 %v417, %v401
      %v446 = vmul.f32 %v421, %v401
      %v447 = vmul.f32 %v425, %v401
      %v448 = vmul.f32 %v429, %v401
      %v449 = vmul.f32 %v433, %v401
      %v450 = vmul.f32 %v326, %v442
      %v451 = vmul.f32 %v327, %v443
      %v452 = vmul.f32 %v328, %v444
      %v453 = vmul.f32 %v329, %v445
      %v454 = vmul.f32 %v330, %v446
      %v455 = vmul.f32 %v331, %v447
      %v456 = vmul.f32 %v332, %v448
      %v457 = vmul.f32 %v333, %v449
      %v458 = vadd.f32 %v450, %v342
      %v459 = vadd.f32 %v451, %v343
      %v460 = vadd.f32 %v452, %v344
      %v461 = vadd.f32 %v453, %v345
      %v462 = vadd.f32 %v454, %v346
      %v463 = vadd.f32 %v455, %v347
      %v464 = vadd.f32 %v456, %v348
      %v465 = vadd.f32 %v457, %v349
      %v466 = vmax.f32 %v458, 0.0
      %v467 = vmax.f32 %v459, 0.0
      %v468 = vmax.f32 %v460, 0.0
      %v469 = vmax.f32 %v461, 0.0
      %v470 = vmax.f32 %v462, 0.0
      %v471 = vmax.f32 %v463, 0.0
      %v472 = vmax.f32 %v464, 0.0
      %v473 = vmax.f32 %v465, 0.0
      %v474 = vpack.c.bf16 %v466, %v466
      %v475 = vpack.c.bf16 %v467, %v467
      %v476 = vpack.c.bf16 %v468, %v468
      %v477 = vpack.c.bf16 %v469, %v469
      %v478 = vpack.c.bf16 %v470, %v470
      %v479 = vpack.c.bf16 %v471, %v471
      %v480 = vpack.c.bf16 %v472, %v472
      %v481 = vpack.c.bf16 %v473, %v473
      %vm482 = vcmask 125952
      %483 = vst.msk [vmem:[%s316] sm:$0xf] %vm482, %v474
      %484 = vst.msk [vmem:[%s316 + $0x4] sm:$0xf] %vm482, %v475
      %485 = vst.msk [vmem:[%s316 + $0x8] sm:$0xf] %vm482, %v476
      %486 = vst.msk [vmem:[%s316 + $0xc] sm:$0xf] %vm482, %v477
      %487 = vst.msk [vmem:[%s316 + $0x10] sm:$0xf] %vm482, %v478
      %488 = vst.msk [vmem:[%s316 + $0x14] sm:$0xf] %vm482, %v479
      %489 = vst.msk [vmem:[%s316 + $0x18] sm:$0xf] %vm482, %v480
      %490 = vst.msk [vmem:[%s316 + $0x1c] sm:$0xf] %vm482, %v481
      %s491 = smul.u32 8, %s20
      %p492 = scmp.lt.s32.totalorder %s19, 1
      %s493 = scalar_select %p492, %s19, 1
      %p494 = scmp.lt.s32.totalorder %s491, 7
      %s495 = scalar_select %p494, %s491, 7
      %s496 = smul.addr %s493, 8
      %s497 = sadd.s32 %s495, %s496
      %s498 = smul.addr %s497, 4
      %s499 = scalar_lea.vmem %s4, %s498
      // Predicated region
      $region37: #{_lambda_.9} parent=35 // pred_check
        %p500 = pneg %p157
      $region38: #{_lambda_.9} parent=35 // pred_check_branch
        %502 = sbr.rel (%p500) target = $region40
      $region39: #{_lambda_.9} parent=35 // pred_region
        %s503 = smul.u32 8, %s20
      $region40: #{_lambda_.9} parent=35 // pred_fallthru
        _
    $region36: #{_lambda_.9} parent=5 // pred_fallthru
      _
    %p504 = scmp.le.s32.totalorder 2, %s10
    // Predicated region
    $region41: #{_lambda_.9} parent=5 // pred_check
      %p505 = pneg %p504
    $region42: #{_lambda_.9} parent=5 // pred_check_branch
      %507 = sbr.rel (%p505) target = $region44
    $region43: #{_lambda_.9} parent=5 // pred_region
      %s508 = ssub.s32 %s10, 2
      // Predicated region
      $region45: #{_lambda_.9} parent=43 // pred_check
        %p509 = pneg %p163
      $region46: #{_lambda_.9} parent=43 // pred_check_branch
        %511 = sbr.rel (%p509) target = $region48
      $region47: #{_lambda_.9} parent=43 // pred_region
        %s512 = smul.u32 8, %s22
        %p513 = scmp.lt.s32.totalorder %s21, 1
        %s514 = scalar_select %p513, %s21, 1
        %p515 = scmp.lt.s32.totalorder %s512, 7
        %s516 = scalar_select %p515, %s512, 7
        %s517 = smul.addr %s514, 8
        %s518 = sadd.s32 %s516, %s517
        %s519 = smul.addr %s518, 4
        %s520 = scalar_lea.vmem %s4, %s519
      $region48: #{_lambda_.9} parent=43 // pred_fallthru
        _
    $region44: #{_lambda_.9} parent=5 // pred_fallthru
      _
  $region6: #{_lambda_.9} parent=0 // loop_footer
    %s14 = sadd.s32 1, %s10
  $region7: #{_lambda_.9} parent=0 // loop_footer_branch
    %9 = sbr.rel target = $region3
  $region8: #{_lambda_.9} parent=0 // loop_exit
    _

</llo_original>
